<compile_context>
chip_gen: v6e
topology: v6e:2x2x1
jax: 0.10.0
libtpu: 0.0.40
codegen_flags: <defaults>
</compile_context>

<pallas_src>
import math
import functools

import jax
import jax.numpy as jnp
from jax.experimental import pallas as pl
from jax.experimental.pallas import tpu as pltpu

NEG_INF = -1e30                       # additive mask value (avoids -inf arithmetic edge cases)
LN_EPS = 1e-5                         # PyTorch LayerNorm default eps
VMEM_LIMIT_BYTES = 32 * 1024 * 1024   # safe on v5e/v6e (128 MiB) and v7x (64 MiB physical)


def _round_up(x, m):
    return ((x + m - 1) // m) * m


def _pick_rows(m, max_tile=256):
    """Row-tile that divides m (m is a multiple of 8 in this model's flow, or tiny)."""
    if m % 8 != 0 or m <= max_tile:
        return m
    t = max_tile
    while m % t:
        t -= 8
    return t


def _pick_cols(n, max_tile):
    """Column/K tile that divides n (n is always a multiple of 128 after prep)."""
    if n <= max_tile:
        return n
    t = max_tile
    while n % t:
        t -= 128
    return t


# ----------------------------- in-kernel math helpers -----------------------------

def _erf(x):
    # Abramowitz & Stegun 7.1.26 (max abs err ~1.5e-7): exact-erf GELU to f32 noise, built only
    # from ops Mosaic is guaranteed to lower (mul/add/where/exp).
    a1, a2, a3, a4, a5, p = 0.254829592, -0.284496736, 1.421413741, -1.453152027, 1.061405429, 0.3275911
    ax = jnp.abs(x)
    t = 1.0 / (1.0 + p * ax)
    poly = ((((a5 * t + a4) * t + a3) * t + a2) * t + a1) * t
    e = 1.0 - poly * jnp.exp(-ax * ax)
    return jnp.where(x < 0, -e, e)


def _gelu(x):
    return 0.5 * x * (1.0 + _erf(x * 0.7071067811865476))


def _ln_rows(x, g, b, d_real):
    """LayerNorm over the last axis; stats over the first d_real columns.

    Relies on the invariant that padded columns (>= d_real) of x are exactly zero, which is
    maintained everywhere by zero-padded weights/biases/gamma/beta."""
    mean = jnp.sum(x, axis=-1, keepdims=True) * (1.0 / d_real)
    if x.shape[-1] == d_real:
        xc = x - mean
    else:
        col = jax.lax.broadcasted_iota(jnp.int32, x.shape, x.ndim - 1)
        xc = jnp.where(col < d_real, x - mean, 0.0)
    var = jnp.sum(xc * xc, axis=-1, keepdims=True) * (1.0 / d_real)
    return xc * jax.lax.rsqrt(var + LN_EPS) * g + b


# ----------------------------- tiled / pipelined linear (input proj, generator) -----------------------------

def _matmul_kernel(x_ref, w_ref, b_ref, o_ref, acc_ref):
    @pl.when(pl.program_id(2) == 0)
    def _():
        acc_ref[...] = jnp.zeros_like(acc_ref)

    acc_ref[...] += jnp.dot(x_ref[...], w_ref[...], preferred_element_type=jnp.float32)

    @pl.when(pl.program_id(2) == pl.num_programs(2) - 1)
    def _():
        o_ref[...] = (acc_ref[...] + b_ref[...]).astype(o_ref.dtype)


def pallas_linear(x, w, b, *, out_dtype=jnp.bfloat16, tm=256, tn=512, tk=1024):
    """x: [M, Kp] (pre-padded), w: [Kp, Np] bf16 (prepped), b: [1, Np] f32 -> x @ w + b."""
    M, K = x.shape
    N = w.shape[1]
    tm = _pick_rows(M, tm)
    tn = _pick_cols(N, tn)
    tk = _pick_cols(K, tk)
    return pl.pallas_call(
        _matmul_kernel,
        out_shape=jax.ShapeDtypeStruct((M, N), out_dtype),
        grid=(M // tm, N // tn, K // tk),
        in_specs=[pl.BlockSpec((tm, tk), lambda i, j, k: (i, k)),
                  pl.BlockSpec((tk, tn), lambda i, j, k: (k, j)),
                  pl.BlockSpec((1, tn), lambda i, j, k: (0, j))],
        out_specs=pl.BlockSpec((tm, tn), lambda i, j, k: (i, j)),
        scratch_shapes=[pltpu.VMEM((tm, tn), jnp.float32)],
        compiler_params=pltpu.CompilerParams(
            dimension_semantics=("parallel", "parallel", "arbitrary"),
            vmem_limit_bytes=VMEM_LIMIT_BYTES),
    )(x.astype(jnp.bfloat16), w, b)


# ----------------------------- standalone LayerNorm (encoder/decoder final norm) -----------------------------

def _ln_kernel(x_ref, g_ref, b_ref, o_ref, *, d_real):
    o_ref[...] = _ln_rows(x_ref[...].astype(jnp.float32), g_ref[...], b_ref[...],
                          d_real).astype(o_ref.dtype)


def pallas_layernorm(x, ln, d_real, *, tm=512):
    M, Dp = x.shape
    tm = _pick_rows(M, tm)
    return pl.pallas_call(
        functools.partial(_ln_kernel, d_real=d_real),
        out_shape=jax.ShapeDtypeStruct((M, Dp), jnp.bfloat16),
        grid=(M // tm,),
        in_specs=[pl.BlockSpec((tm, Dp), lambda i: (i, 0)),
                  pl.BlockSpec((1, Dp), lambda i: (0, 0)),
                  pl.BlockSpec((1, Dp), lambda i: (0, 0))],
        out_specs=pl.BlockSpec((tm, Dp), lambda i: (i, 0)),
        compiler_params=pltpu.CompilerParams(dimension_semantics=("parallel",),
                                             vmem_limit_bytes=VMEM_LIMIT_BYTES),
    )(x, ln['g'], ln['b'])


# ----------------------------- fused FF1 + GELU + FF2 + residual + LayerNorm -----------------------------

def _ffn_ln_kernel(x_ref, w1_ref, b1_ref, w2_ref, b2_ref, g_ref, bb_ref, o_ref, *, d_real):
    x = x_ref[...]                                                   # [tm, Dp] bf16
    h = jnp.dot(x, w1_ref[...], preferred_element_type=jnp.float32) + b1_ref[...]
    h = _gelu(h)                                                     # exact-erf GELU, never hits HBM
    y = jnp.dot(h.astype(jnp.bfloat16), w2_ref[...], preferred_element_type=jnp.float32) + b2_ref[...]
    y = y + x.astype(jnp.float32)                                    # residual
    o_ref[...] = _ln_rows(y, g_ref[...], bb_ref[...], d_real).astype(o_ref.dtype)


def pallas_ffn_ln(x, ff1, ff2, ln, d_real, *, tm=256):
    M, Dp = x.shape
    Fp = ff1['w'].shape[1]
    tm = _pick_rows(M, tm)
    vec = lambda n: pl.BlockSpec((1, n), lambda i: (0, 0))
    return pl.pallas_call(
        functools.partial(_ffn_ln_kernel, d_real=d_real),
        out_shape=jax.ShapeDtypeStruct((M, Dp), jnp.bfloat16),
        grid=(M // tm,),
        in_specs=[pl.BlockSpec((tm, Dp), lambda i: (i, 0)),
                  pl.BlockSpec((Dp, Fp), lambda i: (0, 0)), vec(Fp),
                  pl.BlockSpec((Fp, Dp), lambda i: (0, 0)), vec(Dp),
                  vec(Dp), vec(Dp)],
        out_specs=pl.BlockSpec((tm, Dp), lambda i: (i, 0)),
        compiler_params=pltpu.CompilerParams(dimension_semantics=("parallel",),
                                             vmem_limit_bytes=VMEM_LIMIT_BYTES),
    )(x, ff1['w'], ff1['b'], ff2['w'], ff2['b'], ln['g'], ln['b'])


# ----------------------------- fused length-1 attention + residual + LayerNorm -----------------------------
# Used for encoder self-attention (src length 1) and decoder cross-attention (memory length 1):
# softmax over a single key is the identity, so the block reduces exactly to
# LN(y + out_proj(v_proj(mem))) with the v/o row broadcast over the query length.

def _single_key_attn_ln_kernel(y_ref, mem_ref, wv_ref, bv_ref, wo_ref, bo_ref,
                               g_ref, bb_ref, o_ref, *, d_real):
    Dp = mem_ref.shape[2]
    y = y_ref[0].astype(jnp.float32)                                 # [Sq, Dp]
    m8 = jnp.broadcast_to(mem_ref[0], (8, Dp))                       # keep >=8 sublanes for the MXU
    v = jnp.dot(m8, wv_ref[...], preferred_element_type=jnp.float32) + bv_ref[...]
    o = jnp.dot(v.astype(jnp.bfloat16), wo_ref[...], preferred_element_type=jnp.float32) + bo_ref[...]
    x = y + o[0:1, :]                                                # broadcast over query length
    o_ref[0] = _ln_rows(x, g_ref[...], bb_ref[...], d_real).astype(o_ref.dtype)


def pallas_single_key_attn_ln(y, mem, attn, ln, d_real):
    B, Sq, Dp = y.shape
    vec = lambda n: pl.BlockSpec((1, n), lambda i: (0, 0))
    return pl.pallas_call(
        functools.partial(_single_key_attn_ln_kernel, d_real=d_real),
        out_shape=jax.ShapeDtypeStruct((B, Sq, Dp), jnp.bfloat16),
        grid=(B,),
        in_specs=[pl.BlockSpec((1, Sq, Dp), lambda i: (i, 0, 0)),
                  pl.BlockSpec((1, 1, Dp), lambda i: (i, 0, 0)),
                  pl.BlockSpec((Dp, Dp), lambda i: (0, 0)), vec(Dp),
                  pl.BlockSpec((Dp, Dp), lambda i: (0, 0)), vec(Dp),
                  vec(Dp), vec(Dp)],
        out_specs=pl.BlockSpec((1, Sq, Dp), lambda i: (i, 0, 0)),
        compiler_params=pltpu.CompilerParams(dimension_semantics=("parallel",),
                                             vmem_limit_bytes=VMEM_LIMIT_BYTES),
    )(y, mem, attn['v']['w'], attn['v']['b'], attn['o']['w'], attn['o']['b'], ln['g'], ln['b'])


# ----------------------------- fused decoder self-attention block -----------------------------
# QKV projection + causal/key-padding masked softmax + per-head p@v + per-head out-proj
# accumulation (no concat) + bias + residual + LayerNorm, one batch element per grid step.
# Weights stay VMEM-resident across the batch grid (constant index maps).

def _causal_self_attn_ln_kernel(y_ref, wqkv_ref, bqkv_ref, wo_ref, bo_ref, pad_ref,
                                g_ref, bb_ref, o_ref, *, nhead, d_real, scale):
    S, Dp = y_ref.shape[1], y_ref.shape[2]
    Dh = d_real // nhead

    y = y_ref[0]                                                     # [S, Dp] bf16
    qkv = jnp.dot(y, wqkv_ref[...], preferred_element_type=jnp.float32) + bqkv_ref[...]
    q = (qkv[:, 0:Dp] * scale).astype(jnp.bfloat16)
    k = qkv[:, Dp:2 * Dp].astype(jnp.bfloat16)
    v = qkv[:, 2 * Dp:3 * Dp].astype(jnp.bfloat16)

    row = jax.lax.broadcasted_iota(jnp.int32, (S, S), 0)
    col = jax.lax.broadcasted_iota(jnp.int32, (S, S), 1)
    mask = jnp.where(col > row, NEG_INF, 0.0) + pad_ref[0]           # causal + key padding

    acc = None
    for h in range(nhead):                                           # static head loop
        sl = slice(h * Dh, (h + 1) * Dh)
        s = jax.lax.dot_general(q[:, sl], k[:, sl], (((1,), (1,)), ((), ())),
                                preferred_element_type=jnp.float32) + mask
        s = s - jnp.max(s, axis=-1, keepdims=True)
        p = jnp.exp(s)
        p = p / jnp.sum(p, axis=-1, keepdims=True)                   # exact division
        ah = jnp.dot(p.astype(jnp.bfloat16), v[:, sl], preferred_element_type=jnp.float32)
        c = jnp.dot(ah.astype(jnp.bfloat16), wo_ref[h * Dh:(h + 1) * Dh, :],
                    preferred_element_type=jnp.float32)              # fused out-proj slice
        acc = c if acc is None else acc + c

    x = y.astype(jnp.float32) + acc + bo_ref[...]                    # residual + out-proj bias
    o_ref[0] = _ln_rows(x, g_ref[...], bb_ref[...], d_real).astype(o_ref.dtype)


def pallas_causal_self_attn_ln(y, pad_add, attn, ln, nhead, d_real):
    B, Sp, Dp = y.shape
    scale = 1.0 / math.sqrt(d_real // nhead)
    vec = lambda n: pl.BlockSpec((1, n), lambda i: (0, 0))
    return pl.pallas_call(
        functools.partial(_causal_self_attn_ln_kernel, nhead=nhead, d_real=d_real, scale=scale),
        out_shape=jax.ShapeDtypeStruct((B, Sp, Dp), jnp.bfloat16),
        grid=(B,),
        in_specs=[pl.BlockSpec((1, Sp, Dp), lambda i: (i, 0, 0)),
                  pl.BlockSpec((Dp, 3 * Dp), lambda i: (0, 0)), vec(3 * Dp),
                  pl.BlockSpec((Dp, Dp), lambda i: (0, 0)), vec(Dp),
                  pl.BlockSpec((1, 1, Sp), lambda i: (i, 0, 0)),
                  vec(Dp), vec(Dp)],
        out_specs=pl.BlockSpec((1, Sp, Dp), lambda i: (i, 0, 0)),
        compiler_params=pltpu.CompilerParams(dimension_semantics=("parallel",),
                                             vmem_limit_bytes=VMEM_LIMIT_BYTES),
    )(y, attn['wqkv'], attn['bqkv'], attn['o']['w'], attn['o']['b'], pad_add, ln['g'], ln['b'])


# ----------------------------- one-time parameter preparation (outside jit) -----------------------------

def positional_encoding_table(max_len, d_model):
    position = jnp.arange(max_len, dtype=jnp.float32)[:, None]
    div_term = jnp.exp(jnp.arange(0, d_model, 2, dtype=jnp.float32)
                       * (-math.log(10000.0) / d_model))
    pe = jnp.zeros((max_len, d_model), jnp.float32)
    pe = pe.at[:, 0::2].set(jnp.sin(position * div_term))
    pe = pe.at[:, 1::2].set(jnp.cos(position * div_term))
    return pe


def prepare_params(params, d_model, nhead, max_len=5000):
    """Pad/transpose/fuse all weights once: bf16 [Kp, Np] weights, f32 [1, Np] biases,
    per-layer fused QKV, zero-padded LN gamma/beta, embedding*sqrt(d_model), PE table."""
    Dp = _round_up(d_model, 128)

    def lin(p):
        K, N = p['w'].shape
        Kp, Np = _round_up(K, 128), _round_up(N, 128)
        w = jnp.zeros((Kp, Np), jnp.bfloat16).at[:K, :N].set(p['w'].astype(jnp.bfloat16))
        b = jnp.zeros((1, Np), jnp.float32).at[0, :N].set(p['b'].astype(jnp.float32))
        return {'w': w, 'b': b}

    def ln(p):
        return {'g': jnp.zeros((1, Dp), jnp.float32).at[0, :d_model].set(p['g'].astype(jnp.float32)),
                'b': jnp.zeros((1, Dp), jnp.float32).at[0, :d_model].set(p['b'].astype(jnp.float32))}

    def self_attn(p):
        wqkv = jnp.zeros((Dp, 3 * Dp), jnp.bfloat16)
        bqkv = jnp.zeros((1, 3 * Dp), jnp.float32)
        for i, name in enumerate(('q', 'k', 'v')):
            wqkv = wqkv.at[:d_model, i * Dp:i * Dp + d_model].set(p[name]['w'].astype(jnp.bfloat16))
            bqkv = bqkv.at[0, i * Dp:i * Dp + d_model].set(p[name]['b'].astype(jnp.float32))
        return {'wqkv': wqkv, 'bqkv': bqkv, 'o': lin(p['o'])}

    def vo_attn(p):   # length-1 key/value attention only needs the V and O projections
        return {'v': lin(p['v']), 'o': lin(p['o'])}

    vocab = params['embedding'].shape[0]
    emb = jnp.zeros((vocab, Dp), jnp.float32).at[:, :d_model].set(
        params['embedding'].astype(jnp.float32) * math.sqrt(d_model))
    pe = jnp.zeros((max_len, Dp), jnp.float32).at[:, :d_model].set(
        positional_encoding_table(max_len, d_model))

    return {
        'input_projection': lin(params['input_projection']),
        'embedding': emb,
        'pe': pe,
        'generator': lin(params['generator']),
        'encoder': [{'self_attn': vo_attn(l['self_attn']),
                     'ff1': lin(l['ff1']), 'ff2': lin(l['ff2']),
                     'ln1': ln(l['ln1']), 'ln2': ln(l['ln2'])} for l in params['encoder']],
        'decoder': [{'self_attn': self_attn(l['self_attn']),
                     'cross_attn': vo_attn(l['cross_attn']),
                     'ff1': lin(l['ff1']), 'ff2': lin(l['ff2']),
                     'ln1': ln(l['ln1']), 'ln2': ln(l['ln2']), 'ln3': ln(l['ln3'])}
                    for l in params['decoder']],
        'enc_norm': ln(params['enc_norm']),
        'dec_norm': ln(params['dec_norm']),
    }


# ----------------------------- forward pass (plain JAX composing Pallas calls) -----------------------------

@functools.partial(jax.jit, static_argnames=("d_model", "nhead", "padding_idx"))
def lpg_transformer_forward(prep, src_features, tgt_sequence, *, d_model, nhead, padding_idx):
    B, S = tgt_sequence.shape
    input_dim = src_features.shape[1]
    vocab = prep['embedding'].shape[0]
    Dp = prep['embedding'].shape[1]
    Kin = prep['input_projection']['w'].shape[0]
    Sp = _round_up(S, 8)
    Bp = _round_up(B, 8)

    # pad target sequence once to a sublane multiple (padding tokens; masked as keys, sliced off)
    if Sp != S:
        tgt_p = jnp.full((B, Sp), padding_idx, tgt_sequence.dtype).at[:, :S].set(tgt_sequence)
    else:
        tgt_p = tgt_sequence
    pad_add = jnp.where(tgt_p == padding_idx, NEG_INF, 0.0).astype(jnp.float32)[:, None, :]

    # input projection -> src_encoded [Bp, 1, Dp]  (batch padded once to 8 rows)
    src_p = jnp.zeros((Bp, Kin), jnp.bfloat16).at[:B, :input_dim].set(src_features.astype(jnp.bfloat16))
    x = pallas_linear(src_p, prep['input_projection']['w'], prep['input_projection']['b'])
    x = x.reshape(Bp, 1, Dp)

    # target embedding (sqrt(d_model) pre-folded) + positional encoding; dropout = identity (eval)
    tgt_emb = (prep['embedding'][tgt_p] + prep['pe'][:Sp][None]).astype(jnp.bfloat16)

    # encoder: src length 1, self-attention reduces exactly to out_proj(v_proj(x))
    for lp in prep['encoder']:
        x = pallas_single_key_attn_ln(x, x, lp['self_attn'], lp['ln1'], d_model)
        x = pallas_ffn_ln(x.reshape(Bp, Dp), lp['ff1'], lp['ff2'], lp['ln2'],
                          d_model).reshape(Bp, 1, Dp)
    memory = pallas_layernorm(x.reshape(Bp, Dp), prep['enc_norm'], d_model).reshape(Bp, 1, Dp)

    # decoder
    y = tgt_emb
    for lp in prep['decoder']:
        y = pallas_causal_self_attn_ln(y, pad_add, lp['self_attn'], lp['ln1'], nhead, d_model)
        y = pallas_single_key_attn_ln(y, memory, lp['cross_attn'], lp['ln2'], d_model)
        y = pallas_ffn_ln(y.reshape(B * Sp, Dp), lp['ff1'], lp['ff2'], lp['ln3'],
                          d_model).reshape(B, Sp, Dp)
    y = pallas_layernorm(y.reshape(B * Sp, Dp), prep['dec_norm'], d_model)

    # generator -> logits [B, S, vocab]
    logits = pallas_linear(y, prep['generator']['w'], prep['generator']['b'], out_dtype=jnp.float32)
    return logits.reshape(B, Sp, -1)[:, :S, :vocab]


# ----------------------------- deterministic parameter init -----------------------------

def init_params(key, input_dim, vocab_size, d_model, nhead, num_encoder_layers,
                num_decoder_layers, dim_feedforward, padding_idx):
    keys = iter(jax.random.split(key, 512))

    def lin(in_d, out_d):
        return {'w': jax.random.normal(next(keys), (in_d, out_d), jnp.float32) * 0.02,
                'b': jnp.zeros((out_d,), jnp.float32)}

    def mha():
        return {'q': lin(d_model, d_model), 'k': lin(d_model, d_model),
                'v': lin(d_model, d_model), 'o': lin(d_model, d_model)}

    def ln():
        return {'g': jnp.ones((d_model,), jnp.float32), 'b': jnp.zeros((d_model,), jnp.float32)}

    emb = jax.random.normal(next(keys), (vocab_size, d_model), jnp.float32) * 0.02
    emb = emb.at[padding_idx].set(0.0)   # nn.Embedding(padding_idx=...) zeroes that row

    return {
        'input_projection': lin(input_dim, d_model),
        'embedding': emb,
        'generator': lin(d_model, vocab_size),
        'encoder': [{'self_attn': mha(),
                     'ff1': lin(d_model, dim_feedforward),
                     'ff2': lin(dim_feedforward, d_model),
                     'ln1': ln(), 'ln2': ln()} for _ in range(num_encoder_layers)],
        'decoder': [{'self_attn': mha(), 'cross_attn': mha(),
                     'ff1': lin(d_model, dim_feedforward),
                     'ff2': lin(dim_feedforward, d_model),
                     'ln1': ln(), 'ln2': ln(), 'ln3': ln()} for _ in range(num_decoder_layers)],
        'enc_norm': ln(),
        'dec_norm': ln(),
    }


# ----------------------------- demo -----------------------------

if __name__ == "__main__":
    # small synthetic config consistent with LPG_Transformer.__init__
    input_dim = 16
    vocab_size = 32
    d_model = 32
    nhead = 4
    num_encoder_layers = 2
    num_decoder_layers = 2
    dim_feedforward = 64
    padding_idx = 0
    B, S = 2, 8

    key = jax.random.PRNGKey(0)
    kp, ks, kt = jax.random.split(key, 3)

    params = init_params(kp, input_dim, vocab_size, d_model, nhead,
                         num_encoder_layers, num_decoder_layers,
                         dim_feedforward, padding_idx)
    prep = prepare_params(params, d_model, nhead)   # one-time weight prep, hoisted out of forward

    src_features = jax.random.normal(ks, (B, input_dim), jnp.float32)       # [B, input_dim]
    tgt_sequence = jax.random.randint(kt, (B, S), 1, vocab_size)            # [B, S] (non-pad tokens)
    tgt_sequence = tgt_sequence.at[:, -2:].set(padding_idx)                 # trailing padding

    logits = lpg_transformer_forward(prep, src_features, tgt_sequence,
                                     d_model=d_model, nhead=nhead, padding_idx=padding_idx)
    jax.block_until_ready(logits)
    assert logits.shape == (B, S, vocab_size), logits.shape
    assert bool(jnp.all(jnp.isfinite(logits)))
    print("KERNEL_OK")
</pallas_src>

<mosaic_0001>
module attributes {stable_mosaic.version = 11 : i64} {
  func.func @_causal_self_attn_ln_kernel(%arg0: i32, %arg1: memref<1x8x128xbf16, #tpu.memory_space<vmem>>, %arg2: memref<128x384xbf16, #tpu.memory_space<vmem>>, %arg3: memref<1x384xf32, #tpu.memory_space<vmem>>, %arg4: memref<128x128xbf16, #tpu.memory_space<vmem>>, %arg5: memref<1x128xf32, #tpu.memory_space<vmem>>, %arg6: memref<1x1x8xf32, #tpu.memory_space<vmem>>, %arg7: memref<1x128xf32, #tpu.memory_space<vmem>>, %arg8: memref<1x128xf32, #tpu.memory_space<vmem>>, %arg9: memref<1x8x128xbf16, #tpu.memory_space<vmem>>) attributes {dimension_semantics = [#tpu.dimension_semantics<parallel>], iteration_bounds = array<i64: 2>, scalar_prefetch = 0 : i64, scratch_operands = 0 : i64, tpu.core_type = #tpu.core_type<tc>, window_params = [{transform_indices = @transform_0, window_bounds = array<i64: 1, 8, 128>}, {pipeline_mode = #tpu.pipeline_mode<synchronous>, transform_indices = @transform_1, window_bounds = array<i64: 128, 384>}, {pipeline_mode = #tpu.pipeline_mode<synchronous>, transform_indices = @transform_2, window_bounds = array<i64: 1, 384>}, {pipeline_mode = #tpu.pipeline_mode<synchronous>, transform_indices = @transform_3, window_bounds = array<i64: 128, 128>}, {pipeline_mode = #tpu.pipeline_mode<synchronous>, transform_indices = @transform_4, window_bounds = array<i64: 1, 128>}, {transform_indices = @transform_5, window_bounds = array<i64: 1, 1, 8>}, {pipeline_mode = #tpu.pipeline_mode<synchronous>, transform_indices = @transform_6, window_bounds = array<i64: 1, 128>}, {pipeline_mode = #tpu.pipeline_mode<synchronous>, transform_indices = @transform_7, window_bounds = array<i64: 1, 128>}, {transform_indices = @transform_8, window_bounds = array<i64: 1, 8, 128>}]} {
    %c0 = arith.constant 0 : index
    %c0_0 = arith.constant 0 : index
    %c0_1 = arith.constant 0 : index
    %0 = vector.load %arg1[%c0, %c0_0, %c0_1] : memref<1x8x128xbf16, #tpu.memory_space<vmem>>, vector<1x8x128xbf16>
    %1 = vector.shape_cast %0 : vector<1x8x128xbf16> to vector<8x128xbf16>
    %c0_2 = arith.constant 0 : index
    %c0_3 = arith.constant 0 : index
    %2 = vector.load %arg2[%c0_2, %c0_3] : memref<128x384xbf16, #tpu.memory_space<vmem>>, vector<128x384xbf16>
    %cst = arith.constant dense<0.000000e+00> : vector<8x384xf32>
    %3 = tpu.matmul %1, %2, %cst {dimension_numbers = #tpu.dot_dimension_numbers<[1], [0], [0], [1], [0, 0, 1, 1], [], []>} : vector<8x128xbf16>, vector<128x384xbf16>, vector<8x384xf32> -> vector<8x384xf32>
    %c0_4 = arith.constant 0 : index
    %c0_5 = arith.constant 0 : index
    %4 = vector.load %arg3[%c0_4, %c0_5] : memref<1x384xf32, #tpu.memory_space<vmem>>, vector<1x384xf32>
    %5 = vector.broadcast %4 : vector<1x384xf32> to vector<8x384xf32>
    %6 = arith.addf %3, %5 : vector<8x384xf32>
    %7 = vector.extract_strided_slice %6 {offsets = [0, 0], sizes = [8, 128], strides = [1, 1]} : vector<8x384xf32> to vector<8x128xf32>
    %cst_6 = arith.constant 0.353553385 : f32
    %8 = vector.broadcast %cst_6 : f32 to vector<8x128xf32>
    %9 = arith.mulf %7, %8 : vector<8x128xf32>
    %10 = arith.truncf %9 : vector<8x128xf32> to vector<8x128xbf16>
    %11 = vector.extract_strided_slice %6 {offsets = [0, 128], sizes = [8, 128], strides = [1, 1]} : vector<8x384xf32> to vector<8x128xf32>
    %12 = arith.truncf %11 : vector<8x128xf32> to vector<8x128xbf16>
    %13 = vector.extract_strided_slice %6 {offsets = [0, 256], sizes = [8, 128], strides = [1, 1]} : vector<8x384xf32> to vector<8x128xf32>
    %14 = arith.truncf %13 : vector<8x128xf32> to vector<8x128xbf16>
    %15 = tpu.iota {dimensions = array<i32: 0>} : vector<8x8xi32>
    %16 = tpu.iota {dimensions = array<i32: 1>} : vector<8x8xi32>
    %17 = arith.cmpi sgt, %16, %15 : vector<8x8xi32>
    %cst_7 = arith.constant -1.000000e+30 : f32
    %cst_8 = arith.constant 0.000000e+00 : f32
    %18 = vector.broadcast %cst_7 : f32 to vector<8x8xf32>
    %19 = vector.broadcast %cst_8 : f32 to vector<8x8xf32>
    %20 = arith.select %17, %18, %19 : vector<8x8xi1>, vector<8x8xf32>
    %c0_9 = arith.constant 0 : index
    %c0_10 = arith.constant 0 : index
    %c0_11 = arith.constant 0 : index
    %21 = vector.load %arg6[%c0_9, %c0_10, %c0_11] : memref<1x1x8xf32, #tpu.memory_space<vmem>>, vector<1x1x8xf32>
    %22 = vector.shape_cast %21 : vector<1x1x8xf32> to vector<1x8xf32>
    %23 = vector.broadcast %22 : vector<1x8xf32> to vector<8x8xf32>
    %24 = arith.addf %20, %23 : vector<8x8xf32>
    %25 = vector.extract_strided_slice %10 {offsets = [0, 0], sizes = [8, 8], strides = [1, 1]} : vector<8x128xbf16> to vector<8x8xbf16>
    %26 = vector.extract_strided_slice %12 {offsets = [0, 0], sizes = [8, 8], strides = [1, 1]} : vector<8x128xbf16> to vector<8x8xbf16>
    %cst_12 = arith.constant dense<0.000000e+00> : vector<8x8xf32>
    %27 = tpu.matmul %25, %26, %cst_12 {dimension_numbers = #tpu.dot_dimension_numbers<[1], [1], [0], [0], [0, 0, 1, 0], [], []>} : vector<8x8xbf16>, vector<8x8xbf16>, vector<8x8xf32> -> vector<8x8xf32>
    %28 = arith.addf %27, %24 : vector<8x8xf32>
    %cst_13 = arith.constant dense<0xFF800000> : vector<8xf32>
    %29 = vector.multi_reduction <maximumf>, %28, %cst_13 [1] : vector<8x8xf32> to vector<8xf32>
    %30 = vector.shape_cast %29 : vector<8xf32> to vector<8x1xf32>
    %31 = vector.broadcast %30 : vector<8x1xf32> to vector<8x8xf32>
    %32 = arith.subf %28, %31 : vector<8x8xf32>
    %33 = math.exp %32 : vector<8x8xf32>
    %cst_14 = arith.constant dense<0.000000e+00> : vector<8xf32>
    %34 = vector.multi_reduction <add>, %33, %cst_14 [1] : vector<8x8xf32> to vector<8xf32>
    %35 = vector.shape_cast %34 : vector<8xf32> to vector<8x1xf32>
    %36 = vector.broadcast %35 : vector<8x1xf32> to vector<8x8xf32>
    %37 = arith.divf %33, %36 : vector<8x8xf32>
    %38 = arith.truncf %37 : vector<8x8xf32> to vector<8x8xbf16>
    %39 = vector.extract_strided_slice %14 {offsets = [0, 0], sizes = [8, 8], strides = [1, 1]} : vector<8x128xbf16> to vector<8x8xbf16>
    %cst_15 = arith.constant dense<0.000000e+00> : vector<8x8xf32>
    %40 = tpu.matmul %38, %39, %cst_15 {dimension_numbers = #tpu.dot_dimension_numbers<[1], [0], [0], [1], [0, 0, 1, 1], [], []>} : vector<8x8xbf16>, vector<8x8xbf16>, vector<8x8xf32> -> vector<8x8xf32>
    %41 = arith.truncf %40 : vector<8x8xf32> to vector<8x8xbf16>
    %c0_16 = arith.constant 0 : index
    %c0_17 = arith.constant 0 : index
    %42 = vector.load %arg4[%c0_16, %c0_17] : memref<128x128xbf16, #tpu.memory_space<vmem>>, vector<8x128xbf16>
    %cst_18 = arith.constant dense<0.000000e+00> : vector<8x128xf32>
    %43 = tpu.matmul %41, %42, %cst_18 {dimension_numbers = #tpu.dot_dimension_numbers<[1], [0], [0], [1], [0, 0, 1, 1], [], []>} : vector<8x8xbf16>, vector<8x128xbf16>, vector<8x128xf32> -> vector<8x128xf32>
    %44 = vector.extract_strided_slice %10 {offsets = [0, 8], sizes = [8, 8], strides = [1, 1]} : vector<8x128xbf16> to vector<8x8xbf16>
    %45 = vector.extract_strided_slice %12 {offsets = [0, 8], sizes = [8, 8], strides = [1, 1]} : vector<8x128xbf16> to vector<8x8xbf16>
    %cst_19 = arith.constant dense<0.000000e+00> : vector<8x8xf32>
    %46 = tpu.matmul %44, %45, %cst_19 {dimension_numbers = #tpu.dot_dimension_numbers<[1], [1], [0], [0], [0, 0, 1, 0], [], []>} : vector<8x8xbf16>, vector<8x8xbf16>, vector<8x8xf32> -> vector<8x8xf32>
    %47 = arith.addf %46, %24 : vector<8x8xf32>
    %cst_20 = arith.constant dense<0xFF800000> : vector<8xf32>
    %48 = vector.multi_reduction <maximumf>, %47, %cst_20 [1] : vector<8x8xf32> to vector<8xf32>
    %49 = vector.shape_cast %48 : vector<8xf32> to vector<8x1xf32>
    %50 = vector.broadcast %49 : vector<8x1xf32> to vector<8x8xf32>
    %51 = arith.subf %47, %50 : vector<8x8xf32>
    %52 = math.exp %51 : vector<8x8xf32>
    %cst_21 = arith.constant dense<0.000000e+00> : vector<8xf32>
    %53 = vector.multi_reduction <add>, %52, %cst_21 [1] : vector<8x8xf32> to vector<8xf32>
    %54 = vector.shape_cast %53 : vector<8xf32> to vector<8x1xf32>
    %55 = vector.broadcast %54 : vector<8x1xf32> to vector<8x8xf32>
    %56 = arith.divf %52, %55 : vector<8x8xf32>
    %57 = arith.truncf %56 : vector<8x8xf32> to vector<8x8xbf16>
    %58 = vector.extract_strided_slice %14 {offsets = [0, 8], sizes = [8, 8], strides = [1, 1]} : vector<8x128xbf16> to vector<8x8xbf16>
    %cst_22 = arith.constant dense<0.000000e+00> : vector<8x8xf32>
    %59 = tpu.matmul %57, %58, %cst_22 {dimension_numbers = #tpu.dot_dimension_numbers<[1], [0], [0], [1], [0, 0, 1, 1], [], []>} : vector<8x8xbf16>, vector<8x8xbf16>, vector<8x8xf32> -> vector<8x8xf32>
    %60 = arith.truncf %59 : vector<8x8xf32> to vector<8x8xbf16>
    %c8 = arith.constant 8 : index
    %c0_23 = arith.constant 0 : index
    %61 = vector.load %arg4[%c8, %c0_23] : memref<128x128xbf16, #tpu.memory_space<vmem>>, vector<8x128xbf16>
    %cst_24 = arith.constant dense<0.000000e+00> : vector<8x128xf32>
    %62 = tpu.matmul %60, %61, %cst_24 {dimension_numbers = #tpu.dot_dimension_numbers<[1], [0], [0], [1], [0, 0, 1, 1], [], []>} : vector<8x8xbf16>, vector<8x128xbf16>, vector<8x128xf32> -> vector<8x128xf32>
    %63 = arith.addf %43, %62 : vector<8x128xf32>
    %64 = vector.extract_strided_slice %10 {offsets = [0, 16], sizes = [8, 8], strides = [1, 1]} : vector<8x128xbf16> to vector<8x8xbf16>
    %65 = vector.extract_strided_slice %12 {offsets = [0, 16], sizes = [8, 8], strides = [1, 1]} : vector<8x128xbf16> to vector<8x8xbf16>
    %cst_25 = arith.constant dense<0.000000e+00> : vector<8x8xf32>
    %66 = tpu.matmul %64, %65, %cst_25 {dimension_numbers = #tpu.dot_dimension_numbers<[1], [1], [0], [0], [0, 0, 1, 0], [], []>} : vector<8x8xbf16>, vector<8x8xbf16>, vector<8x8xf32> -> vector<8x8xf32>
    %67 = arith.addf %66, %24 : vector<8x8xf32>
    %cst_26 = arith.constant dense<0xFF800000> : vector<8xf32>
    %68 = vector.multi_reduction <maximumf>, %67, %cst_26 [1] : vector<8x8xf32> to vector<8xf32>
    %69 = vector.shape_cast %68 : vector<8xf32> to vector<8x1xf32>
    %70 = vector.broadcast %69 : vector<8x1xf32> to vector<8x8xf32>
    %71 = arith.subf %67, %70 : vector<8x8xf32>
    %72 = math.exp %71 : vector<8x8xf32>
    %cst_27 = arith.constant dense<0.000000e+00> : vector<8xf32>
    %73 = vector.multi_reduction <add>, %72, %cst_27 [1] : vector<8x8xf32> to vector<8xf32>
    %74 = vector.shape_cast %73 : vector<8xf32> to vector<8x1xf32>
    %75 = vector.broadcast %74 : vector<8x1xf32> to vector<8x8xf32>
    %76 = arith.divf %72, %75 : vector<8x8xf32>
    %77 = arith.truncf %76 : vector<8x8xf32> to vector<8x8xbf16>
    %78 = vector.extract_strided_slice %14 {offsets = [0, 16], sizes = [8, 8], strides = [1, 1]} : vector<8x128xbf16> to vector<8x8xbf16>
    %cst_28 = arith.constant dense<0.000000e+00> : vector<8x8xf32>
    %79 = tpu.matmul %77, %78, %cst_28 {dimension_numbers = #tpu.dot_dimension_numbers<[1], [0], [0], [1], [0, 0, 1, 1], [], []>} : vector<8x8xbf16>, vector<8x8xbf16>, vector<8x8xf32> -> vector<8x8xf32>
    %80 = arith.truncf %79 : vector<8x8xf32> to vector<8x8xbf16>
    %c16 = arith.constant 16 : index
    %c0_29 = arith.constant 0 : index
    %81 = vector.load %arg4[%c16, %c0_29] : memref<128x128xbf16, #tpu.memory_space<vmem>>, vector<8x128xbf16>
    %cst_30 = arith.constant dense<0.000000e+00> : vector<8x128xf32>
    %82 = tpu.matmul %80, %81, %cst_30 {dimension_numbers = #tpu.dot_dimension_numbers<[1], [0], [0], [1], [0, 0, 1, 1], [], []>} : vector<8x8xbf16>, vector<8x128xbf16>, vector<8x128xf32> -> vector<8x128xf32>
    %83 = arith.addf %63, %82 : vector<8x128xf32>
    %84 = vector.extract_strided_slice %10 {offsets = [0, 24], sizes = [8, 8], strides = [1, 1]} : vector<8x128xbf16> to vector<8x8xbf16>
    %85 = vector.extract_strided_slice %12 {offsets = [0, 24], sizes = [8, 8], strides = [1, 1]} : vector<8x128xbf16> to vector<8x8xbf16>
    %cst_31 = arith.constant dense<0.000000e+00> : vector<8x8xf32>
    %86 = tpu.matmul %84, %85, %cst_31 {dimension_numbers = #tpu.dot_dimension_numbers<[1], [1], [0], [0], [0, 0, 1, 0], [], []>} : vector<8x8xbf16>, vector<8x8xbf16>, vector<8x8xf32> -> vector<8x8xf32>
    %87 = arith.addf %86, %24 : vector<8x8xf32>
    %cst_32 = arith.constant dense<0xFF800000> : vector<8xf32>
    %88 = vector.multi_reduction <maximumf>, %87, %cst_32 [1] : vector<8x8xf32> to vector<8xf32>
    %89 = vector.shape_cast %88 : vector<8xf32> to vector<8x1xf32>
    %90 = vector.broadcast %89 : vector<8x1xf32> to vector<8x8xf32>
    %91 = arith.subf %87, %90 : vector<8x8xf32>
    %92 = math.exp %91 : vector<8x8xf32>
    %cst_33 = arith.constant dense<0.000000e+00> : vector<8xf32>
    %93 = vector.multi_reduction <add>, %92, %cst_33 [1] : vector<8x8xf32> to vector<8xf32>
    %94 = vector.shape_cast %93 : vector<8xf32> to vector<8x1xf32>
    %95 = vector.broadcast %94 : vector<8x1xf32> to vector<8x8xf32>
    %96 = arith.divf %92, %95 : vector<8x8xf32>
    %97 = arith.truncf %96 : vector<8x8xf32> to vector<8x8xbf16>
    %98 = vector.extract_strided_slice %14 {offsets = [0, 24], sizes = [8, 8], strides = [1, 1]} : vector<8x128xbf16> to vector<8x8xbf16>
    %cst_34 = arith.constant dense<0.000000e+00> : vector<8x8xf32>
    %99 = tpu.matmul %97, %98, %cst_34 {dimension_numbers = #tpu.dot_dimension_numbers<[1], [0], [0], [1], [0, 0, 1, 1], [], []>} : vector<8x8xbf16>, vector<8x8xbf16>, vector<8x8xf32> -> vector<8x8xf32>
    %100 = arith.truncf %99 : vector<8x8xf32> to vector<8x8xbf16>
    %c24 = arith.constant 24 : index
    %c0_35 = arith.constant 0 : index
    %101 = vector.load %arg4[%c24, %c0_35] : memref<128x128xbf16, #tpu.memory_space<vmem>>, vector<8x128xbf16>
    %cst_36 = arith.constant dense<0.000000e+00> : vector<8x128xf32>
    %102 = tpu.matmul %100, %101, %cst_36 {dimension_numbers = #tpu.dot_dimension_numbers<[1], [0], [0], [1], [0, 0, 1, 1], [], []>} : vector<8x8xbf16>, vector<8x128xbf16>, vector<8x128xf32> -> vector<8x128xf32>
    %103 = arith.addf %83, %102 : vector<8x128xf32>
    %104 = arith.extf %1 : vector<8x128xbf16> to vector<8x128xf32>
    %105 = arith.addf %104, %103 : vector<8x128xf32>
    %c0_37 = arith.constant 0 : index
    %c0_38 = arith.constant 0 : index
    %106 = vector.load %arg5[%c0_37, %c0_38] : memref<1x128xf32, #tpu.memory_space<vmem>>, vector<1x128xf32>
    %107 = vector.broadcast %106 : vector<1x128xf32> to vector<8x128xf32>
    %108 = arith.addf %105, %107 : vector<8x128xf32>
    %c0_39 = arith.constant 0 : index
    %c0_40 = arith.constant 0 : index
    %109 = vector.load %arg7[%c0_39, %c0_40] : memref<1x128xf32, #tpu.memory_space<vmem>>, vector<1x128xf32>
    %c0_41 = arith.constant 0 : index
    %c0_42 = arith.constant 0 : index
    %110 = vector.load %arg8[%c0_41, %c0_42] : memref<1x128xf32, #tpu.memory_space<vmem>>, vector<1x128xf32>
    %cst_43 = arith.constant dense<0.000000e+00> : vector<8xf32>
    %111 = vector.multi_reduction <add>, %108, %cst_43 [1] : vector<8x128xf32> to vector<8xf32>
    %112 = vector.shape_cast %111 : vector<8xf32> to vector<8x1xf32>
    %cst_44 = arith.constant 3.125000e-02 : f32
    %113 = vector.broadcast %cst_44 : f32 to vector<8x1xf32>
    %114 = arith.mulf %112, %113 : vector<8x1xf32>
    %115 = tpu.iota {dimensions = array<i32: 1>} : vector<8x128xi32>
    %c32_i32 = arith.constant 32 : i32
    %116 = vector.broadcast %c32_i32 : i32 to vector<8x128xi32>
    %117 = arith.cmpi slt, %115, %116 : vector<8x128xi32>
    %118 = vector.broadcast %114 : vector<8x1xf32> to vector<8x128xf32>
    %119 = arith.subf %108, %118 : vector<8x128xf32>
    %cst_45 = arith.constant 0.000000e+00 : f32
    %120 = vector.broadcast %cst_45 : f32 to vector<8x128xf32>
    %121 = arith.select %117, %119, %120 : vector<8x128xi1>, vector<8x128xf32>
    %122 = arith.mulf %121, %121 : vector<8x128xf32>
    %cst_46 = arith.constant dense<0.000000e+00> : vector<8xf32>
    %123 = vector.multi_reduction <add>, %122, %cst_46 [1] : vector<8x128xf32> to vector<8xf32>
    %124 = vector.shape_cast %123 : vector<8xf32> to vector<8x1xf32>
    %cst_47 = arith.constant 3.125000e-02 : f32
    %125 = vector.broadcast %cst_47 : f32 to vector<8x1xf32>
    %126 = arith.mulf %124, %125 : vector<8x1xf32>
    %cst_48 = arith.constant 9.99999974E-6 : f32
    %127 = vector.broadcast %cst_48 : f32 to vector<8x1xf32>
    %128 = arith.addf %126, %127 : vector<8x1xf32>
    %129 = math.rsqrt %128 : vector<8x1xf32>
    %130 = vector.broadcast %129 : vector<8x1xf32> to vector<8x128xf32>
    %131 = arith.mulf %121, %130 : vector<8x128xf32>
    %132 = vector.broadcast %109 : vector<1x128xf32> to vector<8x128xf32>
    %133 = arith.mulf %131, %132 : vector<8x128xf32>
    %134 = vector.broadcast %110 : vector<1x128xf32> to vector<8x128xf32>
    %135 = arith.addf %133, %134 : vector<8x128xf32>
    %136 = arith.truncf %135 : vector<8x128xf32> to vector<8x128xbf16>
    %c0_49 = arith.constant 0 : index
    %c0_50 = arith.constant 0 : index
    %c0_51 = arith.constant 0 : index
    %137 = vector.load %arg9[%c0_49, %c0_50, %c0_51] : memref<1x8x128xbf16, #tpu.memory_space<vmem>>, vector<1x8x128xbf16>
    %138 = vector.shape_cast %137 : vector<1x8x128xbf16> to vector<8x128xbf16>
    %139 = vector.shape_cast %136 : vector<8x128xbf16> to vector<1x8x128xbf16>
    tpu.vector_store %arg9[%c0_49, %c0_50, %c0_51], %139 {strides = array<i32>} : memref<1x8x128xbf16, #tpu.memory_space<vmem>>, vector<1x8x128xbf16>,
    return
  }
  func.func @transform_0(%arg0: i32) -> (i32, i32, i32) {
    %c0_i32 = arith.constant 0 : i32
    %c0_i32_0 = arith.constant 0 : i32
    %c0_i32_1 = arith.constant 0 : i32
    return %arg0, %c0_i32, %c0_i32_0 : i32, i32, i32
  }
  func.func @transform_1(%arg0: i32) -> (i32, i32) {
    %c0_i32 = arith.constant 0 : i32
    %c0_i32_0 = arith.constant 0 : i32
    %c0_i32_1 = arith.constant 0 : i32
    return %c0_i32, %c0_i32_0 : i32, i32
  }
  func.func @transform_2(%arg0: i32) -> (i32, i32) {
    %c0_i32 = arith.constant 0 : i32
    %c0_i32_0 = arith.constant 0 : i32
    %c0_i32_1 = arith.constant 0 : i32
    return %c0_i32, %c0_i32_0 : i32, i32
  }
  func.func @transform_3(%arg0: i32) -> (i32, i32) {
    %c0_i32 = arith.constant 0 : i32
    %c0_i32_0 = arith.constant 0 : i32
    %c0_i32_1 = arith.constant 0 : i32
    return %c0_i32, %c0_i32_0 : i32, i32
  }
  func.func @transform_4(%arg0: i32) -> (i32, i32) {
    %c0_i32 = arith.constant 0 : i32
    %c0_i32_0 = arith.constant 0 : i32
    %c0_i32_1 = arith.constant 0 : i32
    return %c0_i32, %c0_i32_0 : i32, i32
  }
  func.func @transform_5(%arg0: i32) -> (i32, i32, i32) {
    %c0_i32 = arith.constant 0 : i32
    %c0_i32_0 = arith.constant 0 : i32
    %c0_i32_1 = arith.constant 0 : i32
    return %arg0, %c0_i32, %c0_i32_0 : i32, i32, i32
  }
  func.func @transform_6(%arg0: i32) -> (i32, i32) {
    %c0_i32 = arith.constant 0 : i32
    %c0_i32_0 = arith.constant 0 : i32
    %c0_i32_1 = arith.constant 0 : i32
    return %c0_i32, %c0_i32_0 : i32, i32
  }
  func.func @transform_7(%arg0: i32) -> (i32, i32) {
    %c0_i32 = arith.constant 0 : i32
    %c0_i32_0 = arith.constant 0 : i32
    %c0_i32_1 = arith.constant 0 : i32
    return %c0_i32, %c0_i32_0 : i32, i32
  }
  func.func @transform_8(%arg0: i32) -> (i32, i32, i32) {
    %c0_i32 = arith.constant 0 : i32
    %c0_i32_0 = arith.constant 0 : i32
    %c0_i32_1 = arith.constant 0 : i32
    return %arg0, %c0_i32, %c0_i32_0 : i32, i32, i32
  }
}

module attributes {stable_mosaic.version = 11 : i64} {
  func.func @_matmul_kernel(%arg0: i32, %arg1: i32, %arg2: i32, %arg3: memref<8x128xbf16, #tpu.memory_space<vmem>>, %arg4: memref<128x128xbf16, #tpu.memory_space<vmem>>, %arg5: memref<1x128xf32, #tpu.memory_space<vmem>>, %arg6: memref<8x128xbf16, #tpu.memory_space<vmem>>, %arg7: memref<8x128xf32, #tpu.memory_space<vmem>>) attributes {dimension_semantics = [#tpu.dimension_semantics<parallel>, #tpu.dimension_semantics<parallel>, #tpu.dimension_semantics<arbitrary>], iteration_bounds = array<i64: 1, 1, 1>, scalar_prefetch = 0 : i64, scratch_operands = 1 : i64, tpu.core_type = #tpu.core_type<tc>, window_params = [{transform_indices = @transform_0, window_bounds = array<i64: 8, 128>}, {transform_indices = @transform_1, window_bounds = array<i64: 128, 128>}, {transform_indices = @transform_2, window_bounds = array<i64: 1, 128>}, {transform_indices = @transform_3, window_bounds = array<i64: 8, 128>}]} {
    %c0_i32 = arith.constant 0 : i32
    %0 = arith.cmpi eq, %arg2, %c0_i32 : i32
    %1 = arith.extui %0 : i1 to i32
    %c0_i32_0 = arith.constant 0 : i32
    %2 = arith.cmpi ne, %1, %c0_i32_0 : i32
    scf.if %2 {
      %cst_10 = arith.constant 0.000000e+00 : f32
      %12 = vector.broadcast %cst_10 : f32 to vector<8x128xf32>
      %c0_11 = arith.constant 0 : index
      %c0_12 = arith.constant 0 : index
      %13 = vector.load %arg7[%c0_11, %c0_12] : memref<8x128xf32, #tpu.memory_space<vmem>>, vector<8x128xf32>
      tpu.vector_store %arg7[%c0_11, %c0_12], %12 {strides = array<i32>} : memref<8x128xf32, #tpu.memory_space<vmem>>, vector<8x128xf32>,
    } else {
    }
    %c0 = arith.constant 0 : index
    %c0_1 = arith.constant 0 : index
    %3 = vector.load %arg7[%c0, %c0_1] : memref<8x128xf32, #tpu.memory_space<vmem>>, vector<8x128xf32>
    %c0_2 = arith.constant 0 : index
    %c0_3 = arith.constant 0 : index
    %4 = vector.load %arg3[%c0_2, %c0_3] : memref<8x128xbf16, #tpu.memory_space<vmem>>, vector<8x128xbf16>
    %c0_4 = arith.constant 0 : index
    %c0_5 = arith.constant 0 : index
    %5 = vector.load %arg4[%c0_4, %c0_5] : memref<128x128xbf16, #tpu.memory_space<vmem>>, vector<128x128xbf16>
    %cst = arith.constant dense<0.000000e+00> : vector<8x128xf32>
    %6 = tpu.matmul %4, %5, %cst {dimension_numbers = #tpu.dot_dimension_numbers<[1], [0], [0], [1], [0, 0, 1, 1], [], []>} : vector<8x128xbf16>, vector<128x128xbf16>, vector<8x128xf32> -> vector<8x128xf32>
    %7 = arith.addf %3, %6 : vector<8x128xf32>
    %c0_6 = arith.constant 0 : index
    %c0_7 = arith.constant 0 : index
    %8 = vector.load %arg7[%c0_6, %c0_7] : memref<8x128xf32, #tpu.memory_space<vmem>>, vector<8x128xf32>
    tpu.vector_store %arg7[%c0_6, %c0_7], %7 {strides = array<i32>} : memref<8x128xf32, #tpu.memory_space<vmem>>, vector<8x128xf32>,
    %c0_i32_8 = arith.constant 0 : i32
    %9 = arith.cmpi eq, %arg2, %c0_i32_8 : i32
    %10 = arith.extui %9 : i1 to i32
    %c0_i32_9 = arith.constant 0 : i32
    %11 = arith.cmpi ne, %10, %c0_i32_9 : i32
    scf.if %11 {
      %c0_10 = arith.constant 0 : index
      %c0_11 = arith.constant 0 : index
      %12 = vector.load %arg7[%c0_10, %c0_11] : memref<8x128xf32, #tpu.memory_space<vmem>>, vector<8x128xf32>
      %c0_12 = arith.constant 0 : index
      %c0_13 = arith.constant 0 : index
      %13 = vector.load %arg5[%c0_12, %c0_13] : memref<1x128xf32, #tpu.memory_space<vmem>>, vector<1x128xf32>
      %14 = vector.broadcast %13 : vector<1x128xf32> to vector<8x128xf32>
      %15 = arith.addf %12, %14 : vector<8x128xf32>
      %16 = arith.truncf %15 : vector<8x128xf32> to vector<8x128xbf16>
      %c0_14 = arith.constant 0 : index
      %c0_15 = arith.constant 0 : index
      %17 = vector.load %arg6[%c0_14, %c0_15] : memref<8x128xbf16, #tpu.memory_space<vmem>>, vector<8x128xbf16>
      tpu.vector_store %arg6[%c0_14, %c0_15], %16 {strides = array<i32>} : memref<8x128xbf16, #tpu.memory_space<vmem>>, vector<8x128xbf16>,
    } else {
    }
    return
  }
  func.func @transform_0(%arg0: i32, %arg1: i32, %arg2: i32) -> (i32, i32) {
    %c0_i32 = arith.constant 0 : i32
    return %arg0, %arg2 : i32, i32
  }
  func.func @transform_1(%arg0: i32, %arg1: i32, %arg2: i32) -> (i32, i32) {
    %c0_i32 = arith.constant 0 : i32
    return %arg2, %arg1 : i32, i32
  }
  func.func @transform_2(%arg0: i32, %arg1: i32, %arg2: i32) -> (i32, i32) {
    %c0_i32 = arith.constant 0 : i32
    %c0_i32_0 = arith.constant 0 : i32
    return %c0_i32, %arg1 : i32, i32
  }
  func.func @transform_3(%arg0: i32, %arg1: i32, %arg2: i32) -> (i32, i32) {
    %c0_i32 = arith.constant 0 : i32
    return %arg0, %arg1 : i32, i32
  }
}

module attributes {stable_mosaic.version = 11 : i64} {
  func.func @_ffn_ln_kernel(%arg0: i32, %arg1: memref<8x128xbf16, #tpu.memory_space<vmem>>, %arg2: memref<128x128xbf16, #tpu.memory_space<vmem>>, %arg3: memref<1x128xf32, #tpu.memory_space<vmem>>, %arg4: memref<128x128xbf16, #tpu.memory_space<vmem>>, %arg5: memref<1x128xf32, #tpu.memory_space<vmem>>, %arg6: memref<1x128xf32, #tpu.memory_space<vmem>>, %arg7: memref<1x128xf32, #tpu.memory_space<vmem>>, %arg8: memref<8x128xbf16, #tpu.memory_space<vmem>>) attributes {dimension_semantics = [#tpu.dimension_semantics<parallel>], iteration_bounds = array<i64: 1>, scalar_prefetch = 0 : i64, scratch_operands = 0 : i64, tpu.core_type = #tpu.core_type<tc>, window_params = [{transform_indices = @transform_0, window_bounds = array<i64: 8, 128>}, {pipeline_mode = #tpu.pipeline_mode<synchronous>, transform_indices = @transform_1, window_bounds = array<i64: 128, 128>}, {pipeline_mode = #tpu.pipeline_mode<synchronous>, transform_indices = @transform_2, window_bounds = array<i64: 1, 128>}, {pipeline_mode = #tpu.pipeline_mode<synchronous>, transform_indices = @transform_3, window_bounds = array<i64: 128, 128>}, {pipeline_mode = #tpu.pipeline_mode<synchronous>, transform_indices = @transform_4, window_bounds = array<i64: 1, 128>}, {pipeline_mode = #tpu.pipeline_mode<synchronous>, transform_indices = @transform_5, window_bounds = array<i64: 1, 128>}, {pipeline_mode = #tpu.pipeline_mode<synchronous>, transform_indices = @transform_6, window_bounds = array<i64: 1, 128>}, {transform_indices = @transform_7, window_bounds = array<i64: 8, 128>}]} {
    %c0 = arith.constant 0 : index
    %c0_0 = arith.constant 0 : index
    %0 = vector.load %arg1[%c0, %c0_0] : memref<8x128xbf16, #tpu.memory_space<vmem>>, vector<8x128xbf16>
    %c0_1 = arith.constant 0 : index
    %c0_2 = arith.constant 0 : index
    %1 = vector.load %arg2[%c0_1, %c0_2] : memref<128x128xbf16, #tpu.memory_space<vmem>>, vector<128x128xbf16>
    %cst = arith.constant dense<0.000000e+00> : vector<8x128xf32>
    %2 = tpu.matmul %0, %1, %cst {dimension_numbers = #tpu.dot_dimension_numbers<[1], [0], [0], [1], [0, 0, 1, 1], [], []>} : vector<8x128xbf16>, vector<128x128xbf16>, vector<8x128xf32> -> vector<8x128xf32>
    %c0_3 = arith.constant 0 : index
    %c0_4 = arith.constant 0 : index
    %3 = vector.load %arg3[%c0_3, %c0_4] : memref<1x128xf32, #tpu.memory_space<vmem>>, vector<1x128xf32>
    %4 = vector.broadcast %3 : vector<1x128xf32> to vector<8x128xf32>
    %5 = arith.addf %2, %4 : vector<8x128xf32>
    %cst_5 = arith.constant 5.000000e-01 : f32
    %6 = vector.broadcast %cst_5 : f32 to vector<8x128xf32>
    %7 = arith.mulf %6, %5 : vector<8x128xf32>
    %cst_6 = arith.constant 0.707106769 : f32
    %8 = vector.broadcast %cst_6 : f32 to vector<8x128xf32>
    %9 = arith.mulf %5, %8 : vector<8x128xf32>
    %10 = math.absf %9 : vector<8x128xf32>
    %cst_7 = arith.constant 0.327591091 : f32
    %11 = vector.broadcast %cst_7 : f32 to vector<8x128xf32>
    %12 = arith.mulf %11, %10 : vector<8x128xf32>
    %cst_8 = arith.constant 1.000000e+00 : f32
    %13 = vector.broadcast %cst_8 : f32 to vector<8x128xf32>
    %14 = arith.addf %13, %12 : vector<8x128xf32>
    %cst_9 = arith.constant 1.000000e+00 : f32
    %15 = vector.broadcast %cst_9 : f32 to vector<8x128xf32>
    %16 = arith.divf %15, %14 : vector<8x128xf32>
    %cst_10 = arith.constant 1.06140542 : f32
    %17 = vector.broadcast %cst_10 : f32 to vector<8x128xf32>
    %18 = arith.mulf %17, %16 : vector<8x128xf32>
    %cst_11 = arith.constant -1.45315206 : f32
    %19 = vector.broadcast %cst_11 : f32 to vector<8x128xf32>
    %20 = arith.addf %18, %19 : vector<8x128xf32>
    %21 = arith.mulf %20, %16 : vector<8x128xf32>
    %cst_12 = arith.constant 1.42141378 : f32
    %22 = vector.broadcast %cst_12 : f32 to vector<8x128xf32>
    %23 = arith.addf %21, %22 : vector<8x128xf32>
    %24 = arith.mulf %23, %16 : vector<8x128xf32>
    %cst_13 = arith.constant -0.284496725 : f32
    %25 = vector.broadcast %cst_13 : f32 to vector<8x128xf32>
    %26 = arith.addf %24, %25 : vector<8x128xf32>
    %27 = arith.mulf %26, %16 : vector<8x128xf32>
    %cst_14 = arith.constant 0.254829586 : f32
    %28 = vector.broadcast %cst_14 : f32 to vector<8x128xf32>
    %29 = arith.addf %27, %28 : vector<8x128xf32>
    %30 = arith.mulf %29, %16 : vector<8x128xf32>
    %cst_15 = arith.constant 0.000000e+00 : f32
    %31 = vector.broadcast %cst_15 : f32 to vector<8x128xf32>
    %32 = arith.subf %31, %10 : vector<8x128xf32>
    %33 = arith.mulf %32, %10 : vector<8x128xf32>
    %34 = math.exp %33 : vector<8x128xf32>
    %35 = arith.mulf %30, %34 : vector<8x128xf32>
    %cst_16 = arith.constant 1.000000e+00 : f32
    %36 = vector.broadcast %cst_16 : f32 to vector<8x128xf32>
    %37 = arith.subf %36, %35 : vector<8x128xf32>
    %cst_17 = arith.constant 0.000000e+00 : f32
    %38 = vector.broadcast %cst_17 : f32 to vector<8x128xf32>
    %39 = arith.cmpf olt, %9, %38 : vector<8x128xf32>
    %cst_18 = arith.constant 0.000000e+00 : f32
    %40 = vector.broadcast %cst_18 : f32 to vector<8x128xf32>
    %41 = arith.subf %40, %37 : vector<8x128xf32>
    %42 = arith.select %39, %41, %37 : vector<8x128xi1>, vector<8x128xf32>
    %cst_19 = arith.constant 1.000000e+00 : f32
    %43 = vector.broadcast %cst_19 : f32 to vector<8x128xf32>
    %44 = arith.addf %43, %42 : vector<8x128xf32>
    %45 = arith.mulf %7, %44 : vector<8x128xf32>
    %46 = arith.truncf %45 : vector<8x128xf32> to vector<8x128xbf16>
    %c0_20 = arith.constant 0 : index
    %c0_21 = arith.constant 0 : index
    %47 = vector.load %arg4[%c0_20, %c0_21] : memref<128x128xbf16, #tpu.memory_space<vmem>>, vector<128x128xbf16>
    %cst_22 = arith.constant dense<0.000000e+00> : vector<8x128xf32>
    %48 = tpu.matmul %46, %47, %cst_22 {dimension_numbers = #tpu.dot_dimension_numbers<[1], [0], [0], [1], [0, 0, 1, 1], [], []>} : vector<8x128xbf16>, vector<128x128xbf16>, vector<8x128xf32> -> vector<8x128xf32>
    %c0_23 = arith.constant 0 : index
    %c0_24 = arith.constant 0 : index
    %49 = vector.load %arg5[%c0_23, %c0_24] : memref<1x128xf32, #tpu.memory_space<vmem>>, vector<1x128xf32>
    %50 = vector.broadcast %49 : vector<1x128xf32> to vector<8x128xf32>
    %51 = arith.addf %48, %50 : vector<8x128xf32>
    %52 = arith.extf %0 : vector<8x128xbf16> to vector<8x128xf32>
    %53 = arith.addf %51, %52 : vector<8x128xf32>
    %c0_25 = arith.constant 0 : index
    %c0_26 = arith.constant 0 : index
    %54 = vector.load %arg6[%c0_25, %c0_26] : memref<1x128xf32, #tpu.memory_space<vmem>>, vector<1x128xf32>
    %c0_27 = arith.constant 0 : index
    %c0_28 = arith.constant 0 : index
    %55 = vector.load %arg7[%c0_27, %c0_28] : memref<1x128xf32, #tpu.memory_space<vmem>>, vector<1x128xf32>
    %cst_29 = arith.constant dense<0.000000e+00> : vector<8xf32>
    %56 = vector.multi_reduction <add>, %53, %cst_29 [1] : vector<8x128xf32> to vector<8xf32>
    %57 = vector.shape_cast %56 : vector<8xf32> to vector<8x1xf32>
    %cst_30 = arith.constant 3.125000e-02 : f32
    %58 = vector.broadcast %cst_30 : f32 to vector<8x1xf32>
    %59 = arith.mulf %57, %58 : vector<8x1xf32>
    %60 = tpu.iota {dimensions = array<i32: 1>} : vector<8x128xi32>
    %c32_i32 = arith.constant 32 : i32
    %61 = vector.broadcast %c32_i32 : i32 to vector<8x128xi32>
    %62 = arith.cmpi slt, %60, %61 : vector<8x128xi32>
    %63 = vector.broadcast %59 : vector<8x1xf32> to vector<8x128xf32>
    %64 = arith.subf %53, %63 : vector<8x128xf32>
    %cst_31 = arith.constant 0.000000e+00 : f32
    %65 = vector.broadcast %cst_31 : f32 to vector<8x128xf32>
    %66 = arith.select %62, %64, %65 : vector<8x128xi1>, vector<8x128xf32>
    %67 = arith.mulf %66, %66 : vector<8x128xf32>
    %cst_32 = arith.constant dense<0.000000e+00> : vector<8xf32>
    %68 = vector.multi_reduction <add>, %67, %cst_32 [1] : vector<8x128xf32> to vector<8xf32>
    %69 = vector.shape_cast %68 : vector<8xf32> to vector<8x1xf32>
    %cst_33 = arith.constant 3.125000e-02 : f32
    %70 = vector.broadcast %cst_33 : f32 to vector<8x1xf32>
    %71 = arith.mulf %69, %70 : vector<8x1xf32>
    %cst_34 = arith.constant 9.99999974E-6 : f32
    %72 = vector.broadcast %cst_34 : f32 to vector<8x1xf32>
    %73 = arith.addf %71, %72 : vector<8x1xf32>
    %74 = math.rsqrt %73 : vector<8x1xf32>
    %75 = vector.broadcast %74 : vector<8x1xf32> to vector<8x128xf32>
    %76 = arith.mulf %66, %75 : vector<8x128xf32>
    %77 = vector.broadcast %54 : vector<1x128xf32> to vector<8x128xf32>
    %78 = arith.mulf %76, %77 : vector<8x128xf32>
    %79 = vector.broadcast %55 : vector<1x128xf32> to vector<8x128xf32>
    %80 = arith.addf %78, %79 : vector<8x128xf32>
    %81 = arith.truncf %80 : vector<8x128xf32> to vector<8x128xbf16>
    %c0_35 = arith.constant 0 : index
    %c0_36 = arith.constant 0 : index
    %82 = vector.load %arg8[%c0_35, %c0_36] : memref<8x128xbf16, #tpu.memory_space<vmem>>, vector<8x128xbf16>
    tpu.vector_store %arg8[%c0_35, %c0_36], %81 {strides = array<i32>} : memref<8x128xbf16, #tpu.memory_space<vmem>>, vector<8x128xbf16>,
    return
  }
  func.func @transform_0(%arg0: i32) -> (i32, i32) {
    %c0_i32 = arith.constant 0 : i32
    %c0_i32_0 = arith.constant 0 : i32
    return %arg0, %c0_i32 : i32, i32
  }
  func.func @transform_1(%arg0: i32) -> (i32, i32) {
    %c0_i32 = arith.constant 0 : i32
    %c0_i32_0 = arith.constant 0 : i32
    %c0_i32_1 = arith.constant 0 : i32
    return %c0_i32, %c0_i32_0 : i32, i32
  }
  func.func @transform_2(%arg0: i32) -> (i32, i32) {
    %c0_i32 = arith.constant 0 : i32
    %c0_i32_0 = arith.constant 0 : i32
    %c0_i32_1 = arith.constant 0 : i32
    return %c0_i32, %c0_i32_0 : i32, i32
  }
  func.func @transform_3(%arg0: i32) -> (i32, i32) {
    %c0_i32 = arith.constant 0 : i32
    %c0_i32_0 = arith.constant 0 : i32
    %c0_i32_1 = arith.constant 0 : i32
    return %c0_i32, %c0_i32_0 : i32, i32
  }
  func.func @transform_4(%arg0: i32) -> (i32, i32) {
    %c0_i32 = arith.constant 0 : i32
    %c0_i32_0 = arith.constant 0 : i32
    %c0_i32_1 = arith.constant 0 : i32
    return %c0_i32, %c0_i32_0 : i32, i32
  }
  func.func @transform_5(%arg0: i32) -> (i32, i32) {
    %c0_i32 = arith.constant 0 : i32
    %c0_i32_0 = arith.constant 0 : i32
    %c0_i32_1 = arith.constant 0 : i32
    return %c0_i32, %c0_i32_0 : i32, i32
  }
  func.func @transform_6(%arg0: i32) -> (i32, i32) {
    %c0_i32 = arith.constant 0 : i32
    %c0_i32_0 = arith.constant 0 : i32
    %c0_i32_1 = arith.constant 0 : i32
    return %c0_i32, %c0_i32_0 : i32, i32
  }
  func.func @transform_7(%arg0: i32) -> (i32, i32) {
    %c0_i32 = arith.constant 0 : i32
    %c0_i32_0 = arith.constant 0 : i32
    return %arg0, %c0_i32 : i32, i32
  }
}

module attributes {stable_mosaic.version = 11 : i64} {
  func.func @_single_key_attn_ln_kernel(%arg0: i32, %arg1: memref<1x1x128xbf16, #tpu.memory_space<vmem>>, %arg2: memref<1x1x128xbf16, #tpu.memory_space<vmem>>, %arg3: memref<128x128xbf16, #tpu.memory_space<vmem>>, %arg4: memref<1x128xf32, #tpu.memory_space<vmem>>, %arg5: memref<128x128xbf16, #tpu.memory_space<vmem>>, %arg6: memref<1x128xf32, #tpu.memory_space<vmem>>, %arg7: memref<1x128xf32, #tpu.memory_space<vmem>>, %arg8: memref<1x128xf32, #tpu.memory_space<vmem>>, %arg9: memref<1x1x128xbf16, #tpu.memory_space<vmem>>) attributes {dimension_semantics = [#tpu.dimension_semantics<parallel>], iteration_bounds = array<i64: 8>, scalar_prefetch = 0 : i64, scratch_operands = 0 : i64, tpu.core_type = #tpu.core_type<tc>, window_params = [{transform_indices = @transform_0, window_bounds = array<i64: 1, 1, 128>}, {transform_indices = @transform_1, window_bounds = array<i64: 1, 1, 128>}, {pipeline_mode = #tpu.pipeline_mode<synchronous>, transform_indices = @transform_2, window_bounds = array<i64: 128, 128>}, {pipeline_mode = #tpu.pipeline_mode<synchronous>, transform_indices = @transform_3, window_bounds = array<i64: 1, 128>}, {pipeline_mode = #tpu.pipeline_mode<synchronous>, transform_indices = @transform_4, window_bounds = array<i64: 128, 128>}, {pipeline_mode = #tpu.pipeline_mode<synchronous>, transform_indices = @transform_5, window_bounds = array<i64: 1, 128>}, {pipeline_mode = #tpu.pipeline_mode<synchronous>, transform_indices = @transform_6, window_bounds = array<i64: 1, 128>}, {pipeline_mode = #tpu.pipeline_mode<synchronous>, transform_indices = @transform_7, window_bounds = array<i64: 1, 128>}, {transform_indices = @transform_8, window_bounds = array<i64: 1, 1, 128>}]} {
    %c0 = arith.constant 0 : index
    %c0_0 = arith.constant 0 : index
    %c0_1 = arith.constant 0 : index
    %0 = vector.load %arg1[%c0, %c0_0, %c0_1] : memref<1x1x128xbf16, #tpu.memory_space<vmem>>, vector<1x1x128xbf16>
    %1 = vector.shape_cast %0 : vector<1x1x128xbf16> to vector<1x128xbf16>
    %2 = arith.extf %1 : vector<1x128xbf16> to vector<1x128xf32>
    %c0_2 = arith.constant 0 : index
    %c0_3 = arith.constant 0 : index
    %c0_4 = arith.constant 0 : index
    %3 = vector.load %arg2[%c0_2, %c0_3, %c0_4] : memref<1x1x128xbf16, #tpu.memory_space<vmem>>, vector<1x1x128xbf16>
    %4 = vector.shape_cast %3 : vector<1x1x128xbf16> to vector<1x128xbf16>
    %5 = vector.shape_cast %4 : vector<1x128xbf16> to vector<1x128xbf16>
    %6 = vector.broadcast %5 : vector<1x128xbf16> to vector<8x128xbf16>
    %c0_5 = arith.constant 0 : index
    %c0_6 = arith.constant 0 : index
    %7 = vector.load %arg3[%c0_5, %c0_6] : memref<128x128xbf16, #tpu.memory_space<vmem>>, vector<128x128xbf16>
    %cst = arith.constant dense<0.000000e+00> : vector<8x128xf32>
    %8 = tpu.matmul %6, %7, %cst {dimension_numbers = #tpu.dot_dimension_numbers<[1], [0], [0], [1], [0, 0, 1, 1], [], []>} : vector<8x128xbf16>, vector<128x128xbf16>, vector<8x128xf32> -> vector<8x128xf32>
    %c0_7 = arith.constant 0 : index
    %c0_8 = arith.constant 0 : index
    %9 = vector.load %arg4[%c0_7, %c0_8] : memref<1x128xf32, #tpu.memory_space<vmem>>, vector<1x128xf32>
    %10 = vector.broadcast %9 : vector<1x128xf32> to vector<8x128xf32>
    %11 = arith.addf %8, %10 : vector<8x128xf32>
    %12 = arith.truncf %11 : vector<8x128xf32> to vector<8x128xbf16>
    %c0_9 = arith.constant 0 : index
    %c0_10 = arith.constant 0 : index
    %13 = vector.load %arg5[%c0_9, %c0_10] : memref<128x128xbf16, #tpu.memory_space<vmem>>, vector<128x128xbf16>
    %cst_11 = arith.constant dense<0.000000e+00> : vector<8x128xf32>
    %14 = tpu.matmul %12, %13, %cst_11 {dimension_numbers = #tpu.dot_dimension_numbers<[1], [0], [0], [1], [0, 0, 1, 1], [], []>} : vector<8x128xbf16>, vector<128x128xbf16>, vector<8x128xf32> -> vector<8x128xf32>
    %c0_12 = arith.constant 0 : index
    %c0_13 = arith.constant 0 : index
    %15 = vector.load %arg6[%c0_12, %c0_13] : memref<1x128xf32, #tpu.memory_space<vmem>>, vector<1x128xf32>
    %16 = vector.broadcast %15 : vector<1x128xf32> to vector<8x128xf32>
    %17 = arith.addf %14, %16 : vector<8x128xf32>
    %18 = vector.extract_strided_slice %17 {offsets = [0, 0], sizes = [1, 128], strides = [1, 1]} : vector<8x128xf32> to vector<1x128xf32>
    %19 = arith.addf %2, %18 : vector<1x128xf32>
    %c0_14 = arith.constant 0 : index
    %c0_15 = arith.constant 0 : index
    %20 = vector.load %arg7[%c0_14, %c0_15] : memref<1x128xf32, #tpu.memory_space<vmem>>, vector<1x128xf32>
    %c0_16 = arith.constant 0 : index
    %c0_17 = arith.constant 0 : index
    %21 = vector.load %arg8[%c0_16, %c0_17] : memref<1x128xf32, #tpu.memory_space<vmem>>, vector<1x128xf32>
    %cst_18 = arith.constant dense<0.000000e+00> : vector<1xf32>
    %22 = vector.multi_reduction <add>, %19, %cst_18 [1] : vector<1x128xf32> to vector<1xf32>
    %23 = vector.shape_cast %22 : vector<1xf32> to vector<1x1xf32>
    %cst_19 = arith.constant 3.125000e-02 : f32
    %24 = vector.broadcast %cst_19 : f32 to vector<1x1xf32>
    %25 = arith.mulf %23, %24 : vector<1x1xf32>
    %26 = tpu.iota {dimensions = array<i32: 1>} : vector<1x128xi32>
    %c32_i32 = arith.constant 32 : i32
    %27 = vector.broadcast %c32_i32 : i32 to vector<1x128xi32>
    %28 = arith.cmpi slt, %26, %27 : vector<1x128xi32>
    %29 = vector.broadcast %25 : vector<1x1xf32> to vector<1x128xf32>
    %30 = arith.subf %19, %29 : vector<1x128xf32>
    %cst_20 = arith.constant 0.000000e+00 : f32
    %31 = vector.broadcast %cst_20 : f32 to vector<1x128xf32>
    %32 = arith.select %28, %30, %31 : vector<1x128xi1>, vector<1x128xf32>
    %33 = arith.mulf %32, %32 : vector<1x128xf32>
    %cst_21 = arith.constant dense<0.000000e+00> : vector<1xf32>
    %34 = vector.multi_reduction <add>, %33, %cst_21 [1] : vector<1x128xf32> to vector<1xf32>
    %35 = vector.shape_cast %34 : vector<1xf32> to vector<1x1xf32>
    %cst_22 = arith.constant 3.125000e-02 : f32
    %36 = vector.broadcast %cst_22 : f32 to vector<1x1xf32>
    %37 = arith.mulf %35, %36 : vector<1x1xf32>
    %cst_23 = arith.constant 9.99999974E-6 : f32
    %38 = vector.broadcast %cst_23 : f32 to vector<1x1xf32>
    %39 = arith.addf %37, %38 : vector<1x1xf32>
    %40 = math.rsqrt %39 : vector<1x1xf32>
    %41 = vector.broadcast %40 : vector<1x1xf32> to vector<1x128xf32>
    %42 = arith.mulf %32, %41 : vector<1x128xf32>
    %43 = arith.mulf %42, %20 : vector<1x128xf32>
    %44 = arith.addf %43, %21 : vector<1x128xf32>
    %45 = arith.truncf %44 : vector<1x128xf32> to vector<1x128xbf16>
    %c0_24 = arith.constant 0 : index
    %c0_25 = arith.constant 0 : index
    %c0_26 = arith.constant 0 : index
    %46 = vector.load %arg9[%c0_24, %c0_25, %c0_26] : memref<1x1x128xbf16, #tpu.memory_space<vmem>>, vector<1x1x128xbf16>
    %47 = vector.shape_cast %46 : vector<1x1x128xbf16> to vector<1x128xbf16>
    %48 = vector.shape_cast %45 : vector<1x128xbf16> to vector<1x1x128xbf16>
    tpu.vector_store %arg9[%c0_24, %c0_25, %c0_26], %48 {strides = array<i32>} : memref<1x1x128xbf16, #tpu.memory_space<vmem>>, vector<1x1x128xbf16>,
    return
  }
  func.func @transform_0(%arg0: i32) -> (i32, i32, i32) {
    %c0_i32 = arith.constant 0 : i32
    %c0_i32_0 = arith.constant 0 : i32
    %c0_i32_1 = arith.constant 0 : i32
    return %arg0, %c0_i32, %c0_i32_0 : i32, i32, i32
  }
  func.func @transform_1(%arg0: i32) -> (i32, i32, i32) {
    %c0_i32 = arith.constant 0 : i32
    %c0_i32_0 = arith.constant 0 : i32
    %c0_i32_1 = arith.constant 0 : i32
    return %arg0, %c0_i32, %c0_i32_0 : i32, i32, i32
  }
  func.func @transform_2(%arg0: i32) -> (i32, i32) {
    %c0_i32 = arith.constant 0 : i32
    %c0_i32_0 = arith.constant 0 : i32
    %c0_i32_1 = arith.constant 0 : i32
    return %c0_i32, %c0_i32_0 : i32, i32
  }
  func.func @transform_3(%arg0: i32) -> (i32, i32) {
    %c0_i32 = arith.constant 0 : i32
    %c0_i32_0 = arith.constant 0 : i32
    %c0_i32_1 = arith.constant 0 : i32
    return %c0_i32, %c0_i32_0 : i32, i32
  }
  func.func @transform_4(%arg0: i32) -> (i32, i32) {
    %c0_i32 = arith.constant 0 : i32
    %c0_i32_0 = arith.constant 0 : i32
    %c0_i32_1 = arith.constant 0 : i32
    return %c0_i32, %c0_i32_0 : i32, i32
  }
  func.func @transform_5(%arg0: i32) -> (i32, i32) {
    %c0_i32 = arith.constant 0 : i32
    %c0_i32_0 = arith.constant 0 : i32
    %c0_i32_1 = arith.constant 0 : i32
    return %c0_i32, %c0_i32_0 : i32, i32
  }
  func.func @transform_6(%arg0: i32) -> (i32, i32) {
    %c0_i32 = arith.constant 0 : i32
    %c0_i32_0 = arith.constant 0 : i32
    %c0_i32_1 = arith.constant 0 : i32
    return %c0_i32, %c0_i32_0 : i32, i32
  }
  func.func @transform_7(%arg0: i32) -> (i32, i32) {
    %c0_i32 = arith.constant 0 : i32
    %c0_i32_0 = arith.constant 0 : i32
    %c0_i32_1 = arith.constant 0 : i32
    return %c0_i32, %c0_i32_0 : i32, i32
  }
  func.func @transform_8(%arg0: i32) -> (i32, i32, i32) {
    %c0_i32 = arith.constant 0 : i32
    %c0_i32_0 = arith.constant 0 : i32
    %c0_i32_1 = arith.constant 0 : i32
    return %arg0, %c0_i32, %c0_i32_0 : i32, i32, i32
  }
}

module attributes {stable_mosaic.version = 11 : i64} {
  func.func @_ln_kernel(%arg0: i32, %arg1: memref<8x128xbf16, #tpu.memory_space<vmem>>, %arg2: memref<1x128xf32, #tpu.memory_space<vmem>>, %arg3: memref<1x128xf32, #tpu.memory_space<vmem>>, %arg4: memref<8x128xbf16, #tpu.memory_space<vmem>>) attributes {dimension_semantics = [#tpu.dimension_semantics<parallel>], iteration_bounds = array<i64: 1>, scalar_prefetch = 0 : i64, scratch_operands = 0 : i64, tpu.core_type = #tpu.core_type<tc>, window_params = [{transform_indices = @transform_0, window_bounds = array<i64: 8, 128>}, {pipeline_mode = #tpu.pipeline_mode<synchronous>, transform_indices = @transform_1, window_bounds = array<i64: 1, 128>}, {pipeline_mode = #tpu.pipeline_mode<synchronous>, transform_indices = @transform_2, window_bounds = array<i64: 1, 128>}, {transform_indices = @transform_3, window_bounds = array<i64: 8, 128>}]} {
    %c0 = arith.constant 0 : index
    %c0_0 = arith.constant 0 : index
    %0 = vector.load %arg1[%c0, %c0_0] : memref<8x128xbf16, #tpu.memory_space<vmem>>, vector<8x128xbf16>
    %1 = arith.extf %0 : vector<8x128xbf16> to vector<8x128xf32>
    %c0_1 = arith.constant 0 : index
    %c0_2 = arith.constant 0 : index
    %2 = vector.load %arg2[%c0_1, %c0_2] : memref<1x128xf32, #tpu.memory_space<vmem>>, vector<1x128xf32>
    %c0_3 = arith.constant 0 : index
    %c0_4 = arith.constant 0 : index
    %3 = vector.load %arg3[%c0_3, %c0_4] : memref<1x128xf32, #tpu.memory_space<vmem>>, vector<1x128xf32>
    %cst = arith.constant dense<0.000000e+00> : vector<8xf32>
    %4 = vector.multi_reduction <add>, %1, %cst [1] : vector<8x128xf32> to vector<8xf32>
    %5 = vector.shape_cast %4 : vector<8xf32> to vector<8x1xf32>
    %cst_5 = arith.constant 3.125000e-02 : f32
    %6 = vector.broadcast %cst_5 : f32 to vector<8x1xf32>
    %7 = arith.mulf %5, %6 : vector<8x1xf32>
    %8 = tpu.iota {dimensions = array<i32: 1>} : vector<8x128xi32>
    %c32_i32 = arith.constant 32 : i32
    %9 = vector.broadcast %c32_i32 : i32 to vector<8x128xi32>
    %10 = arith.cmpi slt, %8, %9 : vector<8x128xi32>
    %11 = vector.broadcast %7 : vector<8x1xf32> to vector<8x128xf32>
    %12 = arith.subf %1, %11 : vector<8x128xf32>
    %cst_6 = arith.constant 0.000000e+00 : f32
    %13 = vector.broadcast %cst_6 : f32 to vector<8x128xf32>
    %14 = arith.select %10, %12, %13 : vector<8x128xi1>, vector<8x128xf32>
    %15 = arith.mulf %14, %14 : vector<8x128xf32>
    %cst_7 = arith.constant dense<0.000000e+00> : vector<8xf32>
    %16 = vector.multi_reduction <add>, %15, %cst_7 [1] : vector<8x128xf32> to vector<8xf32>
    %17 = vector.shape_cast %16 : vector<8xf32> to vector<8x1xf32>
    %cst_8 = arith.constant 3.125000e-02 : f32
    %18 = vector.broadcast %cst_8 : f32 to vector<8x1xf32>
    %19 = arith.mulf %17, %18 : vector<8x1xf32>
    %cst_9 = arith.constant 9.99999974E-6 : f32
    %20 = vector.broadcast %cst_9 : f32 to vector<8x1xf32>
    %21 = arith.addf %19, %20 : vector<8x1xf32>
    %22 = math.rsqrt %21 : vector<8x1xf32>
    %23 = vector.broadcast %22 : vector<8x1xf32> to vector<8x128xf32>
    %24 = arith.mulf %14, %23 : vector<8x128xf32>
    %25 = vector.broadcast %2 : vector<1x128xf32> to vector<8x128xf32>
    %26 = arith.mulf %24, %25 : vector<8x128xf32>
    %27 = vector.broadcast %3 : vector<1x128xf32> to vector<8x128xf32>
    %28 = arith.addf %26, %27 : vector<8x128xf32>
    %29 = arith.truncf %28 : vector<8x128xf32> to vector<8x128xbf16>
    %c0_10 = arith.constant 0 : index
    %c0_11 = arith.constant 0 : index
    %30 = vector.load %arg4[%c0_10, %c0_11] : memref<8x128xbf16, #tpu.memory_space<vmem>>, vector<8x128xbf16>
    tpu.vector_store %arg4[%c0_10, %c0_11], %29 {strides = array<i32>} : memref<8x128xbf16, #tpu.memory_space<vmem>>, vector<8x128xbf16>,
    return
  }
  func.func @transform_0(%arg0: i32) -> (i32, i32) {
    %c0_i32 = arith.constant 0 : i32
    %c0_i32_0 = arith.constant 0 : i32
    return %arg0, %c0_i32 : i32, i32
  }
  func.func @transform_1(%arg0: i32) -> (i32, i32) {
    %c0_i32 = arith.constant 0 : i32
    %c0_i32_0 = arith.constant 0 : i32
    %c0_i32_1 = arith.constant 0 : i32
    return %c0_i32, %c0_i32_0 : i32, i32
  }
  func.func @transform_2(%arg0: i32) -> (i32, i32) {
    %c0_i32 = arith.constant 0 : i32
    %c0_i32_0 = arith.constant 0 : i32
    %c0_i32_1 = arith.constant 0 : i32
    return %c0_i32, %c0_i32_0 : i32, i32
  }
  func.func @transform_3(%arg0: i32) -> (i32, i32) {
    %c0_i32 = arith.constant 0 : i32
    %c0_i32_0 = arith.constant 0 : i32
    return %arg0, %c0_i32 : i32, i32
  }
}

module attributes {stable_mosaic.version = 11 : i64} {
  func.func @_single_key_attn_ln_kernel(%arg0: i32, %arg1: memref<1x8x128xbf16, #tpu.memory_space<vmem>>, %arg2: memref<1x1x128xbf16, #tpu.memory_space<vmem>>, %arg3: memref<128x128xbf16, #tpu.memory_space<vmem>>, %arg4: memref<1x128xf32, #tpu.memory_space<vmem>>, %arg5: memref<128x128xbf16, #tpu.memory_space<vmem>>, %arg6: memref<1x128xf32, #tpu.memory_space<vmem>>, %arg7: memref<1x128xf32, #tpu.memory_space<vmem>>, %arg8: memref<1x128xf32, #tpu.memory_space<vmem>>, %arg9: memref<1x8x128xbf16, #tpu.memory_space<vmem>>) attributes {dimension_semantics = [#tpu.dimension_semantics<parallel>], iteration_bounds = array<i64: 2>, scalar_prefetch = 0 : i64, scratch_operands = 0 : i64, tpu.core_type = #tpu.core_type<tc>, window_params = [{transform_indices = @transform_0, window_bounds = array<i64: 1, 8, 128>}, {transform_indices = @transform_1, window_bounds = array<i64: 1, 1, 128>}, {pipeline_mode = #tpu.pipeline_mode<synchronous>, transform_indices = @transform_2, window_bounds = array<i64: 128, 128>}, {pipeline_mode = #tpu.pipeline_mode<synchronous>, transform_indices = @transform_3, window_bounds = array<i64: 1, 128>}, {pipeline_mode = #tpu.pipeline_mode<synchronous>, transform_indices = @transform_4, window_bounds = array<i64: 128, 128>}, {pipeline_mode = #tpu.pipeline_mode<synchronous>, transform_indices = @transform_5, window_bounds = array<i64: 1, 128>}, {pipeline_mode = #tpu.pipeline_mode<synchronous>, transform_indices = @transform_6, window_bounds = array<i64: 1, 128>}, {pipeline_mode = #tpu.pipeline_mode<synchronous>, transform_indices = @transform_7, window_bounds = array<i64: 1, 128>}, {transform_indices = @transform_8, window_bounds = array<i64: 1, 8, 128>}]} {
    %c0 = arith.constant 0 : index
    %c0_0 = arith.constant 0 : index
    %c0_1 = arith.constant 0 : index
    %0 = vector.load %arg1[%c0, %c0_0, %c0_1] : memref<1x8x128xbf16, #tpu.memory_space<vmem>>, vector<1x8x128xbf16>
    %1 = vector.shape_cast %0 : vector<1x8x128xbf16> to vector<8x128xbf16>
    %2 = arith.extf %1 : vector<8x128xbf16> to vector<8x128xf32>
    %c0_2 = arith.constant 0 : index
    %c0_3 = arith.constant 0 : index
    %c0_4 = arith.constant 0 : index
    %3 = vector.load %arg2[%c0_2, %c0_3, %c0_4] : memref<1x1x128xbf16, #tpu.memory_space<vmem>>, vector<1x1x128xbf16>
    %4 = vector.shape_cast %3 : vector<1x1x128xbf16> to vector<1x128xbf16>
    %5 = vector.shape_cast %4 : vector<1x128xbf16> to vector<1x128xbf16>
    %6 = vector.broadcast %5 : vector<1x128xbf16> to vector<8x128xbf16>
    %c0_5 = arith.constant 0 : index
    %c0_6 = arith.constant 0 : index
    %7 = vector.load %arg3[%c0_5, %c0_6] : memref<128x128xbf16, #tpu.memory_space<vmem>>, vector<128x128xbf16>
    %cst = arith.constant dense<0.000000e+00> : vector<8x128xf32>
    %8 = tpu.matmul %6, %7, %cst {dimension_numbers = #tpu.dot_dimension_numbers<[1], [0], [0], [1], [0, 0, 1, 1], [], []>} : vector<8x128xbf16>, vector<128x128xbf16>, vector<8x128xf32> -> vector<8x128xf32>
    %c0_7 = arith.constant 0 : index
    %c0_8 = arith.constant 0 : index
    %9 = vector.load %arg4[%c0_7, %c0_8] : memref<1x128xf32, #tpu.memory_space<vmem>>, vector<1x128xf32>
    %10 = vector.broadcast %9 : vector<1x128xf32> to vector<8x128xf32>
    %11 = arith.addf %8, %10 : vector<8x128xf32>
    %12 = arith.truncf %11 : vector<8x128xf32> to vector<8x128xbf16>
    %c0_9 = arith.constant 0 : index
    %c0_10 = arith.constant 0 : index
    %13 = vector.load %arg5[%c0_9, %c0_10] : memref<128x128xbf16, #tpu.memory_space<vmem>>, vector<128x128xbf16>
    %cst_11 = arith.constant dense<0.000000e+00> : vector<8x128xf32>
    %14 = tpu.matmul %12, %13, %cst_11 {dimension_numbers = #tpu.dot_dimension_numbers<[1], [0], [0], [1], [0, 0, 1, 1], [], []>} : vector<8x128xbf16>, vector<128x128xbf16>, vector<8x128xf32> -> vector<8x128xf32>
    %c0_12 = arith.constant 0 : index
    %c0_13 = arith.constant 0 : index
    %15 = vector.load %arg6[%c0_12, %c0_13] : memref<1x128xf32, #tpu.memory_space<vmem>>, vector<1x128xf32>
    %16 = vector.broadcast %15 : vector<1x128xf32> to vector<8x128xf32>
    %17 = arith.addf %14, %16 : vector<8x128xf32>
    %18 = vector.extract_strided_slice %17 {offsets = [0, 0], sizes = [1, 128], strides = [1, 1]} : vector<8x128xf32> to vector<1x128xf32>
    %19 = vector.broadcast %18 : vector<1x128xf32> to vector<8x128xf32>
    %20 = arith.addf %2, %19 : vector<8x128xf32>
    %c0_14 = arith.constant 0 : index
    %c0_15 = arith.constant 0 : index
    %21 = vector.load %arg7[%c0_14, %c0_15] : memref<1x128xf32, #tpu.memory_space<vmem>>, vector<1x128xf32>
    %c0_16 = arith.constant 0 : index
    %c0_17 = arith.constant 0 : index
    %22 = vector.load %arg8[%c0_16, %c0_17] : memref<1x128xf32, #tpu.memory_space<vmem>>, vector<1x128xf32>
    %cst_18 = arith.constant dense<0.000000e+00> : vector<8xf32>
    %23 = vector.multi_reduction <add>, %20, %cst_18 [1] : vector<8x128xf32> to vector<8xf32>
    %24 = vector.shape_cast %23 : vector<8xf32> to vector<8x1xf32>
    %cst_19 = arith.constant 3.125000e-02 : f32
    %25 = vector.broadcast %cst_19 : f32 to vector<8x1xf32>
    %26 = arith.mulf %24, %25 : vector<8x1xf32>
    %27 = tpu.iota {dimensions = array<i32: 1>} : vector<8x128xi32>
    %c32_i32 = arith.constant 32 : i32
    %28 = vector.broadcast %c32_i32 : i32 to vector<8x128xi32>
    %29 = arith.cmpi slt, %27, %28 : vector<8x128xi32>
    %30 = vector.broadcast %26 : vector<8x1xf32> to vector<8x128xf32>
    %31 = arith.subf %20, %30 : vector<8x128xf32>
    %cst_20 = arith.constant 0.000000e+00 : f32
    %32 = vector.broadcast %cst_20 : f32 to vector<8x128xf32>
    %33 = arith.select %29, %31, %32 : vector<8x128xi1>, vector<8x128xf32>
    %34 = arith.mulf %33, %33 : vector<8x128xf32>
    %cst_21 = arith.constant dense<0.000000e+00> : vector<8xf32>
    %35 = vector.multi_reduction <add>, %34, %cst_21 [1] : vector<8x128xf32> to vector<8xf32>
    %36 = vector.shape_cast %35 : vector<8xf32> to vector<8x1xf32>
    %cst_22 = arith.constant 3.125000e-02 : f32
    %37 = vector.broadcast %cst_22 : f32 to vector<8x1xf32>
    %38 = arith.mulf %36, %37 : vector<8x1xf32>
    %cst_23 = arith.constant 9.99999974E-6 : f32
    %39 = vector.broadcast %cst_23 : f32 to vector<8x1xf32>
    %40 = arith.addf %38, %39 : vector<8x1xf32>
    %41 = math.rsqrt %40 : vector<8x1xf32>
    %42 = vector.broadcast %41 : vector<8x1xf32> to vector<8x128xf32>
    %43 = arith.mulf %33, %42 : vector<8x128xf32>
    %44 = vector.broadcast %21 : vector<1x128xf32> to vector<8x128xf32>
    %45 = arith.mulf %43, %44 : vector<8x128xf32>
    %46 = vector.broadcast %22 : vector<1x128xf32> to vector<8x128xf32>
    %47 = arith.addf %45, %46 : vector<8x128xf32>
    %48 = arith.truncf %47 : vector<8x128xf32> to vector<8x128xbf16>
    %c0_24 = arith.constant 0 : index
    %c0_25 = arith.constant 0 : index
    %c0_26 = arith.constant 0 : index
    %49 = vector.load %arg9[%c0_24, %c0_25, %c0_26] : memref<1x8x128xbf16, #tpu.memory_space<vmem>>, vector<1x8x128xbf16>
    %50 = vector.shape_cast %49 : vector<1x8x128xbf16> to vector<8x128xbf16>
    %51 = vector.shape_cast %48 : vector<8x128xbf16> to vector<1x8x128xbf16>
    tpu.vector_store %arg9[%c0_24, %c0_25, %c0_26], %51 {strides = array<i32>} : memref<1x8x128xbf16, #tpu.memory_space<vmem>>, vector<1x8x128xbf16>,
    return
  }
  func.func @transform_0(%arg0: i32) -> (i32, i32, i32) {
    %c0_i32 = arith.constant 0 : i32
    %c0_i32_0 = arith.constant 0 : i32
    %c0_i32_1 = arith.constant 0 : i32
    return %arg0, %c0_i32, %c0_i32_0 : i32, i32, i32
  }
  func.func @transform_1(%arg0: i32) -> (i32, i32, i32) {
    %c0_i32 = arith.constant 0 : i32
    %c0_i32_0 = arith.constant 0 : i32
    %c0_i32_1 = arith.constant 0 : i32
    return %arg0, %c0_i32, %c0_i32_0 : i32, i32, i32
  }
  func.func @transform_2(%arg0: i32) -> (i32, i32) {
    %c0_i32 = arith.constant 0 : i32
    %c0_i32_0 = arith.constant 0 : i32
    %c0_i32_1 = arith.constant 0 : i32
    return %c0_i32, %c0_i32_0 : i32, i32
  }
  func.func @transform_3(%arg0: i32) -> (i32, i32) {
    %c0_i32 = arith.constant 0 : i32
    %c0_i32_0 = arith.constant 0 : i32
    %c0_i32_1 = arith.constant 0 : i32
    return %c0_i32, %c0_i32_0 : i32, i32
  }
  func.func @transform_4(%arg0: i32) -> (i32, i32) {
    %c0_i32 = arith.constant 0 : i32
    %c0_i32_0 = arith.constant 0 : i32
    %c0_i32_1 = arith.constant 0 : i32
    return %c0_i32, %c0_i32_0 : i32, i32
  }
  func.func @transform_5(%arg0: i32) -> (i32, i32) {
    %c0_i32 = arith.constant 0 : i32
    %c0_i32_0 = arith.constant 0 : i32
    %c0_i32_1 = arith.constant 0 : i32
    return %c0_i32, %c0_i32_0 : i32, i32
  }
  func.func @transform_6(%arg0: i32) -> (i32, i32) {
    %c0_i32 = arith.constant 0 : i32
    %c0_i32_0 = arith.constant 0 : i32
    %c0_i32_1 = arith.constant 0 : i32
    return %c0_i32, %c0_i32_0 : i32, i32
  }
  func.func @transform_7(%arg0: i32) -> (i32, i32) {
    %c0_i32 = arith.constant 0 : i32
    %c0_i32_0 = arith.constant 0 : i32
    %c0_i32_1 = arith.constant 0 : i32
    return %c0_i32, %c0_i32_0 : i32, i32
  }
  func.func @transform_8(%arg0: i32) -> (i32, i32, i32) {
    %c0_i32 = arith.constant 0 : i32
    %c0_i32_0 = arith.constant 0 : i32
    %c0_i32_1 = arith.constant 0 : i32
    return %arg0, %c0_i32, %c0_i32_0 : i32, i32, i32
  }
}

module attributes {stable_mosaic.version = 11 : i64} {
  func.func @_matmul_kernel(%arg0: i32, %arg1: i32, %arg2: i32, %arg3: memref<16x128xbf16, #tpu.memory_space<vmem>>, %arg4: memref<128x128xbf16, #tpu.memory_space<vmem>>, %arg5: memref<1x128xf32, #tpu.memory_space<vmem>>, %arg6: memref<16x128xf32, #tpu.memory_space<vmem>>, %arg7: memref<16x128xf32, #tpu.memory_space<vmem>>) attributes {dimension_semantics = [#tpu.dimension_semantics<parallel>, #tpu.dimension_semantics<parallel>, #tpu.dimension_semantics<arbitrary>], iteration_bounds = array<i64: 1, 1, 1>, scalar_prefetch = 0 : i64, scratch_operands = 1 : i64, tpu.core_type = #tpu.core_type<tc>, window_params = [{transform_indices = @transform_0, window_bounds = array<i64: 16, 128>}, {transform_indices = @transform_1, window_bounds = array<i64: 128, 128>}, {transform_indices = @transform_2, window_bounds = array<i64: 1, 128>}, {transform_indices = @transform_3, window_bounds = array<i64: 16, 128>}]} {
    %c0_i32 = arith.constant 0 : i32
    %0 = arith.cmpi eq, %arg2, %c0_i32 : i32
    %1 = arith.extui %0 : i1 to i32
    %c0_i32_0 = arith.constant 0 : i32
    %2 = arith.cmpi ne, %1, %c0_i32_0 : i32
    scf.if %2 {
      %cst_10 = arith.constant 0.000000e+00 : f32
      %12 = vector.broadcast %cst_10 : f32 to vector<16x128xf32>
      %c0_11 = arith.constant 0 : index
      %c0_12 = arith.constant 0 : index
      %13 = vector.load %arg7[%c0_11, %c0_12] : memref<16x128xf32, #tpu.memory_space<vmem>>, vector<16x128xf32>
      tpu.vector_store %arg7[%c0_11, %c0_12], %12 {strides = array<i32>} : memref<16x128xf32, #tpu.memory_space<vmem>>, vector<16x128xf32>,
    } else {
    }
    %c0 = arith.constant 0 : index
    %c0_1 = arith.constant 0 : index
    %3 = vector.load %arg7[%c0, %c0_1] : memref<16x128xf32, #tpu.memory_space<vmem>>, vector<16x128xf32>
    %c0_2 = arith.constant 0 : index
    %c0_3 = arith.constant 0 : index
    %4 = vector.load %arg3[%c0_2, %c0_3] : memref<16x128xbf16, #tpu.memory_space<vmem>>, vector<16x128xbf16>
    %c0_4 = arith.constant 0 : index
    %c0_5 = arith.constant 0 : index
    %5 = vector.load %arg4[%c0_4, %c0_5] : memref<128x128xbf16, #tpu.memory_space<vmem>>, vector<128x128xbf16>
    %cst = arith.constant dense<0.000000e+00> : vector<16x128xf32>
    %6 = tpu.matmul %4, %5, %cst {dimension_numbers = #tpu.dot_dimension_numbers<[1], [0], [0], [1], [0, 0, 1, 1], [], []>} : vector<16x128xbf16>, vector<128x128xbf16>, vector<16x128xf32> -> vector<16x128xf32>
    %7 = arith.addf %3, %6 : vector<16x128xf32>
    %c0_6 = arith.constant 0 : index
    %c0_7 = arith.constant 0 : index
    %8 = vector.load %arg7[%c0_6, %c0_7] : memref<16x128xf32, #tpu.memory_space<vmem>>, vector<16x128xf32>
    tpu.vector_store %arg7[%c0_6, %c0_7], %7 {strides = array<i32>} : memref<16x128xf32, #tpu.memory_space<vmem>>, vector<16x128xf32>,
    %c0_i32_8 = arith.constant 0 : i32
    %9 = arith.cmpi eq, %arg2, %c0_i32_8 : i32
    %10 = arith.extui %9 : i1 to i32
    %c0_i32_9 = arith.constant 0 : i32
    %11 = arith.cmpi ne, %10, %c0_i32_9 : i32
    scf.if %11 {
      %c0_10 = arith.constant 0 : index
      %c0_11 = arith.constant 0 : index
      %12 = vector.load %arg7[%c0_10, %c0_11] : memref<16x128xf32, #tpu.memory_space<vmem>>, vector<16x128xf32>
      %c0_12 = arith.constant 0 : index
      %c0_13 = arith.constant 0 : index
      %13 = vector.load %arg5[%c0_12, %c0_13] : memref<1x128xf32, #tpu.memory_space<vmem>>, vector<1x128xf32>
      %14 = vector.broadcast %13 : vector<1x128xf32> to vector<16x128xf32>
      %15 = arith.addf %12, %14 : vector<16x128xf32>
      %c0_14 = arith.constant 0 : index
      %c0_15 = arith.constant 0 : index
      %16 = vector.load %arg6[%c0_14, %c0_15] : memref<16x128xf32, #tpu.memory_space<vmem>>, vector<16x128xf32>
      tpu.vector_store %arg6[%c0_14, %c0_15], %15 {strides = array<i32>} : memref<16x128xf32, #tpu.memory_space<vmem>>, vector<16x128xf32>,
    } else {
    }
    return
  }
  func.func @transform_0(%arg0: i32, %arg1: i32, %arg2: i32) -> (i32, i32) {
    %c0_i32 = arith.constant 0 : i32
    return %arg0, %arg2 : i32, i32
  }
  func.func @transform_1(%arg0: i32, %arg1: i32, %arg2: i32) -> (i32, i32) {
    %c0_i32 = arith.constant 0 : i32
    return %arg2, %arg1 : i32, i32
  }
  func.func @transform_2(%arg0: i32, %arg1: i32, %arg2: i32) -> (i32, i32) {
    %c0_i32 = arith.constant 0 : i32
    %c0_i32_0 = arith.constant 0 : i32
    return %c0_i32, %arg1 : i32, i32
  }
  func.func @transform_3(%arg0: i32, %arg1: i32, %arg2: i32) -> (i32, i32) {
    %c0_i32 = arith.constant 0 : i32
    return %arg0, %arg1 : i32, i32
  }
}

module attributes {stable_mosaic.version = 11 : i64} {
  func.func @_ln_kernel(%arg0: i32, %arg1: memref<16x128xbf16, #tpu.memory_space<vmem>>, %arg2: memref<1x128xf32, #tpu.memory_space<vmem>>, %arg3: memref<1x128xf32, #tpu.memory_space<vmem>>, %arg4: memref<16x128xbf16, #tpu.memory_space<vmem>>) attributes {dimension_semantics = [#tpu.dimension_semantics<parallel>], iteration_bounds = array<i64: 1>, scalar_prefetch = 0 : i64, scratch_operands = 0 : i64, tpu.core_type = #tpu.core_type<tc>, window_params = [{transform_indices = @transform_0, window_bounds = array<i64: 16, 128>}, {pipeline_mode = #tpu.pipeline_mode<synchronous>, transform_indices = @transform_1, window_bounds = array<i64: 1, 128>}, {pipeline_mode = #tpu.pipeline_mode<synchronous>, transform_indices = @transform_2, window_bounds = array<i64: 1, 128>}, {transform_indices = @transform_3, window_bounds = array<i64: 16, 128>}]} {
    %c0 = arith.constant 0 : index
    %c0_0 = arith.constant 0 : index
    %0 = vector.load %arg1[%c0, %c0_0] : memref<16x128xbf16, #tpu.memory_space<vmem>>, vector<16x128xbf16>
    %1 = arith.extf %0 : vector<16x128xbf16> to vector<16x128xf32>
    %c0_1 = arith.constant 0 : index
    %c0_2 = arith.constant 0 : index
    %2 = vector.load %arg2[%c0_1, %c0_2] : memref<1x128xf32, #tpu.memory_space<vmem>>, vector<1x128xf32>
    %c0_3 = arith.constant 0 : index
    %c0_4 = arith.constant 0 : index
    %3 = vector.load %arg3[%c0_3, %c0_4] : memref<1x128xf32, #tpu.memory_space<vmem>>, vector<1x128xf32>
    %cst = arith.constant dense<0.000000e+00> : vector<16xf32>
    %4 = vector.multi_reduction <add>, %1, %cst [1] : vector<16x128xf32> to vector<16xf32>
    %5 = vector.shape_cast %4 : vector<16xf32> to vector<16x1xf32>
    %cst_5 = arith.constant 3.125000e-02 : f32
    %6 = vector.broadcast %cst_5 : f32 to vector<16x1xf32>
    %7 = arith.mulf %5, %6 : vector<16x1xf32>
    %8 = tpu.iota {dimensions = array<i32: 1>} : vector<16x128xi32>
    %c32_i32 = arith.constant 32 : i32
    %9 = vector.broadcast %c32_i32 : i32 to vector<16x128xi32>
    %10 = arith.cmpi slt, %8, %9 : vector<16x128xi32>
    %11 = vector.broadcast %7 : vector<16x1xf32> to vector<16x128xf32>
    %12 = arith.subf %1, %11 : vector<16x128xf32>
    %cst_6 = arith.constant 0.000000e+00 : f32
    %13 = vector.broadcast %cst_6 : f32 to vector<16x128xf32>
    %14 = arith.select %10, %12, %13 : vector<16x128xi1>, vector<16x128xf32>
    %15 = arith.mulf %14, %14 : vector<16x128xf32>
    %cst_7 = arith.constant dense<0.000000e+00> : vector<16xf32>
    %16 = vector.multi_reduction <add>, %15, %cst_7 [1] : vector<16x128xf32> to vector<16xf32>
    %17 = vector.shape_cast %16 : vector<16xf32> to vector<16x1xf32>
    %cst_8 = arith.constant 3.125000e-02 : f32
    %18 = vector.broadcast %cst_8 : f32 to vector<16x1xf32>
    %19 = arith.mulf %17, %18 : vector<16x1xf32>
    %cst_9 = arith.constant 9.99999974E-6 : f32
    %20 = vector.broadcast %cst_9 : f32 to vector<16x1xf32>
    %21 = arith.addf %19, %20 : vector<16x1xf32>
    %22 = math.rsqrt %21 : vector<16x1xf32>
    %23 = vector.broadcast %22 : vector<16x1xf32> to vector<16x128xf32>
    %24 = arith.mulf %14, %23 : vector<16x128xf32>
    %25 = vector.broadcast %2 : vector<1x128xf32> to vector<16x128xf32>
    %26 = arith.mulf %24, %25 : vector<16x128xf32>
    %27 = vector.broadcast %3 : vector<1x128xf32> to vector<16x128xf32>
    %28 = arith.addf %26, %27 : vector<16x128xf32>
    %29 = arith.truncf %28 : vector<16x128xf32> to vector<16x128xbf16>
    %c0_10 = arith.constant 0 : index
    %c0_11 = arith.constant 0 : index
    %30 = vector.load %arg4[%c0_10, %c0_11] : memref<16x128xbf16, #tpu.memory_space<vmem>>, vector<16x128xbf16>
    tpu.vector_store %arg4[%c0_10, %c0_11], %29 {strides = array<i32>} : memref<16x128xbf16, #tpu.memory_space<vmem>>, vector<16x128xbf16>,
    return
  }
  func.func @transform_0(%arg0: i32) -> (i32, i32) {
    %c0_i32 = arith.constant 0 : i32
    %c0_i32_0 = arith.constant 0 : i32
    return %arg0, %c0_i32 : i32, i32
  }
  func.func @transform_1(%arg0: i32) -> (i32, i32) {
    %c0_i32 = arith.constant 0 : i32
    %c0_i32_0 = arith.constant 0 : i32
    %c0_i32_1 = arith.constant 0 : i32
    return %c0_i32, %c0_i32_0 : i32, i32
  }
  func.func @transform_2(%arg0: i32) -> (i32, i32) {
    %c0_i32 = arith.constant 0 : i32
    %c0_i32_0 = arith.constant 0 : i32
    %c0_i32_1 = arith.constant 0 : i32
    return %c0_i32, %c0_i32_0 : i32, i32
  }
  func.func @transform_3(%arg0: i32) -> (i32, i32) {
    %c0_i32 = arith.constant 0 : i32
    %c0_i32_0 = arith.constant 0 : i32
    return %arg0, %c0_i32 : i32, i32
  }
}

module attributes {stable_mosaic.version = 11 : i64} {
  func.func @_ffn_ln_kernel(%arg0: i32, %arg1: memref<16x128xbf16, #tpu.memory_space<vmem>>, %arg2: memref<128x128xbf16, #tpu.memory_space<vmem>>, %arg3: memref<1x128xf32, #tpu.memory_space<vmem>>, %arg4: memref<128x128xbf16, #tpu.memory_space<vmem>>, %arg5: memref<1x128xf32, #tpu.memory_space<vmem>>, %arg6: memref<1x128xf32, #tpu.memory_space<vmem>>, %arg7: memref<1x128xf32, #tpu.memory_space<vmem>>, %arg8: memref<16x128xbf16, #tpu.memory_space<vmem>>) attributes {dimension_semantics = [#tpu.dimension_semantics<parallel>], iteration_bounds = array<i64: 1>, scalar_prefetch = 0 : i64, scratch_operands = 0 : i64, tpu.core_type = #tpu.core_type<tc>, window_params = [{transform_indices = @transform_0, window_bounds = array<i64: 16, 128>}, {pipeline_mode = #tpu.pipeline_mode<synchronous>, transform_indices = @transform_1, window_bounds = array<i64: 128, 128>}, {pipeline_mode = #tpu.pipeline_mode<synchronous>, transform_indices = @transform_2, window_bounds = array<i64: 1, 128>}, {pipeline_mode = #tpu.pipeline_mode<synchronous>, transform_indices = @transform_3, window_bounds = array<i64: 128, 128>}, {pipeline_mode = #tpu.pipeline_mode<synchronous>, transform_indices = @transform_4, window_bounds = array<i64: 1, 128>}, {pipeline_mode = #tpu.pipeline_mode<synchronous>, transform_indices = @transform_5, window_bounds = array<i64: 1, 128>}, {pipeline_mode = #tpu.pipeline_mode<synchronous>, transform_indices = @transform_6, window_bounds = array<i64: 1, 128>}, {transform_indices = @transform_7, window_bounds = array<i64: 16, 128>}]} {
    %c0 = arith.constant 0 : index
    %c0_0 = arith.constant 0 : index
    %0 = vector.load %arg1[%c0, %c0_0] : memref<16x128xbf16, #tpu.memory_space<vmem>>, vector<16x128xbf16>
    %c0_1 = arith.constant 0 : index
    %c0_2 = arith.constant 0 : index
    %1 = vector.load %arg2[%c0_1, %c0_2] : memref<128x128xbf16, #tpu.memory_space<vmem>>, vector<128x128xbf16>
    %cst = arith.constant dense<0.000000e+00> : vector<16x128xf32>
    %2 = tpu.matmul %0, %1, %cst {dimension_numbers = #tpu.dot_dimension_numbers<[1], [0], [0], [1], [0, 0, 1, 1], [], []>} : vector<16x128xbf16>, vector<128x128xbf16>, vector<16x128xf32> -> vector<16x128xf32>
    %c0_3 = arith.constant 0 : index
    %c0_4 = arith.constant 0 : index
    %3 = vector.load %arg3[%c0_3, %c0_4] : memref<1x128xf32, #tpu.memory_space<vmem>>, vector<1x128xf32>
    %4 = vector.broadcast %3 : vector<1x128xf32> to vector<16x128xf32>
    %5 = arith.addf %2, %4 : vector<16x128xf32>
    %cst_5 = arith.constant 5.000000e-01 : f32
    %6 = vector.broadcast %cst_5 : f32 to vector<16x128xf32>
    %7 = arith.mulf %6, %5 : vector<16x128xf32>
    %cst_6 = arith.constant 0.707106769 : f32
    %8 = vector.broadcast %cst_6 : f32 to vector<16x128xf32>
    %9 = arith.mulf %5, %8 : vector<16x128xf32>
    %10 = math.absf %9 : vector<16x128xf32>
    %cst_7 = arith.constant 0.327591091 : f32
    %11 = vector.broadcast %cst_7 : f32 to vector<16x128xf32>
    %12 = arith.mulf %11, %10 : vector<16x128xf32>
    %cst_8 = arith.constant 1.000000e+00 : f32
    %13 = vector.broadcast %cst_8 : f32 to vector<16x128xf32>
    %14 = arith.addf %13, %12 : vector<16x128xf32>
    %cst_9 = arith.constant 1.000000e+00 : f32
    %15 = vector.broadcast %cst_9 : f32 to vector<16x128xf32>
    %16 = arith.divf %15, %14 : vector<16x128xf32>
    %cst_10 = arith.constant 1.06140542 : f32
    %17 = vector.broadcast %cst_10 : f32 to vector<16x128xf32>
    %18 = arith.mulf %17, %16 : vector<16x128xf32>
    %cst_11 = arith.constant -1.45315206 : f32
    %19 = vector.broadcast %cst_11 : f32 to vector<16x128xf32>
    %20 = arith.addf %18, %19 : vector<16x128xf32>
    %21 = arith.mulf %20, %16 : vector<16x128xf32>
    %cst_12 = arith.constant 1.42141378 : f32
    %22 = vector.broadcast %cst_12 : f32 to vector<16x128xf32>
    %23 = arith.addf %21, %22 : vector<16x128xf32>
    %24 = arith.mulf %23, %16 : vector<16x128xf32>
    %cst_13 = arith.constant -0.284496725 : f32
    %25 = vector.broadcast %cst_13 : f32 to vector<16x128xf32>
    %26 = arith.addf %24, %25 : vector<16x128xf32>
    %27 = arith.mulf %26, %16 : vector<16x128xf32>
    %cst_14 = arith.constant 0.254829586 : f32
    %28 = vector.broadcast %cst_14 : f32 to vector<16x128xf32>
    %29 = arith.addf %27, %28 : vector<16x128xf32>
    %30 = arith.mulf %29, %16 : vector<16x128xf32>
    %cst_15 = arith.constant 0.000000e+00 : f32
    %31 = vector.broadcast %cst_15 : f32 to vector<16x128xf32>
    %32 = arith.subf %31, %10 : vector<16x128xf32>
    %33 = arith.mulf %32, %10 : vector<16x128xf32>
    %34 = math.exp %33 : vector<16x128xf32>
    %35 = arith.mulf %30, %34 : vector<16x128xf32>
    %cst_16 = arith.constant 1.000000e+00 : f32
    %36 = vector.broadcast %cst_16 : f32 to vector<16x128xf32>
    %37 = arith.subf %36, %35 : vector<16x128xf32>
    %cst_17 = arith.constant 0.000000e+00 : f32
    %38 = vector.broadcast %cst_17 : f32 to vector<16x128xf32>
    %39 = arith.cmpf olt, %9, %38 : vector<16x128xf32>
    %cst_18 = arith.constant 0.000000e+00 : f32
    %40 = vector.broadcast %cst_18 : f32 to vector<16x128xf32>
    %41 = arith.subf %40, %37 : vector<16x128xf32>
    %42 = arith.select %39, %41, %37 : vector<16x128xi1>, vector<16x128xf32>
    %cst_19 = arith.constant 1.000000e+00 : f32
    %43 = vector.broadcast %cst_19 : f32 to vector<16x128xf32>
    %44 = arith.addf %43, %42 : vector<16x128xf32>
    %45 = arith.mulf %7, %44 : vector<16x128xf32>
    %46 = arith.truncf %45 : vector<16x128xf32> to vector<16x128xbf16>
    %c0_20 = arith.constant 0 : index
    %c0_21 = arith.constant 0 : index
    %47 = vector.load %arg4[%c0_20, %c0_21] : memref<128x128xbf16, #tpu.memory_space<vmem>>, vector<128x128xbf16>
    %cst_22 = arith.constant dense<0.000000e+00> : vector<16x128xf32>
    %48 = tpu.matmul %46, %47, %cst_22 {dimension_numbers = #tpu.dot_dimension_numbers<[1], [0], [0], [1], [0, 0, 1, 1], [], []>} : vector<16x128xbf16>, vector<128x128xbf16>, vector<16x128xf32> -> vector<16x128xf32>
    %c0_23 = arith.constant 0 : index
    %c0_24 = arith.constant 0 : index
    %49 = vector.load %arg5[%c0_23, %c0_24] : memref<1x128xf32, #tpu.memory_space<vmem>>, vector<1x128xf32>
    %50 = vector.broadcast %49 : vector<1x128xf32> to vector<16x128xf32>
    %51 = arith.addf %48, %50 : vector<16x128xf32>
    %52 = arith.extf %0 : vector<16x128xbf16> to vector<16x128xf32>
    %53 = arith.addf %51, %52 : vector<16x128xf32>
    %c0_25 = arith.constant 0 : index
    %c0_26 = arith.constant 0 : index
    %54 = vector.load %arg6[%c0_25, %c0_26] : memref<1x128xf32, #tpu.memory_space<vmem>>, vector<1x128xf32>
    %c0_27 = arith.constant 0 : index
    %c0_28 = arith.constant 0 : index
    %55 = vector.load %arg7[%c0_27, %c0_28] : memref<1x128xf32, #tpu.memory_space<vmem>>, vector<1x128xf32>
    %cst_29 = arith.constant dense<0.000000e+00> : vector<16xf32>
    %56 = vector.multi_reduction <add>, %53, %cst_29 [1] : vector<16x128xf32> to vector<16xf32>
    %57 = vector.shape_cast %56 : vector<16xf32> to vector<16x1xf32>
    %cst_30 = arith.constant 3.125000e-02 : f32
    %58 = vector.broadcast %cst_30 : f32 to vector<16x1xf32>
    %59 = arith.mulf %57, %58 : vector<16x1xf32>
    %60 = tpu.iota {dimensions = array<i32: 1>} : vector<16x128xi32>
    %c32_i32 = arith.constant 32 : i32
    %61 = vector.broadcast %c32_i32 : i32 to vector<16x128xi32>
    %62 = arith.cmpi slt, %60, %61 : vector<16x128xi32>
    %63 = vector.broadcast %59 : vector<16x1xf32> to vector<16x128xf32>
    %64 = arith.subf %53, %63 : vector<16x128xf32>
    %cst_31 = arith.constant 0.000000e+00 : f32
    %65 = vector.broadcast %cst_31 : f32 to vector<16x128xf32>
    %66 = arith.select %62, %64, %65 : vector<16x128xi1>, vector<16x128xf32>
    %67 = arith.mulf %66, %66 : vector<16x128xf32>
    %cst_32 = arith.constant dense<0.000000e+00> : vector<16xf32>
    %68 = vector.multi_reduction <add>, %67, %cst_32 [1] : vector<16x128xf32> to vector<16xf32>
    %69 = vector.shape_cast %68 : vector<16xf32> to vector<16x1xf32>
    %cst_33 = arith.constant 3.125000e-02 : f32
    %70 = vector.broadcast %cst_33 : f32 to vector<16x1xf32>
    %71 = arith.mulf %69, %70 : vector<16x1xf32>
    %cst_34 = arith.constant 9.99999974E-6 : f32
    %72 = vector.broadcast %cst_34 : f32 to vector<16x1xf32>
    %73 = arith.addf %71, %72 : vector<16x1xf32>
    %74 = math.rsqrt %73 : vector<16x1xf32>
    %75 = vector.broadcast %74 : vector<16x1xf32> to vector<16x128xf32>
    %76 = arith.mulf %66, %75 : vector<16x128xf32>
    %77 = vector.broadcast %54 : vector<1x128xf32> to vector<16x128xf32>
    %78 = arith.mulf %76, %77 : vector<16x128xf32>
    %79 = vector.broadcast %55 : vector<1x128xf32> to vector<16x128xf32>
    %80 = arith.addf %78, %79 : vector<16x128xf32>
    %81 = arith.truncf %80 : vector<16x128xf32> to vector<16x128xbf16>
    %c0_35 = arith.constant 0 : index
    %c0_36 = arith.constant 0 : index
    %82 = vector.load %arg8[%c0_35, %c0_36] : memref<16x128xbf16, #tpu.memory_space<vmem>>, vector<16x128xbf16>
    tpu.vector_store %arg8[%c0_35, %c0_36], %81 {strides = array<i32>} : memref<16x128xbf16, #tpu.memory_space<vmem>>, vector<16x128xbf16>,
    return
  }
  func.func @transform_0(%arg0: i32) -> (i32, i32) {
    %c0_i32 = arith.constant 0 : i32
    %c0_i32_0 = arith.constant 0 : i32
    return %arg0, %c0_i32 : i32, i32
  }
  func.func @transform_1(%arg0: i32) -> (i32, i32) {
    %c0_i32 = arith.constant 0 : i32
    %c0_i32_0 = arith.constant 0 : i32
    %c0_i32_1 = arith.constant 0 : i32
    return %c0_i32, %c0_i32_0 : i32, i32
  }
  func.func @transform_2(%arg0: i32) -> (i32, i32) {
    %c0_i32 = arith.constant 0 : i32
    %c0_i32_0 = arith.constant 0 : i32
    %c0_i32_1 = arith.constant 0 : i32
    return %c0_i32, %c0_i32_0 : i32, i32
  }
  func.func @transform_3(%arg0: i32) -> (i32, i32) {
    %c0_i32 = arith.constant 0 : i32
    %c0_i32_0 = arith.constant 0 : i32
    %c0_i32_1 = arith.constant 0 : i32
    return %c0_i32, %c0_i32_0 : i32, i32
  }
  func.func @transform_4(%arg0: i32) -> (i32, i32) {
    %c0_i32 = arith.constant 0 : i32
    %c0_i32_0 = arith.constant 0 : i32
    %c0_i32_1 = arith.constant 0 : i32
    return %c0_i32, %c0_i32_0 : i32, i32
  }
  func.func @transform_5(%arg0: i32) -> (i32, i32) {
    %c0_i32 = arith.constant 0 : i32
    %c0_i32_0 = arith.constant 0 : i32
    %c0_i32_1 = arith.constant 0 : i32
    return %c0_i32, %c0_i32_0 : i32, i32
  }
  func.func @transform_6(%arg0: i32) -> (i32, i32) {
    %c0_i32 = arith.constant 0 : i32
    %c0_i32_0 = arith.constant 0 : i32
    %c0_i32_1 = arith.constant 0 : i32
    return %c0_i32, %c0_i32_0 : i32, i32
  }
  func.func @transform_7(%arg0: i32) -> (i32, i32) {
    %c0_i32 = arith.constant 0 : i32
    %c0_i32_0 = arith.constant 0 : i32
    return %arg0, %c0_i32 : i32, i32
  }
}

</mosaic_0001>

<llo_original>
// kernel: lpg_transformer_forward.14
$region0: #{lpg_transformer_forward.14}
  #allocation0 [shape = 'u32[]', space=smem, size = 0x4, offset = 0x4, fixed_abs, tag = 'smem constant byte address 0x4 - core index']
  #allocation1 [shape = 'u32[144,128]{1,0:T(1,128)}', space=vmem, size = 0x12000, scoped, tag = 'internal scratch']
  #allocation2 [shape = 'f32[8,128]{1,0:T(8,128)}', space=vmem, size = 0x1000, scoped, tag = 'scratch operand']
  %s0 = inlined_call_operand.vmem [shape: bf16[8,128], index: 0, kind: input, shape index: {}]
  %s1 = inlined_call_operand.hbm [shape: bf16[128,128], index: 1, kind: input, shape index: {}]
  %s2 = inlined_call_operand.hbm [shape: f32[1,128], index: 2, kind: input, shape index: {}]
  %s3 = inlined_call_operand.vmem [shape: bf16[8,128], index: 3, kind: output, shape index: {}]
  %s4 = sld [smem:[#allocation0]]
  $region38: #{lpg_transformer_forward.14} parent=0
    _
  %s6 = ssub.s32 1, %s4
  %s7 = scalar_select 0, %s6, %s4
  $region1: #{lpg_transformer_forward.14} parent=0
    #allocation3 [shape = 'u8[32768]{0}', space=vmem, size = 0x8000, scoped, tag = 'input window, operand 1, single buffered']
    #allocation4 [shape = 's32[1]{0}', space=sflag, size = 0x4, scoped, tag = 'scoped memory for lpg_transformer_forward.14']
    #allocation5 [shape = 'u8[512]{0}', space=vmem, size = 0x400, scoped, tag = 'input window, operand 2, single buffered']
    #allocation6 [shape = 's32[1]{0}', space=sflag, size = 0x4, scoped, tag = 'scoped memory for lpg_transformer_forward.14']
    %8 = vsyncpa [#allocation4], 0
    %9 = vsyncpa [#allocation6], 0
    // Predicated region
    $region2: #{lpg_transformer_forward.14} parent=1 // pred_check
      _
    $region3: #{lpg_transformer_forward.14} parent=1 // pred_check_branch
      %11 = sbr.rel (0) target = $region5
    $region4: #{lpg_transformer_forward.14} parent=1 // pred_region
      _
    $region5: #{lpg_transformer_forward.14} parent=1 // pred_fallthru
      _
    // Predicated region
    $region6: #{lpg_transformer_forward.14} parent=1 // pred_check
      _
    $region7: #{lpg_transformer_forward.14} parent=1 // pred_check_branch
      %13 = sbr.rel (0) target = $region9
    $region8: #{lpg_transformer_forward.14} parent=1 // pred_region
      %s15 = ssub.s32 1024, 1024
      %16 = vsyncadd [#allocation4], %s15
      %s17 = sshll.u32 [#allocation3], 4
      %s18 = int_to_ptr.vmem [resolvable:$true] %s17
      %23 = dma.hbm_to_vmem [thread:$0]  %s1, 1024, %s18, [#allocation4], 64, 64, 4
    $region9: #{lpg_transformer_forward.14} parent=1 // pred_fallthru
      _
    // Predicated region
    $region10: #{lpg_transformer_forward.14} parent=1 // pred_check
      _
    $region11: #{lpg_transformer_forward.14} parent=1 // pred_check_branch
      %25 = sbr.rel (0) target = $region13
    $region12: #{lpg_transformer_forward.14} parent=1 // pred_region
      %s27 = ssub.s32 16, 16
      %28 = vsyncadd [#allocation6], %s27
      %s30 = sshll.u32 [#allocation5], 4
      %s31 = int_to_ptr.vmem [resolvable:$true] %s30
      %33 = dma.hbm_to_vmem [thread:$0]  %s2, 16, %s31, [#allocation6]
    $region13: #{lpg_transformer_forward.14} parent=1 // pred_fallthru
      _
    // Predicated region
    $region14: #{lpg_transformer_forward.14} parent=1 // pred_check
      _
    $region15: #{lpg_transformer_forward.14} parent=1 // pred_check_branch
      %35 = sbr.rel (0) target = $region17
    $region16: #{lpg_transformer_forward.14} parent=1 // pred_region
      %36 = dma.done [#allocation4], 1024
    $region17: #{lpg_transformer_forward.14} parent=1 // pred_fallthru
      _
    // Predicated region
    $region18: #{lpg_transformer_forward.14} parent=1 // pred_check
      _
    $region19: #{lpg_transformer_forward.14} parent=1 // pred_check_branch
      %38 = sbr.rel (0) target = $region21
    $region20: #{lpg_transformer_forward.14} parent=1 // pred_region
      %39 = dma.done [#allocation6], 16
    $region21: #{lpg_transformer_forward.14} parent=1 // pred_fallthru
      _
    %p41 = scmp.eq.s32.totalorder 0, 0
    // Predicated region
    $region22: #{lpg_transformer_forward.14} parent=1 // pred_check
      %p42 = pneg %p41
    $region23: #{lpg_transformer_forward.14} parent=1 // pred_check_branch
      %44 = sbr.rel (%p42) target = $region25
    $region24: #{lpg_transformer_forward.14} parent=1 // pred_region
      %45 = vst [vmem:[#allocation2] sm:$0xff] 0.0
    $region25: #{lpg_transformer_forward.14} parent=1 // pred_fallthru
      _
    %v46 = vld [vmem:[#allocation2] sm:$0xff]
    %v47 = vld [vmem:[%s0] sm:$0xf]
    %v48 = vld [vmem:[#allocation3] sm:$0xf]
    %v49 = vld [vmem:[#allocation3 + $0x4] sm:$0xf]
    %v50 = vld [vmem:[#allocation3 + $0x8] sm:$0xf]
    %v51 = vld [vmem:[#allocation3 + $0xc] sm:$0xf]
    %v52 = vld [vmem:[#allocation3 + $0x10] sm:$0xf]
    %v53 = vld [vmem:[#allocation3 + $0x14] sm:$0xf]
    %v54 = vld [vmem:[#allocation3 + $0x18] sm:$0xf]
    %v55 = vld [vmem:[#allocation3 + $0x1c] sm:$0xf]
    %v56 = vld [vmem:[#allocation3 + $0x20] sm:$0xf]
    %v57 = vld [vmem:[#allocation3 + $0x24] sm:$0xf]
    %v58 = vld [vmem:[#allocation3 + $0x28] sm:$0xf]
    %v59 = vld [vmem:[#allocation3 + $0x2c] sm:$0xf]
    %v60 = vld [vmem:[#allocation3 + $0x30] sm:$0xf]
    %v61 = vld [vmem:[#allocation3 + $0x34] sm:$0xf]
    %v62 = vld [vmem:[#allocation3 + $0x38] sm:$0xf]
    %v63 = vld [vmem:[#allocation3 + $0x3c] sm:$0xf]
    %v80 = vunpack.c.l.b16 %v48
    %v81 = vunpack.c.l.b16 %v49
    %v82 = vunpack.c.l.b16 %v50
    %v83 = vunpack.c.l.b16 %v51
    %v84 = vunpack.c.l.b16 %v52
    %v85 = vunpack.c.l.b16 %v53
    %v86 = vunpack.c.l.b16 %v54
    %v87 = vunpack.c.l.b16 %v55
    %v88 = vunpack.c.l.b16 %v56
    %v89 = vunpack.c.l.b16 %v57
    %v90 = vunpack.c.l.b16 %v58
    %v91 = vunpack.c.l.b16 %v59
    %v92 = vunpack.c.l.b16 %v60
    %v93 = vunpack.c.l.b16 %v61
    %v94 = vunpack.c.l.b16 %v62
    %v95 = vunpack.c.l.b16 %v63
    %v96 = vpack.c.b16 %v81, %v80
    %v97 = vpack.c.b16 %v83, %v82
    %v98 = vpack.c.b16 %v85, %v84
    %v99 = vpack.c.b16 %v87, %v86
    %v100 = vpack.c.b16 %v89, %v88
    %v101 = vpack.c.b16 %v91, %v90
    %v102 = vpack.c.b16 %v93, %v92
    %v103 = vpack.c.b16 %v95, %v94
    %112 = vmatprep.subr.bf16.mxu0 0
    %113 = vmatpush1.bf16.msra.mxu0 %v103
    %114 = vmatprep.subr.bf16.mxu0 0
    %115 = vmatpush1.bf16.msra.mxu0 %v102
    %116 = vmatprep.subr.bf16.mxu0 0
    %117 = vmatpush1.bf16.msra.mxu0 %v101
    %118 = vmatprep.subr.bf16.mxu0 0
    %119 = vmatpush1.bf16.msra.mxu0 %v100
    %120 = vmatprep.subr.bf16.mxu0 0
    %121 = vmatpush1.bf16.msra.mxu0 %v99
    %122 = vmatprep.subr.bf16.mxu0 0
    %123 = vmatpush1.bf16.msra.mxu0 %v98
    %124 = vmatprep.subr.bf16.mxu0 0
    %125 = vmatpush1.bf16.msra.mxu0 %v97
    %126 = vmatprep.subr.bf16.mxu0 0
    %127 = vmatpush1.bf16.msra.mxu0 %v96
    %128 = vmatprep.subr.bf16.mxu0 0
    %129 = vmatpush2.bf16.msra.mxu0 0
    %130 = vmatprep.subr.bf16.mxu0 0
    %131 = vmatpush2.bf16.msra.mxu0 0
    %132 = vmatprep.subr.bf16.mxu0 0
    %133 = vmatpush2.bf16.msra.mxu0 0
    %134 = vmatprep.subr.bf16.mxu0 0
    %135 = vmatpush2.bf16.msra.mxu0 0
    %136 = vmatprep.subr.bf16.mxu0 0
    %137 = vmatpush2.bf16.msra.mxu0 0
    %138 = vmatprep.subr.bf16.mxu0 0
    %139 = vmatpush2.bf16.msra.mxu0 0
    %140 = vmatprep.subr.bf16.mxu0 0
    %141 = vmatpush2.bf16.msra.mxu0 0
    %142 = vmatprep.subr.bf16.mxu0 0
    %143 = vmatpush2.bf16.msra.mxu0 0
    %144 = vmatprep.mubr.bf16.mxu0 0
    %145 = vmatmul.mubr.bf16.gmra.mxu0 %v47
    %v146 = vpop.f32.mrf.mxu0
    %v147 = vadd.f32 0.0, %v146
    %v148 = vpop.f32.mrf.mxu0
    %v149 = vpop.f32.mrf.mxu0
    %v150 = vpop.f32.mrf.mxu0
    %151 = vdwg.mxu0
    %v152 = vadd.f32 %v46, %v147
    %153 = vst [vmem:[#allocation2] sm:$0xff] %v152
    // Predicated region
    $region26: #{lpg_transformer_forward.14} parent=1 // pred_check
      %p154 = pneg %p41
    $region27: #{lpg_transformer_forward.14} parent=1 // pred_check_branch
      %156 = sbr.rel (%p154) target = $region29
    $region28: #{lpg_transformer_forward.14} parent=1 // pred_region
      %v157 = vld [vmem:[#allocation2] sm:$0xff]
      %v158 = vld [vmem:[#allocation5] sm:$0x1]
      %v160 = vlaneseq
      %v161 = vshrl.u32 %v160, 7
      %v162 = vsub.s32 0, %v161
      %v163 = vrot.slane %v158, %v162
      %v165 = vadd.f32 %v157, %v163
      %v166 = vpack.c.bf16 %v165, %v165
      %167 = vst [vmem:[%s3] sm:$0xf] %v166
    $region29: #{lpg_transformer_forward.14} parent=1 // pred_fallthru
      _
    // Predicated region
    $region30: #{lpg_transformer_forward.14} parent=1 // pred_check
      _
    $region31: #{lpg_transformer_forward.14} parent=1 // pred_check_branch
      %169 = sbr.rel (0) target = $region33
    $region32: #{lpg_transformer_forward.14} parent=1 // pred_region
      _
    $region33: #{lpg_transformer_forward.14} parent=1 // pred_fallthru
      _
    // Predicated region
    $region34: #{lpg_transformer_forward.14} parent=1 // pred_check
      _
    $region35: #{lpg_transformer_forward.14} parent=1 // pred_check_branch
      %171 = sbr.rel (0) target = $region37
    $region36: #{lpg_transformer_forward.14} parent=1 // pred_region
      _
    $region37: #{lpg_transformer_forward.14} parent=1 // pred_fallthru
      _
    %172 = vsyncpa [#allocation4], 1
    %173 = vsyncpa [#allocation6], 1

// kernel: lpg_transformer_forward.16
$region0: #{lpg_transformer_forward.16}
  #allocation0 [shape = 'u32[]', space=smem, size = 0x4, offset = 0x4, fixed_abs, tag = 'smem constant byte address 0x4 - core index']
  #allocation1 [shape = 'u32[144,128]{1,0:T(1,128)}', space=vmem, size = 0x12000, scoped, tag = 'internal scratch']
  %s0 = inlined_call_operand.vmem [shape: bf16[8,128], index: 0, kind: input, shape index: {}]
  %s1 = inlined_call_operand.hbm [shape: bf16[128,128], index: 1, kind: input, shape index: {}]
  %s2 = inlined_call_operand.hbm [shape: f32[1,128], index: 2, kind: input, shape index: {}]
  %s3 = inlined_call_operand.hbm [shape: bf16[128,128], index: 3, kind: input, shape index: {}]
  %s4 = inlined_call_operand.hbm [shape: f32[1,128], index: 4, kind: input, shape index: {}]
  %s5 = inlined_call_operand.hbm [shape: f32[1,128], index: 5, kind: input, shape index: {}]
  %s6 = inlined_call_operand.hbm [shape: f32[1,128], index: 6, kind: input, shape index: {}]
  %s7 = inlined_call_operand.vmem [shape: bf16[8,128], index: 7, kind: output, shape index: {}]
  %s8 = sld [smem:[#allocation0]]
  $region62: #{lpg_transformer_forward.16} parent=0
    _
  %s10 = ssub.s32 1, %s8
  %s11 = scalar_select 0, %s10, %s8
  $region1: #{lpg_transformer_forward.16} parent=0
    #allocation2 [shape = 'u8[32768]{0}', space=vmem, size = 0x8000, scoped, tag = 'input window, operand 1, single buffered']
    #allocation3 [shape = 's32[1]{0}', space=sflag, size = 0x4, scoped, tag = 'scoped memory for lpg_transformer_forward.16']
    #allocation4 [shape = 'u8[512]{0}', space=vmem, size = 0x400, scoped, tag = 'input window, operand 2, single buffered']
    #allocation5 [shape = 's32[1]{0}', space=sflag, size = 0x4, scoped, tag = 'scoped memory for lpg_transformer_forward.16']
    #allocation6 [shape = 'u8[32768]{0}', space=vmem, size = 0x8000, scoped, tag = 'input window, operand 3, single buffered']
    #allocation7 [shape = 'u8[512]{0}', space=vmem, size = 0x400, scoped, tag = 'input window, operand 4, single buffered']
    #allocation8 [shape = 's32[1]{0}', space=sflag, size = 0x4, scoped, tag = 'scoped memory for lpg_transformer_forward.16']
    #allocation9 [shape = 'u8[512]{0}', space=vmem, size = 0x400, scoped, tag = 'input window, operand 5, single buffered']
    #allocation10 [shape = 'u8[512]{0}', space=vmem, size = 0x400, scoped, tag = 'input window, operand 6, single buffered']
    #allocation11 [shape = 's32[1]{0}', space=sflag, size = 0x4, scoped, tag = 'scoped memory for lpg_transformer_forward.16']
    %12 = vsyncpa [#allocation3], 0
    %13 = vsyncpa [#allocation5], 0
    %14 = vsyncpa [#allocation8], 0
    %15 = vsyncpa [#allocation11], 0
    // Predicated region
    $region2: #{lpg_transformer_forward.16} parent=1 // pred_check
      _
    $region3: #{lpg_transformer_forward.16} parent=1 // pred_check_branch
      %17 = sbr.rel (0) target = $region5
    $region4: #{lpg_transformer_forward.16} parent=1 // pred_region
      _
    $region5: #{lpg_transformer_forward.16} parent=1 // pred_fallthru
      _
    // Predicated region
    $region6: #{lpg_transformer_forward.16} parent=1 // pred_check
      _
    $region7: #{lpg_transformer_forward.16} parent=1 // pred_check_branch
      %19 = sbr.rel (0) target = $region9
    $region8: #{lpg_transformer_forward.16} parent=1 // pred_region
      %s21 = ssub.s32 1024, 1024
      %22 = vsyncadd [#allocation3], %s21
      %s23 = sshll.u32 [#allocation2], 4
      %s24 = int_to_ptr.vmem [resolvable:$true] %s23
      %29 = dma.hbm_to_vmem [thread:$0]  %s1, 1024, %s24, [#allocation3], 64, 64, 4
    $region9: #{lpg_transformer_forward.16} parent=1 // pred_fallthru
      _
    // Predicated region
    $region10: #{lpg_transformer_forward.16} parent=1 // pred_check
      _
    $region11: #{lpg_transformer_forward.16} parent=1 // pred_check_branch
      %31 = sbr.rel (0) target = $region13
    $region12: #{lpg_transformer_forward.16} parent=1 // pred_region
      %s33 = ssub.s32 16, 16
      %34 = vsyncadd [#allocation5], %s33
      %s36 = sshll.u32 [#allocation4], 4
      %s37 = int_to_ptr.vmem [resolvable:$true] %s36
      %39 = dma.hbm_to_vmem [thread:$0]  %s2, 16, %s37, [#allocation5]
    $region13: #{lpg_transformer_forward.16} parent=1 // pred_fallthru
      _
    // Predicated region
    $region14: #{lpg_transformer_forward.16} parent=1 // pred_check
      _
    $region15: #{lpg_transformer_forward.16} parent=1 // pred_check_branch
      %41 = sbr.rel (0) target = $region17
    $region16: #{lpg_transformer_forward.16} parent=1 // pred_region
      %s43 = ssub.s32 1024, 1024
      %44 = vsyncadd [#allocation5], %s43
      %s45 = sshll.u32 [#allocation6], 4
      %s46 = int_to_ptr.vmem [resolvable:$true] %s45
      %51 = dma.hbm_to_vmem [thread:$0]  %s3, 1024, %s46, [#allocation5], 64, 64, 4
    $region17: #{lpg_transformer_forward.16} parent=1 // pred_fallthru
      _
    // Predicated region
    $region18: #{lpg_transformer_forward.16} parent=1 // pred_check
      _
    $region19: #{lpg_transformer_forward.16} parent=1 // pred_check_branch
      %53 = sbr.rel (0) target = $region21
    $region20: #{lpg_transformer_forward.16} parent=1 // pred_region
      %s55 = ssub.s32 16, 16
      %56 = vsyncadd [#allocation8], %s55
      %s58 = sshll.u32 [#allocation7], 4
      %s59 = int_to_ptr.vmem [resolvable:$true] %s58
      %61 = dma.hbm_to_vmem [thread:$0]  %s4, 16, %s59, [#allocation8]
    $region21: #{lpg_transformer_forward.16} parent=1 // pred_fallthru
      _
    // Predicated region
    $region22: #{lpg_transformer_forward.16} parent=1 // pred_check
      _
    $region23: #{lpg_transformer_forward.16} parent=1 // pred_check_branch
      %63 = sbr.rel (0) target = $region25
    $region24: #{lpg_transformer_forward.16} parent=1 // pred_region
      %s65 = ssub.s32 16, 16
      %66 = vsyncadd [#allocation8], %s65
      %s68 = sshll.u32 [#allocation9], 4
      %s69 = int_to_ptr.vmem [resolvable:$true] %s68
      %71 = dma.hbm_to_vmem [thread:$0]  %s5, 16, %s69, [#allocation8]
    $region25: #{lpg_transformer_forward.16} parent=1 // pred_fallthru
      _
    // Predicated region
    $region26: #{lpg_transformer_forward.16} parent=1 // pred_check
      _
    $region27: #{lpg_transformer_forward.16} parent=1 // pred_check_branch
      %73 = sbr.rel (0) target = $region29
    $region28: #{lpg_transformer_forward.16} parent=1 // pred_region
      %s75 = ssub.s32 16, 16
      %76 = vsyncadd [#allocation11], %s75
      %s78 = sshll.u32 [#allocation10], 4
      %s79 = int_to_ptr.vmem [resolvable:$true] %s78
      %81 = dma.hbm_to_vmem [thread:$0]  %s6, 16, %s79, [#allocation11]
    $region29: #{lpg_transformer_forward.16} parent=1 // pred_fallthru
      _
    // Predicated region
    $region30: #{lpg_transformer_forward.16} parent=1 // pred_check
      _
    $region31: #{lpg_transformer_forward.16} parent=1 // pred_check_branch
      %83 = sbr.rel (0) target = $region33
    $region32: #{lpg_transformer_forward.16} parent=1 // pred_region
      %84 = dma.done [#allocation3], 1024
    $region33: #{lpg_transformer_forward.16} parent=1 // pred_fallthru
      _
    // Predicated region
    $region34: #{lpg_transformer_forward.16} parent=1 // pred_check
      _
    $region35: #{lpg_transformer_forward.16} parent=1 // pred_check_branch
      %86 = sbr.rel (0) target = $region37
    $region36: #{lpg_transformer_forward.16} parent=1 // pred_region
      %87 = dma.done [#allocation5], 16
    $region37: #{lpg_transformer_forward.16} parent=1 // pred_fallthru
      _
    // Predicated region
    $region38: #{lpg_transformer_forward.16} parent=1 // pred_check
      _
    $region39: #{lpg_transformer_forward.16} parent=1 // pred_check_branch
      %89 = sbr.rel (0) target = $region41
    $region40: #{lpg_transformer_forward.16} parent=1 // pred_region
      %90 = dma.done [#allocation5], 1024
    $region41: #{lpg_transformer_forward.16} parent=1 // pred_fallthru
      _
    // Predicated region
    $region42: #{lpg_transformer_forward.16} parent=1 // pred_check
      _
    $region43: #{lpg_transformer_forward.16} parent=1 // pred_check_branch
      %92 = sbr.rel (0) target = $region45
    $region44: #{lpg_transformer_forward.16} parent=1 // pred_region
      %93 = dma.done [#allocation8], 16
    $region45: #{lpg_transformer_forward.16} parent=1 // pred_fallthru
      _
    // Predicated region
    $region46: #{lpg_transformer_forward.16} parent=1 // pred_check
      _
    $region47: #{lpg_transformer_forward.16} parent=1 // pred_check_branch
      %95 = sbr.rel (0) target = $region49
    $region48: #{lpg_transformer_forward.16} parent=1 // pred_region
      %96 = dma.done [#allocation8], 16
    $region49: #{lpg_transformer_forward.16} parent=1 // pred_fallthru
      _
    // Predicated region
    $region50: #{lpg_transformer_forward.16} parent=1 // pred_check
      _
    $region51: #{lpg_transformer_forward.16} parent=1 // pred_check_branch
      %98 = sbr.rel (0) target = $region53
    $region52: #{lpg_transformer_forward.16} parent=1 // pred_region
      %99 = dma.done [#allocation11], 16
    $region53: #{lpg_transformer_forward.16} parent=1 // pred_fallthru
      _
    %v101 = vld [vmem:[%s0] sm:$0xf]
    %v102 = vld [vmem:[#allocation2] sm:$0xf]
    %v103 = vld [vmem:[#allocation2 + $0x4] sm:$0xf]
    %v104 = vld [vmem:[#allocation2 + $0x8] sm:$0xf]
    %v105 = vld [vmem:[#allocation2 + $0xc] sm:$0xf]
    %v106 = vld [vmem:[#allocation2 + $0x10] sm:$0xf]
    %v107 = vld [vmem:[#allocation2 + $0x14] sm:$0xf]
    %v108 = vld [vmem:[#allocation2 + $0x18] sm:$0xf]
    %v109 = vld [vmem:[#allocation2 + $0x1c] sm:$0xf]
    %v110 = vld [vmem:[#allocation2 + $0x20] sm:$0xf]
    %v111 = vld [vmem:[#allocation2 + $0x24] sm:$0xf]
    %v112 = vld [vmem:[#allocation2 + $0x28] sm:$0xf]
    %v113 = vld [vmem:[#allocation2 + $0x2c] sm:$0xf]
    %v114 = vld [vmem:[#allocation2 + $0x30] sm:$0xf]
    %v115 = vld [vmem:[#allocation2 + $0x34] sm:$0xf]
    %v116 = vld [vmem:[#allocation2 + $0x38] sm:$0xf]
    %v117 = vld [vmem:[#allocation2 + $0x3c] sm:$0xf]
    %v118 = vld [vmem:[#allocation4] sm:$0x1]
    %v120 = vlaneseq
    %v121 = vshrl.u32 %v120, 7
    %v122 = vsub.s32 0, %v121
    %v123 = vrot.slane %v118, %v122
    %v141 = vunpack.c.l.b16 %v102
    %v142 = vunpack.c.l.b16 %v103
    %v143 = vunpack.c.l.b16 %v104
    %v144 = vunpack.c.l.b16 %v105
    %v145 = vunpack.c.l.b16 %v106
    %v146 = vunpack.c.l.b16 %v107
    %v147 = vunpack.c.l.b16 %v108
    %v148 = vunpack.c.l.b16 %v109
    %v149 = vunpack.c.l.b16 %v110
    %v150 = vunpack.c.l.b16 %v111
    %v151 = vunpack.c.l.b16 %v112
    %v152 = vunpack.c.l.b16 %v113
    %v153 = vunpack.c.l.b16 %v114
    %v154 = vunpack.c.l.b16 %v115
    %v155 = vunpack.c.l.b16 %v116
    %v156 = vunpack.c.l.b16 %v117
    %v157 = vpack.c.b16 %v142, %v141
    %v158 = vpack.c.b16 %v144, %v143
    %v159 = vpack.c.b16 %v146, %v145
    %v160 = vpack.c.b16 %v148, %v147
    %v161 = vpack.c.b16 %v150, %v149
    %v162 = vpack.c.b16 %v152, %v151
    %v163 = vpack.c.b16 %v154, %v153
    %v164 = vpack.c.b16 %v156, %v155
    %173 = vmatprep.subr.bf16.mxu0 0
    %174 = vmatpush1.bf16.msra.mxu0 %v164
    %175 = vmatprep.subr.bf16.mxu0 0
    %176 = vmatpush1.bf16.msra.mxu0 %v163
    %177 = vmatprep.subr.bf16.mxu0 0
    %178 = vmatpush1.bf16.msra.mxu0 %v162
    %179 = vmatprep.subr.bf16.mxu0 0
    %180 = vmatpush1.bf16.msra.mxu0 %v161
    %181 = vmatprep.subr.bf16.mxu0 0
    %182 = vmatpush1.bf16.msra.mxu0 %v160
    %183 = vmatprep.subr.bf16.mxu0 0
    %184 = vmatpush1.bf16.msra.mxu0 %v159
    %185 = vmatprep.subr.bf16.mxu0 0
    %186 = vmatpush1.bf16.msra.mxu0 %v158
    %187 = vmatprep.subr.bf16.mxu0 0
    %188 = vmatpush1.bf16.msra.mxu0 %v157
    %189 = vmatprep.subr.bf16.mxu0 0
    %190 = vmatpush2.bf16.msra.mxu0 0
    %191 = vmatprep.subr.bf16.mxu0 0
    %192 = vmatpush2.bf16.msra.mxu0 0
    %193 = vmatprep.subr.bf16.mxu0 0
    %194 = vmatpush2.bf16.msra.mxu0 0
    %195 = vmatprep.subr.bf16.mxu0 0
    %196 = vmatpush2.bf16.msra.mxu0 0
    %197 = vmatprep.subr.bf16.mxu0 0
    %198 = vmatpush2.bf16.msra.mxu0 0
    %199 = vmatprep.subr.bf16.mxu0 0
    %200 = vmatpush2.bf16.msra.mxu0 0
    %201 = vmatprep.subr.bf16.mxu0 0
    %202 = vmatpush2.bf16.msra.mxu0 0
    %203 = vmatprep.subr.bf16.mxu0 0
    %204 = vmatpush2.bf16.msra.mxu0 0
    %205 = vmatprep.mubr.bf16.mxu0 0
    %206 = vmatmul.mubr.bf16.gmra.mxu0 %v101
    %v207 = vpop.f32.mrf.mxu0
    %v208 = vadd.f32 %v123, %v207
    %v209 = vpop.f32.mrf.mxu0
    %v210 = vpop.f32.mrf.mxu0
    %v211 = vpop.f32.mrf.mxu0
    %212 = vdwg.mxu0
    %v213 = vmul.f32 %v208, 0.5
    %v214 = vmul.f32 %v208, 0.70710677
    %v215 = vand.u32 2147483647, %v214
    %v216 = vmul.f32 %v215, 0.3275911
    %v217 = vadd.f32 %v216, 1.0
    %v218 = vrcp.pop %v217
    %v219 = vmul.f32 1.0, %v218
    %v220 = vmul.f32 %v219, 1.0614054
    %v221 = vadd.f32 %v220, -1.4531521
    %v222 = vmul.f32 %v221, %v219
    %v223 = vadd.f32 %v222, 1.4214138
    %v224 = vmul.f32 %v223, %v219
    %v225 = vadd.f32 %v224, -0.28449672
    %v226 = vmul.f32 %v225, %v219
    %v227 = vadd.f32 %v226, 0.2548296
    %v228 = vmul.f32 %v227, %v219
    %v229 = vsub.f32 0.0, %v215
    %v230 = vmul.f32 %v229, %v215
    %v231 = vmul.f32 %v230, 1.442695
    %v232 = vpow.pop %v231
    %v233 = vmul.f32 %v228, %v232
    %v234 = vsub.f32 1.0, %v233
    %vm235 = vcmp.lt.f32.partialorder %v214, 0.0
    %v236 = vsub.f32 0.0, %v234
    %v237 = vsel %vm235, %v236, %v234
    %v238 = vadd.f32 %v237, 1.0
    %v239 = vmul.f32 %v213, %v238
    %v240 = vpack.c.bf16 %v239, %v239
    %v241 = vld [vmem:[#allocation6] sm:$0xf]
    %v242 = vld [vmem:[#allocation6 + $0x4] sm:$0xf]
    %v243 = vld [vmem:[#allocation6 + $0x8] sm:$0xf]
    %v244 = vld [vmem:[#allocation6 + $0xc] sm:$0xf]
    %v245 = vld [vmem:[#allocation6 + $0x10] sm:$0xf]
    %v246 = vld [vmem:[#allocation6 + $0x14] sm:$0xf]
    %v247 = vld [vmem:[#allocation6 + $0x18] sm:$0xf]
    %v248 = vld [vmem:[#allocation6 + $0x1c] sm:$0xf]
    %v249 = vld [vmem:[#allocation6 + $0x20] sm:$0xf]
    %v250 = vld [vmem:[#allocation6 + $0x24] sm:$0xf]
    %v251 = vld [vmem:[#allocation6 + $0x28] sm:$0xf]
    %v252 = vld [vmem:[#allocation6 + $0x2c] sm:$0xf]
    %v253 = vld [vmem:[#allocation6 + $0x30] sm:$0xf]
    %v254 = vld [vmem:[#allocation6 + $0x34] sm:$0xf]
    %v255 = vld [vmem:[#allocation6 + $0x38] sm:$0xf]
    %v256 = vld [vmem:[#allocation6 + $0x3c] sm:$0xf]
    %v257 = vld [vmem:[#allocation7] sm:$0x1]
    %v259 = vlaneseq
    %v260 = vshrl.u32 %v259, 7
    %v261 = vsub.s32 0, %v260
    %v262 = vrot.slane %v257, %v261
    %v280 = vunpack.c.l.b16 %v241
    %v281 = vunpack.c.l.b16 %v242
    %v282 = vunpack.c.l.b16 %v243
    %v283 = vunpack.c.l.b16 %v244
    %v284 = vunpack.c.l.b16 %v245
    %v285 = vunpack.c.l.b16 %v246
    %v286 = vunpack.c.l.b16 %v247
    %v287 = vunpack.c.l.b16 %v248
    %v288 = vunpack.c.l.b16 %v249
    %v289 = vunpack.c.l.b16 %v250
    %v290 = vunpack.c.l.b16 %v251
    %v291 = vunpack.c.l.b16 %v252
    %v292 = vunpack.c.l.b16 %v253
    %v293 = vunpack.c.l.b16 %v254
    %v294 = vunpack.c.l.b16 %v255
    %v295 = vunpack.c.l.b16 %v256
    %v296 = vpack.c.b16 %v281, %v280
    %v297 = vpack.c.b16 %v283, %v282
    %v298 = vpack.c.b16 %v285, %v284
    %v299 = vpack.c.b16 %v287, %v286
    %v300 = vpack.c.b16 %v289, %v288
    %v301 = vpack.c.b16 %v291, %v290
    %v302 = vpack.c.b16 %v293, %v292
    %v303 = vpack.c.b16 %v295, %v294
    %312 = vmatprep.subr.bf16.mxu0 0
    %313 = vmatpush1.bf16.msra.mxu0 %v303
    %314 = vmatprep.subr.bf16.mxu0 0
    %315 = vmatpush1.bf16.msra.mxu0 %v302
    %316 = vmatprep.subr.bf16.mxu0 0
    %317 = vmatpush1.bf16.msra.mxu0 %v301
    %318 = vmatprep.subr.bf16.mxu0 0
    %319 = vmatpush1.bf16.msra.mxu0 %v300
    %320 = vmatprep.subr.bf16.mxu0 0
    %321 = vmatpush1.bf16.msra.mxu0 %v299
    %322 = vmatprep.subr.bf16.mxu0 0
    %323 = vmatpush1.bf16.msra.mxu0 %v298
    %324 = vmatprep.subr.bf16.mxu0 0
    %325 = vmatpush1.bf16.msra.mxu0 %v297
    %326 = vmatprep.subr.bf16.mxu0 0
    %327 = vmatpush1.bf16.msra.mxu0 %v296
    %328 = vmatprep.subr.bf16.mxu0 0
    %329 = vmatpush2.bf16.msra.mxu0 0
    %330 = vmatprep.subr.bf16.mxu0 0
    %331 = vmatpush2.bf16.msra.mxu0 0
    %332 = vmatprep.subr.bf16.mxu0 0
    %333 = vmatpush2.bf16.msra.mxu0 0
    %334 = vmatprep.subr.bf16.mxu0 0
    %335 = vmatpush2.bf16.msra.mxu0 0
    %336 = vmatprep.subr.bf16.mxu0 0
    %337 = vmatpush2.bf16.msra.mxu0 0
    %338 = vmatprep.subr.bf16.mxu0 0
    %339 = vmatpush2.bf16.msra.mxu0 0
    %340 = vmatprep.subr.bf16.mxu0 0
    %341 = vmatpush2.bf16.msra.mxu0 0
    %342 = vmatprep.subr.bf16.mxu0 0
    %343 = vmatpush2.bf16.msra.mxu0 0
    %344 = vmatprep.mubr.bf16.mxu0 0
    %345 = vmatmul.mubr.bf16.gmra.mxu0 %v240
    %v346 = vpop.f32.mrf.mxu0
    %v347 = vadd.f32 %v262, %v346
    %v348 = vpop.f32.mrf.mxu0
    %v349 = vpop.f32.mrf.mxu0
    %v350 = vpop.f32.mrf.mxu0
    %351 = vdwg.mxu0
    %v352 = vunpack.c.l.bf16 %v101
    %v353 = vadd.f32 %v347, %v352
    %v354 = vld [vmem:[#allocation9] sm:$0x1]
    %v355 = vld [vmem:[#allocation10] sm:$0x1]
    %356 = vadd.xlane.f32.xlu0 %v353
    %v357 = vpop.xlane.xlu0 %356
    %v358 = vmul.f32 %v357, 0.03125
    %v359 = vlaneseq
    %v360 = vand.u32 %v359, 127
    %vm361 = vcmp.lt.s32.totalorder %v360, 32
    %v362 = vsub.f32 %v353, %v358
    %v363 = vsel %vm361, %v362, 0.0
    %v364 = vmul.f32 %v363, %v363
    %365 = vadd.xlane.f32.xlu0 %v364
    %v366 = vpop.xlane.xlu0 %365
    %v367 = vmul.f32 %v366, 0.03125
    %v368 = vadd.f32 %v367, 1e-05
    %v369 = vrsqrt.pop %v368
    %v370 = vmul.f32 %v363, %v369
    %v372 = vlaneseq
    %v373 = vshrl.u32 %v372, 7
    %v374 = vsub.s32 0, %v373
    %v375 = vrot.slane %v354, %v374
    %v377 = vmul.f32 %v370, %v375
    %v379 = vlaneseq
    %v380 = vshrl.u32 %v379, 7
    %v381 = vsub.s32 0, %v380
    %v382 = vrot.slane %v355, %v381
    %v384 = vadd.f32 %v377, %v382
    %v385 = vpack.c.bf16 %v384, %v384
    %386 = vst [vmem:[%s7] sm:$0xf] %v385
    // Predicated region
    $region54: #{lpg_transformer_forward.16} parent=1 // pred_check
      _
    $region55: #{lpg_transformer_forward.16} parent=1 // pred_check_branch
      %388 = sbr.rel (0) target = $region57
    $region56: #{lpg_transformer_forward.16} parent=1 // pred_region
      _
    $region57: #{lpg_transformer_forward.16} parent=1 // pred_fallthru
      _
    // Predicated region
    $region58: #{lpg_transformer_forward.16} parent=1 // pred_check
      _
    $region59: #{lpg_transformer_forward.16} parent=1 // pred_check_branch
      %390 = sbr.rel (0) target = $region61
    $region60: #{lpg_transformer_forward.16} parent=1 // pred_region
      _
    $region61: #{lpg_transformer_forward.16} parent=1 // pred_fallthru
      _
    %391 = vsyncpa [#allocation3], 1
    %392 = vsyncpa [#allocation5], 1
    %393 = vsyncpa [#allocation8], 1
    %394 = vsyncpa [#allocation11], 1

// kernel: lpg_transformer_forward.15
$region0: #{lpg_transformer_forward.15}
  #allocation0 [shape = 'u32[]', space=smem, size = 0x4, offset = 0x4, fixed_abs, tag = 'smem constant byte address 0x4 - core index']
  #allocation1 [shape = 'u32[144,128]{1,0:T(1,128)}', space=vmem, size = 0x12000, scoped, tag = 'internal scratch']
  %s0 = inlined_call_operand.vmem [shape: bf16[8,1,128], index: 0, kind: input, shape index: {}, may-alias: {0,1}]
  %s1 = inlined_call_operand.vmem [shape: bf16[8,1,128], index: 1, kind: input, shape index: {}, may-alias: {0,1}]
  %s2 = inlined_call_operand.hbm [shape: bf16[128,128], index: 2, kind: input, shape index: {}]
  %s3 = inlined_call_operand.hbm [shape: f32[1,128], index: 3, kind: input, shape index: {}]
  %s4 = inlined_call_operand.hbm [shape: bf16[128,128], index: 4, kind: input, shape index: {}]
  %s5 = inlined_call_operand.hbm [shape: f32[1,128], index: 5, kind: input, shape index: {}]
  %s6 = inlined_call_operand.hbm [shape: f32[1,128], index: 6, kind: input, shape index: {}]
  %s7 = inlined_call_operand.hbm [shape: f32[1,128], index: 7, kind: input, shape index: {}]
  %s8 = inlined_call_operand.vmem [shape: bf16[8,1,128], index: 8, kind: output, shape index: {}]
  %s9 = sld [smem:[#allocation0]]
  $region89: #{lpg_transformer_forward.15} parent=0
    _
  %s11 = ssub.s32 1, %s9
  %s12 = scalar_select 0, %s11, %s9
  $region1: #{lpg_transformer_forward.15} parent=0
    #allocation2 [shape = 'u8[32768]{0}', space=vmem, size = 0x8000, scoped, tag = 'input window, operand 2, single buffered']
    #allocation3 [shape = 's32[2]{0}', space=sflag, size = 0x8, scoped, tag = 'scoped memory for lpg_transformer_forward.15']
    #allocation4 [shape = 'u8[512]{0}', space=vmem, size = 0x400, scoped, tag = 'input window, operand 3, single buffered']
    #allocation5 [shape = 's32[1]{0}', space=sflag, size = 0x4, scoped, tag = 'scoped memory for lpg_transformer_forward.15']
    #allocation6 [shape = 'u8[32768]{0}', space=vmem, size = 0x8000, scoped, tag = 'input window, operand 4, single buffered']
    #allocation7 [shape = 'u8[512]{0}', space=vmem, size = 0x400, scoped, tag = 'input window, operand 5, single buffered']
    #allocation8 [shape = 's32[1]{0}', space=sflag, size = 0x4, scoped, tag = 'scoped memory for lpg_transformer_forward.15']
    #allocation9 [shape = 'u8[512]{0}', space=vmem, size = 0x400, scoped, tag = 'input window, operand 6, single buffered']
    #allocation10 [shape = 'u8[512]{0}', space=vmem, size = 0x400, scoped, tag = 'input window, operand 7, single buffered']
    #allocation11 [shape = 's32[1]{0}', space=sflag, size = 0x4, scoped, tag = 'scoped memory for lpg_transformer_forward.15']
    %13 = vsyncpa [#allocation3], 0
    %14 = vsyncpa [#allocation5], 0
    %15 = vsyncpa [#allocation8], 0
    %16 = vsyncpa [#allocation11], 0
    loop: start=0, step=1, limit=10
    $region2: #{lpg_transformer_forward.15} parent=1 // loop_pre_header
      _
    $region3: #{lpg_transformer_forward.15} parent=1 // loop_header
      %s18 = sphi 0, %s22
      %p19 = scmp.ge.s32.totalorder %s18, 10
      %s28 = sphi 0, %s30
      %s31 = sphi 0, %s28
      %s32 = sphi 0, %s31
      %s48 = sphi 0, %s32
      %s54 = sphi 0, %s56
      %s57 = sphi 0, %s54
      %s58 = sphi 0, %s57
      %s74 = sphi 0, %s58
      %s78 = sphi 0, %s78
      %s80 = sphi 0, %s78
      %s81 = sphi 0, %s80
      %s95 = sphi 0, %s81
      %s99 = sphi 0, %s99
      %s101 = sphi 0, %s99
      %s102 = sphi 0, %s101
      %s116 = sphi 0, %s102
      %s120 = sphi 0, %s120
      %s122 = sphi 0, %s120
      %s123 = sphi 0, %s122
      %s137 = sphi 0, %s123
      %s141 = sphi 0, %s141
      %s143 = sphi 0, %s141
      %s144 = sphi 0, %s143
      %s158 = sphi 0, %s144
      %s162 = sphi 0, %s162
      %s164 = sphi 0, %s162
      %s165 = sphi 0, %s164
      %s179 = sphi 0, %s165
      %s183 = sphi 0, %s183
      %s185 = sphi 0, %s183
      %s186 = sphi 0, %s185
      %s200 = sphi 0, %s186
      %s206 = sphi 0, %s208
      %s209 = sphi 0, %s206
      %s210 = sphi 0, %s209
      %s226 = sphi 0, %s210
    $region4: #{lpg_transformer_forward.15} parent=1 // loop_header_branch
      %21 = sbr.rel (%p19) target = $region8
    $region5: #{lpg_transformer_forward.15} parent=1 // loop_body
      %s23 = ssub.s32 %s18, 1
      %s24 = ssub.s32 %s18, 2
      %s25 = sadd.s32 %s18, 1
      %s26 = ssub.s32 %s18, %s25
      %p27 = scmp.eq.s32.totalorder %s26, 0
      %s29 = sadd.s32 %s28, 1
      %s30 = scalar_select %p27, %s28, %s29
      %p33 = pneg %p27
      %p34 = scmp.eq.s32.totalorder %s18, 7
      %p35 = por %p33, %p34
      %p36 = scmp.ne.s32.totalorder %s28, %s31
      %p37 = scmp.eq.s32.totalorder %s18, 0
      %p38 = por %p36, %p37
      %p39 = scmp.ne.s32.totalorder %s28, %s31
      %p40 = scmp.eq.s32.totalorder %s23, 7
      %p41 = por %p39, %p40
      %p42 = scmp.ne.s32.totalorder %s31, %s32
      %p43 = scmp.eq.s32.totalorder %s23, 0
      %p44 = por %p42, %p43
      %p45 = scmp.ne.s32.totalorder %s31, %s32
      %p46 = scmp.eq.s32.totalorder %s24, 7
      %p47 = por %p45, %p46
      %p49 = scmp.ne.s32.totalorder %s32, %s48
      %p50 = scmp.eq.s32.totalorder %s24, 0
      %p51 = por %p49, %p50
      %s52 = ssub.s32 %s18, %s25
      %p53 = scmp.eq.s32.totalorder %s52, 0
      %s55 = sadd.s32 %s54, 1
      %s56 = scalar_select %p53, %s54, %s55
      %p59 = pneg %p53
      %p60 = scmp.eq.s32.totalorder %s18, 7
      %p61 = por %p59, %p60
      %p62 = scmp.ne.s32.totalorder %s54, %s57
      %p63 = scmp.eq.s32.totalorder %s18, 0
      %p64 = por %p62, %p63
      %p65 = scmp.ne.s32.totalorder %s54, %s57
      %p66 = scmp.eq.s32.totalorder %s23, 7
      %p67 = por %p65, %p66
      %p68 = scmp.ne.s32.totalorder %s57, %s58
      %p69 = scmp.eq.s32.totalorder %s23, 0
      %p70 = por %p68, %p69
      %p71 = scmp.ne.s32.totalorder %s57, %s58
      %p72 = scmp.eq.s32.totalorder %s24, 7
      %p73 = por %p71, %p72
      %p75 = scmp.ne.s32.totalorder %s58, %s74
      %p76 = scmp.eq.s32.totalorder %s24, 0
      %p77 = por %p75, %p76
      %s79 = sadd.s32 %s78, 1
      %p82 = scmp.eq.s32.totalorder %s18, 7
      %p83 = scmp.ne.s32.totalorder %s78, %s80
      %p84 = scmp.eq.s32.totalorder %s18, 0
      %p85 = por %p83, %p84
      %p86 = scmp.ne.s32.totalorder %s78, %s80
      %p87 = scmp.eq.s32.totalorder %s23, 7
      %p88 = por %p86, %p87
      %p89 = scmp.ne.s32.totalorder %s80, %s81
      %p90 = scmp.eq.s32.totalorder %s23, 0
      %p91 = por %p89, %p90
      %p92 = scmp.ne.s32.totalorder %s80, %s81
      %p93 = scmp.eq.s32.totalorder %s24, 7
      %p94 = por %p92, %p93
      %p96 = scmp.ne.s32.totalorder %s81, %s95
      %p97 = scmp.eq.s32.totalorder %s24, 0
      %p98 = por %p96, %p97
      %s100 = sadd.s32 %s99, 1
      %p103 = scmp.eq.s32.totalorder %s18, 7
      %p104 = scmp.ne.s32.totalorder %s99, %s101
      %p105 = scmp.eq.s32.totalorder %s18, 0
      %p106 = por %p104, %p105
      %p107 = scmp.ne.s32.totalorder %s99, %s101
      %p108 = scmp.eq.s32.totalorder %s23, 7
      %p109 = por %p107, %p108
      %p110 = scmp.ne.s32.totalorder %s101, %s102
      %p111 = scmp.eq.s32.totalorder %s23, 0
      %p112 = por %p110, %p111
      %p113 = scmp.ne.s32.totalorder %s101, %s102
      %p114 = scmp.eq.s32.totalorder %s24, 7
      %p115 = por %p113, %p114
      %p117 = scmp.ne.s32.totalorder %s102, %s116
      %p118 = scmp.eq.s32.totalorder %s24, 0
      %p119 = por %p117, %p118
      %s121 = sadd.s32 %s120, 1
      %p124 = scmp.eq.s32.totalorder %s18, 7
      %p125 = scmp.ne.s32.totalorder %s120, %s122
      %p126 = scmp.eq.s32.totalorder %s18, 0
      %p127 = por %p125, %p126
      %p128 = scmp.ne.s32.totalorder %s120, %s122
      %p129 = scmp.eq.s32.totalorder %s23, 7
      %p130 = por %p128, %p129
      %p131 = scmp.ne.s32.totalorder %s122, %s123
      %p132 = scmp.eq.s32.totalorder %s23, 0
      %p133 = por %p131, %p132
      %p134 = scmp.ne.s32.totalorder %s122, %s123
      %p135 = scmp.eq.s32.totalorder %s24, 7
      %p136 = por %p134, %p135
      %p138 = scmp.ne.s32.totalorder %s123, %s137
      %p139 = scmp.eq.s32.totalorder %s24, 0
      %p140 = por %p138, %p139
      %s142 = sadd.s32 %s141, 1
      %p145 = scmp.eq.s32.totalorder %s18, 7
      %p146 = scmp.ne.s32.totalorder %s141, %s143
      %p147 = scmp.eq.s32.totalorder %s18, 0
      %p148 = por %p146, %p147
      %p149 = scmp.ne.s32.totalorder %s141, %s143
      %p150 = scmp.eq.s32.totalorder %s23, 7
      %p151 = por %p149, %p150
      %p152 = scmp.ne.s32.totalorder %s143, %s144
      %p153 = scmp.eq.s32.totalorder %s23, 0
      %p154 = por %p152, %p153
      %p155 = scmp.ne.s32.totalorder %s143, %s144
      %p156 = scmp.eq.s32.totalorder %s24, 7
      %p157 = por %p155, %p156
      %p159 = scmp.ne.s32.totalorder %s144, %s158
      %p160 = scmp.eq.s32.totalorder %s24, 0
      %p161 = por %p159, %p160
      %s163 = sadd.s32 %s162, 1
      %p166 = scmp.eq.s32.totalorder %s18, 7
      %p167 = scmp.ne.s32.totalorder %s162, %s164
      %p168 = scmp.eq.s32.totalorder %s18, 0
      %p169 = por %p167, %p168
      %p170 = scmp.ne.s32.totalorder %s162, %s164
      %p171 = scmp.eq.s32.totalorder %s23, 7
      %p172 = por %p170, %p171
      %p173 = scmp.ne.s32.totalorder %s164, %s165
      %p174 = scmp.eq.s32.totalorder %s23, 0
      %p175 = por %p173, %p174
      %p176 = scmp.ne.s32.totalorder %s164, %s165
      %p177 = scmp.eq.s32.totalorder %s24, 7
      %p178 = por %p176, %p177
      %p180 = scmp.ne.s32.totalorder %s165, %s179
      %p181 = scmp.eq.s32.totalorder %s24, 0
      %p182 = por %p180, %p181
      %s184 = sadd.s32 %s183, 1
      %p187 = scmp.eq.s32.totalorder %s18, 7
      %p188 = scmp.ne.s32.totalorder %s183, %s185
      %p189 = scmp.eq.s32.totalorder %s18, 0
      %p190 = por %p188, %p189
      %p191 = scmp.ne.s32.totalorder %s183, %s185
      %p192 = scmp.eq.s32.totalorder %s23, 7
      %p193 = por %p191, %p192
      %p194 = scmp.ne.s32.totalorder %s185, %s186
      %p195 = scmp.eq.s32.totalorder %s23, 0
      %p196 = por %p194, %p195
      %p197 = scmp.ne.s32.totalorder %s185, %s186
      %p198 = scmp.eq.s32.totalorder %s24, 7
      %p199 = por %p197, %p198
      %p201 = scmp.ne.s32.totalorder %s186, %s200
      %p202 = scmp.eq.s32.totalorder %s24, 0
      %p203 = por %p201, %p202
      %s204 = ssub.s32 %s18, %s25
      %p205 = scmp.eq.s32.totalorder %s204, 0
      %s207 = sadd.s32 %s206, 1
      %s208 = scalar_select %p205, %s206, %s207
      %p211 = pneg %p205
      %p212 = scmp.eq.s32.totalorder %s18, 7
      %p213 = por %p211, %p212
      %p214 = scmp.ne.s32.totalorder %s206, %s209
      %p215 = scmp.eq.s32.totalorder %s18, 0
      %p216 = por %p214, %p215
      %p217 = scmp.ne.s32.totalorder %s206, %s209
      %p218 = scmp.eq.s32.totalorder %s23, 7
      %p219 = por %p217, %p218
      %p220 = scmp.ne.s32.totalorder %s209, %s210
      %p221 = scmp.eq.s32.totalorder %s23, 0
      %p222 = por %p220, %p221
      %p223 = scmp.ne.s32.totalorder %s209, %s210
      %p224 = scmp.eq.s32.totalorder %s24, 7
      %p225 = por %p223, %p224
      %p227 = scmp.ne.s32.totalorder %s210, %s226
      %p228 = scmp.eq.s32.totalorder %s24, 0
      %p229 = por %p227, %p228
      %p230 = scmp.le.s32.totalorder 1, %s18
      %p231 = scmp.lt.s32.totalorder %s18, 9
      %p232 = pnand %p230, %p231
      %p233 = pneg %p232
      // Predicated region
      $region9: #{lpg_transformer_forward.15} parent=5 // pred_check
        _
      $region10: #{lpg_transformer_forward.15} parent=5 // pred_check_branch
        %235 = sbr.rel (%p232) target = $region12
      $region11: #{lpg_transformer_forward.15} parent=5 // pred_region
        %s236 = ssub.s32 %s18, 1
        // Predicated region
        $region13: #{lpg_transformer_forward.15} parent=11 // pred_check
          %p237 = pneg %p91
        $region14: #{lpg_transformer_forward.15} parent=11 // pred_check_branch
          %239 = sbr.rel (%p237) target = $region16
        $region15: #{lpg_transformer_forward.15} parent=11 // pred_region
          %s241 = ssub.s32 1024, 1024
          %242 = vsyncadd [#allocation3], %s241
          %s243 = sshll.u32 [#allocation2], 4
          %s244 = int_to_ptr.vmem [resolvable:$true] %s243
          %249 = dma.hbm_to_vmem [thread:$0]  %s2, 1024, %s244, [#allocation3], 64, 64, 4
        $region16: #{lpg_transformer_forward.15} parent=11 // pred_fallthru
          _
        // Predicated region
        $region17: #{lpg_transformer_forward.15} parent=11 // pred_check
          %p250 = pneg %p112
        $region18: #{lpg_transformer_forward.15} parent=11 // pred_check_branch
          %252 = sbr.rel (%p250) target = $region20
        $region19: #{lpg_transformer_forward.15} parent=11 // pred_region
          %s254 = ssub.s32 16, 16
          %255 = vsyncadd [#allocation5], %s254
          %s257 = sshll.u32 [#allocation4], 4
          %s258 = int_to_ptr.vmem [resolvable:$true] %s257
          %260 = dma.hbm_to_vmem [thread:$0]  %s3, 16, %s258, [#allocation5]
        $region20: #{lpg_transformer_forward.15} parent=11 // pred_fallthru
          _
        // Predicated region
        $region21: #{lpg_transformer_forward.15} parent=11 // pred_check
          %p261 = pneg %p133
        $region22: #{lpg_transformer_forward.15} parent=11 // pred_check_branch
          %263 = sbr.rel (%p261) target = $region24
        $region23: #{lpg_transformer_forward.15} parent=11 // pred_region
          %s265 = ssub.s32 1024, 1024
          %266 = vsyncadd [#allocation5], %s265
          %s267 = sshll.u32 [#allocation6], 4
          %s268 = int_to_ptr.vmem [resolvable:$true] %s267
          %273 = dma.hbm_to_vmem [thread:$0]  %s4, 1024, %s268, [#allocation5], 64, 64, 4
        $region24: #{lpg_transformer_forward.15} parent=11 // pred_fallthru
          _
        // Predicated region
        $region25: #{lpg_transformer_forward.15} parent=11 // pred_check
          %p274 = pneg %p154
        $region26: #{lpg_transformer_forward.15} parent=11 // pred_check_branch
          %276 = sbr.rel (%p274) target = $region28
        $region27: #{lpg_transformer_forward.15} parent=11 // pred_region
          %s278 = ssub.s32 16, 16
          %279 = vsyncadd [#allocation8], %s278
          %s281 = sshll.u32 [#allocation7], 4
          %s282 = int_to_ptr.vmem [resolvable:$true] %s281
          %284 = dma.hbm_to_vmem [thread:$0]  %s5, 16, %s282, [#allocation8]
        $region28: #{lpg_transformer_forward.15} parent=11 // pred_fallthru
          _
        // Predicated region
        $region29: #{lpg_transformer_forward.15} parent=11 // pred_check
          %p285 = pneg %p175
        $region30: #{lpg_transformer_forward.15} parent=11 // pred_check_branch
          %287 = sbr.rel (%p285) target = $region32
        $region31: #{lpg_transformer_forward.15} parent=11 // pred_region
          %s289 = ssub.s32 16, 16
          %290 = vsyncadd [#allocation8], %s289
          %s292 = sshll.u32 [#allocation9], 4
          %s293 = int_to_ptr.vmem [resolvable:$true] %s292
          %295 = dma.hbm_to_vmem [thread:$0]  %s6, 16, %s293, [#allocation8]
        $region32: #{lpg_transformer_forward.15} parent=11 // pred_fallthru
          _
        // Predicated region
        $region33: #{lpg_transformer_forward.15} parent=11 // pred_check
          %p296 = pneg %p196
        $region34: #{lpg_transformer_forward.15} parent=11 // pred_check_branch
          %298 = sbr.rel (%p296) target = $region36
        $region35: #{lpg_transformer_forward.15} parent=11 // pred_region
          %s300 = ssub.s32 16, 16
          %301 = vsyncadd [#allocation11], %s300
          %s303 = sshll.u32 [#allocation10], 4
          %s304 = int_to_ptr.vmem [resolvable:$true] %s303
          %306 = dma.hbm_to_vmem [thread:$0]  %s7, 16, %s304, [#allocation11]
        $region36: #{lpg_transformer_forward.15} parent=11 // pred_fallthru
          _
      $region12: #{lpg_transformer_forward.15} parent=5 // pred_fallthru
        _
      %p307 = scmp.lt.s32.totalorder %s18, 8
      // Predicated region
      $region37: #{lpg_transformer_forward.15} parent=5 // pred_check
        %p308 = pneg %p307
      $region38: #{lpg_transformer_forward.15} parent=5 // pred_check_branch
        %310 = sbr.rel (%p308) target = $region40
      $region39: #{lpg_transformer_forward.15} parent=5 // pred_region
        // Predicated region
        $region41: #{lpg_transformer_forward.15} parent=39 // pred_check
          %p311 = pneg %p38
        $region42: #{lpg_transformer_forward.15} parent=39 // pred_check_branch
          %313 = sbr.rel (%p311) target = $region44
        $region43: #{lpg_transformer_forward.15} parent=39 // pred_region
          %p314 = scmp.lt.s32.totalorder %s18, 7
          %s315 = scalar_select %p314, %s18, 7
          %s316 = scalar_lea.vmem %s0, %s315
        $region44: #{lpg_transformer_forward.15} parent=39 // pred_fallthru
          _
        // Predicated region
        $region45: #{lpg_transformer_forward.15} parent=39 // pred_check
          %p317 = pneg %p64
        $region46: #{lpg_transformer_forward.15} parent=39 // pred_check_branch
          %319 = sbr.rel (%p317) target = $region48
        $region47: #{lpg_transformer_forward.15} parent=39 // pred_region
          %p320 = scmp.lt.s32.totalorder %s18, 7
          %s321 = scalar_select %p320, %s18, 7
          %s322 = scalar_lea.vmem %s1, %s321
        $region48: #{lpg_transformer_forward.15} parent=39 // pred_fallthru
          _
      $region40: #{lpg_transformer_forward.15} parent=5 // pred_fallthru
        _
      %p323 = scmp.le.s32.totalorder 1, %s18
      %p324 = scmp.lt.s32.totalorder %s18, 9
      %p325 = pnand %p323, %p324
      %p326 = pneg %p325
      // Predicated region
      $region49: #{lpg_transformer_forward.15} parent=5 // pred_check
        _
      $region50: #{lpg_transformer_forward.15} parent=5 // pred_check_branch
        %328 = sbr.rel (%p325) target = $region52
      $region51: #{lpg_transformer_forward.15} parent=5 // pred_region
        %s329 = ssub.s32 %s18, 1
        // Predicated region
        $region53: #{lpg_transformer_forward.15} parent=51 // pred_check
          %p330 = pneg %p91
        $region54: #{lpg_transformer_forward.15} parent=51 // pred_check_branch
          %332 = sbr.rel (%p330) target = $region56
        $region55: #{lpg_transformer_forward.15} parent=51 // pred_region
          %333 = dma.done [#allocation3], 1024
        $region56: #{lpg_transformer_forward.15} parent=51 // pred_fallthru
          _
        // Predicated region
        $region57: #{lpg_transformer_forward.15} parent=51 // pred_check
          %p334 = pneg %p112
        $region58: #{lpg_transformer_forward.15} parent=51 // pred_check_branch
          %336 = sbr.rel (%p334) target = $region60
        $region59: #{lpg_transformer_forward.15} parent=51 // pred_region
          %337 = dma.done [#allocation5], 16
        $region60: #{lpg_transformer_forward.15} parent=51 // pred_fallthru
          _
        // Predicated region
        $region61: #{lpg_transformer_forward.15} parent=51 // pred_check
          %p338 = pneg %p133
        $region62: #{lpg_transformer_forward.15} parent=51 // pred_check_branch
          %340 = sbr.rel (%p338) target = $region64
        $region63: #{lpg_transformer_forward.15} parent=51 // pred_region
          %341 = dma.done [#allocation5], 1024
        $region64: #{lpg_transformer_forward.15} parent=51 // pred_fallthru
          _
        // Predicated region
        $region65: #{lpg_transformer_forward.15} parent=51 // pred_check
          %p342 = pneg %p154
        $region66: #{lpg_transformer_forward.15} parent=51 // pred_check_branch
          %344 = sbr.rel (%p342) target = $region68
        $region67: #{lpg_transformer_forward.15} parent=51 // pred_region
          %345 = dma.done [#allocation8], 16
        $region68: #{lpg_transformer_forward.15} parent=51 // pred_fallthru
          _
        // Predicated region
        $region69: #{lpg_transformer_forward.15} parent=51 // pred_check
          %p346 = pneg %p175
        $region70: #{lpg_transformer_forward.15} parent=51 // pred_check_branch
          %348 = sbr.rel (%p346) target = $region72
        $region71: #{lpg_transformer_forward.15} parent=51 // pred_region
          %349 = dma.done [#allocation8], 16
        $region72: #{lpg_transformer_forward.15} parent=51 // pred_fallthru
          _
        // Predicated region
        $region73: #{lpg_transformer_forward.15} parent=51 // pred_check
          %p350 = pneg %p196
        $region74: #{lpg_transformer_forward.15} parent=51 // pred_check_branch
          %352 = sbr.rel (%p350) target = $region76
        $region75: #{lpg_transformer_forward.15} parent=51 // pred_region
          %353 = dma.done [#allocation11], 16
        $region76: #{lpg_transformer_forward.15} parent=51 // pred_fallthru
          _
        %p354 = scmp.lt.s32.totalorder %s23, 7
        %s355 = scalar_select %p354, %s23, 7
        %s356 = scalar_lea.vmem %s0, %s355
        %p357 = pneg %p44
        %p358 = pneg %p41
        %p359 = scmp.lt.s32.totalorder %s23, 7
        %s360 = scalar_select %p359, %s23, 7
        %s361 = scalar_lea.vmem %s1, %s360
        %p362 = pneg %p70
        %p363 = pneg %p67
        %p364 = pneg %p91
        %p365 = pneg %p88
        %p366 = pneg %p112
        %p367 = pneg %p109
        %p368 = pneg %p133
        %p369 = pneg %p130
        %p370 = pneg %p154
        %p371 = pneg %p151
        %p372 = pneg %p175
        %p373 = pneg %p172
        %p374 = pneg %p196
        %p375 = pneg %p193
        %p376 = pneg %p222
        %p377 = pneg %p219
        %p378 = scmp.lt.s32.totalorder %s23, 7
        %s379 = scalar_select %p378, %s23, 7
        %s380 = scalar_lea.vmem %s8, %s379
        %p381 = scmp.lt.s32.totalorder %s23, 7
        %s382 = scalar_select %p381, %s23, 7
        %s383 = scalar_lea.vmem %s0, %s382
        %p384 = scmp.lt.s32.totalorder %s23, 7
        %s385 = scalar_select %p384, %s23, 7
        %s386 = scalar_lea.vmem %s1, %s385
        %p387 = scmp.lt.s32.totalorder %s23, 7
        %s388 = scalar_select %p387, %s23, 7
        %s389 = scalar_lea.vmem %s8, %s388
        %v391 = vld [vmem:[%s383] sm:$0x1]
        %v392 = vunpack.c.l.bf16 %v391
        %v393 = vld [vmem:[%s386] sm:$0x1]
        %v395 = vpack.i.b16 %v393, %v393
        %v397 = vlaneseq
        %v398 = vshrl.u32 %v397, 7
        %v399 = vsub.s32 0, %v398
        %v400 = vrot.slane %v395, %v399
        %v401 = vld [vmem:[#allocation2] sm:$0xf]
        %v402 = vld [vmem:[#allocation2 + $0x4] sm:$0xf]
        %v403 = vld [vmem:[#allocation2 + $0x8] sm:$0xf]
        %v404 = vld [vmem:[#allocation2 + $0xc] sm:$0xf]
        %v405 = vld [vmem:[#allocation2 + $0x10] sm:$0xf]
        %v406 = vld [vmem:[#allocation2 + $0x14] sm:$0xf]
        %v407 = vld [vmem:[#allocation2 + $0x18] sm:$0xf]
        %v408 = vld [vmem:[#allocation2 + $0x1c] sm:$0xf]
        %v409 = vld [vmem:[#allocation2 + $0x20] sm:$0xf]
        %v410 = vld [vmem:[#allocation2 + $0x24] sm:$0xf]
        %v411 = vld [vmem:[#allocation2 + $0x28] sm:$0xf]
        %v412 = vld [vmem:[#allocation2 + $0x2c] sm:$0xf]
        %v413 = vld [vmem:[#allocation2 + $0x30] sm:$0xf]
        %v414 = vld [vmem:[#allocation2 + $0x34] sm:$0xf]
        %v415 = vld [vmem:[#allocation2 + $0x38] sm:$0xf]
        %v416 = vld [vmem:[#allocation2 + $0x3c] sm:$0xf]
        %v417 = vld [vmem:[#allocation4] sm:$0x1]
        %v419 = vlaneseq
        %v420 = vshrl.u32 %v419, 7
        %v421 = vsub.s32 0, %v420
        %v422 = vrot.slane %v417, %v421
        %v440 = vunpack.c.l.b16 %v401
        %v441 = vunpack.c.l.b16 %v402
        %v442 = vunpack.c.l.b16 %v403
        %v443 = vunpack.c.l.b16 %v404
        %v444 = vunpack.c.l.b16 %v405
        %v445 = vunpack.c.l.b16 %v406
        %v446 = vunpack.c.l.b16 %v407
        %v447 = vunpack.c.l.b16 %v408
        %v448 = vunpack.c.l.b16 %v409
        %v449 = vunpack.c.l.b16 %v410
        %v450 = vunpack.c.l.b16 %v411
        %v451 = vunpack.c.l.b16 %v412
        %v452 = vunpack.c.l.b16 %v413
        %v453 = vunpack.c.l.b16 %v414
        %v454 = vunpack.c.l.b16 %v415
        %v455 = vunpack.c.l.b16 %v416
        %v456 = vpack.c.b16 %v441, %v440
        %v457 = vpack.c.b16 %v443, %v442
        %v458 = vpack.c.b16 %v445, %v444
        %v459 = vpack.c.b16 %v447, %v446
        %v460 = vpack.c.b16 %v449, %v448
        %v461 = vpack.c.b16 %v451, %v450
        %v462 = vpack.c.b16 %v453, %v452
        %v463 = vpack.c.b16 %v455, %v454
        %472 = vmatprep.subr.bf16.mxu0 0
        %473 = vmatpush1.bf16.msra.mxu0 %v463
        %474 = vmatprep.subr.bf16.mxu0 0
        %475 = vmatpush1.bf16.msra.mxu0 %v462
        %476 = vmatprep.subr.bf16.mxu0 0
        %477 = vmatpush1.bf16.msra.mxu0 %v461
        %478 = vmatprep.subr.bf16.mxu0 0
        %479 = vmatpush1.bf16.msra.mxu0 %v460
        %480 = vmatprep.subr.bf16.mxu0 0
        %481 = vmatpush1.bf16.msra.mxu0 %v459
        %482 = vmatprep.subr.bf16.mxu0 0
        %483 = vmatpush1.bf16.msra.mxu0 %v458
        %484 = vmatprep.subr.bf16.mxu0 0
        %485 = vmatpush1.bf16.msra.mxu0 %v457
        %486 = vmatprep.subr.bf16.mxu0 0
        %487 = vmatpush1.bf16.msra.mxu0 %v456
        %488 = vmatprep.subr.bf16.mxu0 0
        %489 = vmatpush2.bf16.msra.mxu0 0
        %490 = vmatprep.subr.bf16.mxu0 0
        %491 = vmatpush2.bf16.msra.mxu0 0
        %492 = vmatprep.subr.bf16.mxu0 0
        %493 = vmatpush2.bf16.msra.mxu0 0
        %494 = vmatprep.subr.bf16.mxu0 0
        %495 = vmatpush2.bf16.msra.mxu0 0
        %496 = vmatprep.subr.bf16.mxu0 0
        %497 = vmatpush2.bf16.msra.mxu0 0
        %498 = vmatprep.subr.bf16.mxu0 0
        %499 = vmatpush2.bf16.msra.mxu0 0
        %500 = vmatprep.subr.bf16.mxu0 0
        %501 = vmatpush2.bf16.msra.mxu0 0
        %502 = vmatprep.subr.bf16.mxu0 0
        %503 = vmatpush2.bf16.msra.mxu0 0
        %504 = vmatprep.mubr.bf16.mxu0 0
        %505 = vmatmul.mubr.bf16.gmra.mxu0 %v400
        %v506 = vpop.f32.mrf.mxu0
        %v507 = vadd.f32 %v422, %v506
        %v508 = vpop.f32.mrf.mxu0
        %v509 = vpop.f32.mrf.mxu0
        %v510 = vpop.f32.mrf.mxu0
        %511 = vdwg.mxu0
        %v512 = vpack.c.bf16 %v507, %v507
        %v513 = vld [vmem:[#allocation6] sm:$0xf]
        %v514 = vld [vmem:[#allocation6 + $0x4] sm:$0xf]
        %v515 = vld [vmem:[#allocation6 + $0x8] sm:$0xf]
        %v516 = vld [vmem:[#allocation6 + $0xc] sm:$0xf]
        %v517 = vld [vmem:[#allocation6 + $0x10] sm:$0xf]
        %v518 = vld [vmem:[#allocation6 + $0x14] sm:$0xf]
        %v519 = vld [vmem:[#allocation6 + $0x18] sm:$0xf]
        %v520 = vld [vmem:[#allocation6 + $0x1c] sm:$0xf]
        %v521 = vld [vmem:[#allocation6 + $0x20] sm:$0xf]
        %v522 = vld [vmem:[#allocation6 + $0x24] sm:$0xf]
        %v523 = vld [vmem:[#allocation6 + $0x28] sm:$0xf]
        %v524 = vld [vmem:[#allocation6 + $0x2c] sm:$0xf]
        %v525 = vld [vmem:[#allocation6 + $0x30] sm:$0xf]
        %v526 = vld [vmem:[#allocation6 + $0x34] sm:$0xf]
        %v527 = vld [vmem:[#allocation6 + $0x38] sm:$0xf]
        %v528 = vld [vmem:[#allocation6 + $0x3c] sm:$0xf]
        %v529 = vld [vmem:[#allocation7] sm:$0x1]
        %v531 = vlaneseq
        %v532 = vshrl.u32 %v531, 7
        %v533 = vsub.s32 0, %v532
        %v534 = vrot.slane %v529, %v533
        %v552 = vunpack.c.l.b16 %v513
        %v553 = vunpack.c.l.b16 %v514
        %v554 = vunpack.c.l.b16 %v515
        %v555 = vunpack.c.l.b16 %v516
        %v556 = vunpack.c.l.b16 %v517
        %v557 = vunpack.c.l.b16 %v518
        %v558 = vunpack.c.l.b16 %v519
        %v559 = vunpack.c.l.b16 %v520
        %v560 = vunpack.c.l.b16 %v521
        %v561 = vunpack.c.l.b16 %v522
        %v562 = vunpack.c.l.b16 %v523
        %v563 = vunpack.c.l.b16 %v524
        %v564 = vunpack.c.l.b16 %v525
        %v565 = vunpack.c.l.b16 %v526
        %v566 = vunpack.c.l.b16 %v527
        %v567 = vunpack.c.l.b16 %v528
        %v568 = vpack.c.b16 %v553, %v552
        %v569 = vpack.c.b16 %v555, %v554
        %v570 = vpack.c.b16 %v557, %v556
        %v571 = vpack.c.b16 %v559, %v558
        %v572 = vpack.c.b16 %v561, %v560
        %v573 = vpack.c.b16 %v563, %v562
        %v574 = vpack.c.b16 %v565, %v564
        %v575 = vpack.c.b16 %v567, %v566
        %584 = vmatprep.subr.bf16.mxu0 0
        %585 = vmatpush1.bf16.msra.mxu0 %v575
        %586 = vmatprep.subr.bf16.mxu0 0
        %587 = vmatpush1.bf16.msra.mxu0 %v574
        %588 = vmatprep.subr.bf16.mxu0 0
        %589 = vmatpush1.bf16.msra.mxu0 %v573
        %590 = vmatprep.subr.bf16.mxu0 0
        %591 = vmatpush1.bf16.msra.mxu0 %v572
        %592 = vmatprep.subr.bf16.mxu0 0
        %593 = vmatpush1.bf16.msra.mxu0 %v571
        %594 = vmatprep.subr.bf16.mxu0 0
        %595 = vmatpush1.bf16.msra.mxu0 %v570
        %596 = vmatprep.subr.bf16.mxu0 0
        %597 = vmatpush1.bf16.msra.mxu0 %v569
        %598 = vmatprep.subr.bf16.mxu0 0
        %599 = vmatpush1.bf16.msra.mxu0 %v568
        %600 = vmatprep.subr.bf16.mxu0 0
        %601 = vmatpush2.bf16.msra.mxu0 0
        %602 = vmatprep.subr.bf16.mxu0 0
        %603 = vmatpush2.bf16.msra.mxu0 0
        %604 = vmatprep.subr.bf16.mxu0 0
        %605 = vmatpush2.bf16.msra.mxu0 0
        %606 = vmatprep.subr.bf16.mxu0 0
        %607 = vmatpush2.bf16.msra.mxu0 0
        %608 = vmatprep.subr.bf16.mxu0 0
        %609 = vmatpush2.bf16.msra.mxu0 0
        %610 = vmatprep.subr.bf16.mxu0 0
        %611 = vmatpush2.bf16.msra.mxu0 0
        %612 = vmatprep.subr.bf16.mxu0 0
        %613 = vmatpush2.bf16.msra.mxu0 0
        %614 = vmatprep.subr.bf16.mxu0 0
        %615 = vmatpush2.bf16.msra.mxu0 0
        %616 = vmatprep.mubr.bf16.mxu0 0
        %617 = vmatmul.mubr.bf16.gmra.mxu0 %v512
        %v618 = vpop.f32.mrf.mxu0
        %v619 = vadd.f32 %v534, %v618
        %v620 = vpop.f32.mrf.mxu0
        %v621 = vpop.f32.mrf.mxu0
        %v622 = vpop.f32.mrf.mxu0
        %623 = vdwg.mxu0
        %v624 = vadd.f32 %v392, %v619
        %v625 = vld [vmem:[#allocation9] sm:$0x1]
        %v626 = vld [vmem:[#allocation10] sm:$0x1]
        %vm627 = vcmask 1040384
        %v628 = vsel %vm627, %v624, 0.0
        %629 = vadd.xlane.f32.xlu0 %v628
        %v630 = vpop.xlane.xlu0 %629
        %v631 = vmul.f32 %v630, 0.03125
        %v632 = vlaneseq
        %v633 = vand.u32 %v632, 127
        %vm634 = vcmp.lt.s32.totalorder %v633, 32
        %v635 = vsub.f32 %v624, %v631
        %v636 = vsel %vm634, %v635, 0.0
        %v637 = vmul.f32 %v636, %v636
        %v638 = vsel %vm627, %v637, 0.0
        %639 = vadd.xlane.f32.xlu0 %v638
        %v640 = vpop.xlane.xlu0 %639
        %v641 = vmul.f32 %v640, 0.03125
        %v642 = vadd.f32 %v641, 1e-05
        %v643 = vrsqrt.pop %v642
        %v644 = vmul.f32 %v636, %v643
        %v645 = vmul.f32 %v644, %v625
        %v646 = vadd.f32 %v645, %v626
        %v647 = vpack.c.bf16 %v646, %v646
        %vm648 = vcmask 1040384
        %vm649 = vsmask.f32 256
        %vm650 = vmand %vm648, %vm649
        %v651 = vld [vmem:[%s389] sm:$0x1]
        %v652 = vsel %vm650, %v647, %v651
        %653 = vst [vmem:[%s389] sm:$0x1] %v652
        %p654 = scmp.lt.s32.totalorder %s23, 7
        %s655 = scalar_select %p654, %s23, 7
        %s656 = scalar_lea.vmem %s8, %s655
        // Predicated region
        $region77: #{lpg_transformer_forward.15} parent=51 // pred_check
          %p657 = pneg %p219
        $region78: #{lpg_transformer_forward.15} parent=51 // pred_check_branch
          %659 = sbr.rel (%p657) target = $region80
        $region79: #{lpg_transformer_forward.15} parent=51 // pred_region
          _
        $region80: #{lpg_transformer_forward.15} parent=51 // pred_fallthru
          _
      $region52: #{lpg_transformer_forward.15} parent=5 // pred_fallthru
        _
      %p660 = scmp.le.s32.totalorder 2, %s18
      // Predicated region
      $region81: #{lpg_transformer_forward.15} parent=5 // pred_check
        %p661 = pneg %p660
      $region82: #{lpg_transformer_forward.15} parent=5 // pred_check_branch
        %663 = sbr.rel (%p661) target = $region84
      $region83: #{lpg_transformer_forward.15} parent=5 // pred_region
        %s664 = ssub.s32 %s18, 2
        // Predicated region
        $region85: #{lpg_transformer_forward.15} parent=83 // pred_check
          %p665 = pneg %p225
        $region86: #{lpg_transformer_forward.15} parent=83 // pred_check_branch
          %667 = sbr.rel (%p665) target = $region88
        $region87: #{lpg_transformer_forward.15} parent=83 // pred_region
          %p668 = scmp.lt.s32.totalorder %s24, 7
          %s669 = scalar_select %p668, %s24, 7
          %s670 = scalar_lea.vmem %s8, %s669
        $region88: #{lpg_transformer_forward.15} parent=83 // pred_fallthru
          _
      $region84: #{lpg_transformer_forward.15} parent=5 // pred_fallthru
        _
    $region6: #{lpg_transformer_forward.15} parent=1 // loop_footer
      %s22 = sadd.s32 1, %s18
    $region7: #{lpg_transformer_forward.15} parent=1 // loop_footer_branch
      %17 = sbr.rel target = $region3
    $region8: #{lpg_transformer_forward.15} parent=1 // loop_exit
      _
    %671 = vsyncpa [#allocation3], 1
    %s672 = scalar_lea.sflag [#allocation3], 1
    %673 = vsyncpa %s672, 1
    %674 = vsyncpa [#allocation5], 1
    %675 = vsyncpa [#allocation8], 1
    %676 = vsyncpa [#allocation11], 1

// kernel: lpg_transformer_forward.20
$region0: #{lpg_transformer_forward.20}
  #allocation0 [shape = 'u32[]', space=smem, size = 0x4, offset = 0x4, fixed_abs, tag = 'smem constant byte address 0x4 - core index']
  #allocation1 [shape = 'u32[144,128]{1,0:T(1,128)}', space=vmem, size = 0x12000, scoped, tag = 'internal scratch']
  %s0 = inlined_call_operand.vmem [shape: bf16[2,8,128], index: 0, kind: input, shape index: {}]
  %s1 = inlined_call_operand.hbm [shape: bf16[128,384], index: 1, kind: input, shape index: {}]
  %s2 = inlined_call_operand.hbm [shape: f32[1,384], index: 2, kind: input, shape index: {}]
  %s3 = inlined_call_operand.hbm [shape: bf16[128,128], index: 3, kind: input, shape index: {}]
  %s4 = inlined_call_operand.hbm [shape: f32[1,128], index: 4, kind: input, shape index: {}]
  %s5 = inlined_call_operand.vmem [shape: f32[2,1,8], index: 5, kind: input, shape index: {}]
  %s6 = inlined_call_operand.hbm [shape: f32[1,128], index: 6, kind: input, shape index: {}]
  %s7 = inlined_call_operand.hbm [shape: f32[1,128], index: 7, kind: input, shape index: {}]
  %s8 = inlined_call_operand.vmem [shape: bf16[2,8,128], index: 8, kind: output, shape index: {}]
  %s9 = sld [smem:[#allocation0]]
  $region89: #{lpg_transformer_forward.20} parent=0
    _
  %s11 = ssub.s32 1, %s9
  %s12 = scalar_select 0, %s11, %s9
  $region1: #{lpg_transformer_forward.20} parent=0
    #allocation2 [shape = 'u8[98304]{0}', space=vmem, size = 0x18000, scoped, tag = 'input window, operand 1, single buffered']
    #allocation3 [shape = 's32[2]{0}', space=sflag, size = 0x8, scoped, tag = 'scoped memory for lpg_transformer_forward.20']
    #allocation4 [shape = 'u8[1536]{0}', space=vmem, size = 0x800, scoped, tag = 'input window, operand 2, single buffered']
    #allocation5 [shape = 's32[1]{0}', space=sflag, size = 0x4, scoped, tag = 'scoped memory for lpg_transformer_forward.20']
    #allocation6 [shape = 'u8[32768]{0}', space=vmem, size = 0x8000, scoped, tag = 'input window, operand 3, single buffered']
    #allocation7 [shape = 'u8[512]{0}', space=vmem, size = 0x400, scoped, tag = 'input window, operand 4, single buffered']
    #allocation8 [shape = 's32[1]{0}', space=sflag, size = 0x4, scoped, tag = 'scoped memory for lpg_transformer_forward.20']
    #allocation9 [shape = 'u8[512]{0}', space=vmem, size = 0x400, scoped, tag = 'input window, operand 6, single buffered']
    #allocation10 [shape = 'u8[512]{0}', space=vmem, size = 0x400, scoped, tag = 'input window, operand 7, single buffered']
    #allocation11 [shape = 's32[1]{0}', space=sflag, size = 0x4, scoped, tag = 'scoped memory for lpg_transformer_forward.20']
    %13 = vsyncpa [#allocation3], 0
    %14 = vsyncpa [#allocation5], 0
    %15 = vsyncpa [#allocation8], 0
    %16 = vsyncpa [#allocation11], 0
    loop: start=0, step=1, limit=4
    $region2: #{lpg_transformer_forward.20} parent=1 // loop_pre_header
      _
    $region3: #{lpg_transformer_forward.20} parent=1 // loop_header
      %s18 = sphi 0, %s22
      %p19 = scmp.ge.s32.totalorder %s18, 4
      %s28 = sphi 0, %s30
      %s31 = sphi 0, %s28
      %s32 = sphi 0, %s31
      %s48 = sphi 0, %s32
      %s52 = sphi 0, %s52
      %s54 = sphi 0, %s52
      %s55 = sphi 0, %s54
      %s69 = sphi 0, %s55
      %s73 = sphi 0, %s73
      %s75 = sphi 0, %s73
      %s76 = sphi 0, %s75
      %s90 = sphi 0, %s76
      %s94 = sphi 0, %s94
      %s96 = sphi 0, %s94
      %s97 = sphi 0, %s96
      %s111 = sphi 0, %s97
      %s115 = sphi 0, %s115
      %s117 = sphi 0, %s115
      %s118 = sphi 0, %s117
      %s132 = sphi 0, %s118
      %s138 = sphi 0, %s140
      %s141 = sphi 0, %s138
      %s142 = sphi 0, %s141
      %s158 = sphi 0, %s142
      %s162 = sphi 0, %s162
      %s164 = sphi 0, %s162
      %s165 = sphi 0, %s164
      %s179 = sphi 0, %s165
      %s183 = sphi 0, %s183
      %s185 = sphi 0, %s183
      %s186 = sphi 0, %s185
      %s200 = sphi 0, %s186
      %s206 = sphi 0, %s208
      %s209 = sphi 0, %s206
      %s210 = sphi 0, %s209
      %s226 = sphi 0, %s210
    $region4: #{lpg_transformer_forward.20} parent=1 // loop_header_branch
      %21 = sbr.rel (%p19) target = $region8
    $region5: #{lpg_transformer_forward.20} parent=1 // loop_body
      %s23 = ssub.s32 %s18, 1
      %s24 = ssub.s32 %s18, 2
      %s25 = sadd.s32 %s18, 1
      %s26 = ssub.s32 %s18, %s25
      %p27 = scmp.eq.s32.totalorder %s26, 0
      %s29 = sadd.s32 %s28, 1
      %s30 = scalar_select %p27, %s28, %s29
      %p33 = pneg %p27
      %p34 = scmp.eq.s32.totalorder %s18, 1
      %p35 = por %p33, %p34
      %p36 = scmp.ne.s32.totalorder %s28, %s31
      %p37 = scmp.eq.s32.totalorder %s18, 0
      %p38 = por %p36, %p37
      %p39 = scmp.ne.s32.totalorder %s28, %s31
      %p40 = scmp.eq.s32.totalorder %s23, 1
      %p41 = por %p39, %p40
      %p42 = scmp.ne.s32.totalorder %s31, %s32
      %p43 = scmp.eq.s32.totalorder %s23, 0
      %p44 = por %p42, %p43
      %p45 = scmp.ne.s32.totalorder %s31, %s32
      %p46 = scmp.eq.s32.totalorder %s24, 1
      %p47 = por %p45, %p46
      %p49 = scmp.ne.s32.totalorder %s32, %s48
      %p50 = scmp.eq.s32.totalorder %s24, 0
      %p51 = por %p49, %p50
      %s53 = sadd.s32 %s52, 1
      %p56 = scmp.eq.s32.totalorder %s18, 1
      %p57 = scmp.ne.s32.totalorder %s52, %s54
      %p58 = scmp.eq.s32.totalorder %s18, 0
      %p59 = por %p57, %p58
      %p60 = scmp.ne.s32.totalorder %s52, %s54
      %p61 = scmp.eq.s32.totalorder %s23, 1
      %p62 = por %p60, %p61
      %p63 = scmp.ne.s32.totalorder %s54, %s55
      %p64 = scmp.eq.s32.totalorder %s23, 0
      %p65 = por %p63, %p64
      %p66 = scmp.ne.s32.totalorder %s54, %s55
      %p67 = scmp.eq.s32.totalorder %s24, 1
      %p68 = por %p66, %p67
      %p70 = scmp.ne.s32.totalorder %s55, %s69
      %p71 = scmp.eq.s32.totalorder %s24, 0
      %p72 = por %p70, %p71
      %s74 = sadd.s32 %s73, 1
      %p77 = scmp.eq.s32.totalorder %s18, 1
      %p78 = scmp.ne.s32.totalorder %s73, %s75
      %p79 = scmp.eq.s32.totalorder %s18, 0
      %p80 = por %p78, %p79
      %p81 = scmp.ne.s32.totalorder %s73, %s75
      %p82 = scmp.eq.s32.totalorder %s23, 1
      %p83 = por %p81, %p82
      %p84 = scmp.ne.s32.totalorder %s75, %s76
      %p85 = scmp.eq.s32.totalorder %s23, 0
      %p86 = por %p84, %p85
      %p87 = scmp.ne.s32.totalorder %s75, %s76
      %p88 = scmp.eq.s32.totalorder %s24, 1
      %p89 = por %p87, %p88
      %p91 = scmp.ne.s32.totalorder %s76, %s90
      %p92 = scmp.eq.s32.totalorder %s24, 0
      %p93 = por %p91, %p92
      %s95 = sadd.s32 %s94, 1
      %p98 = scmp.eq.s32.totalorder %s18, 1
      %p99 = scmp.ne.s32.totalorder %s94, %s96
      %p100 = scmp.eq.s32.totalorder %s18, 0
      %p101 = por %p99, %p100
      %p102 = scmp.ne.s32.totalorder %s94, %s96
      %p103 = scmp.eq.s32.totalorder %s23, 1
      %p104 = por %p102, %p103
      %p105 = scmp.ne.s32.totalorder %s96, %s97
      %p106 = scmp.eq.s32.totalorder %s23, 0
      %p107 = por %p105, %p106
      %p108 = scmp.ne.s32.totalorder %s96, %s97
      %p109 = scmp.eq.s32.totalorder %s24, 1
      %p110 = por %p108, %p109
      %p112 = scmp.ne.s32.totalorder %s97, %s111
      %p113 = scmp.eq.s32.totalorder %s24, 0
      %p114 = por %p112, %p113
      %s116 = sadd.s32 %s115, 1
      %p119 = scmp.eq.s32.totalorder %s18, 1
      %p120 = scmp.ne.s32.totalorder %s115, %s117
      %p121 = scmp.eq.s32.totalorder %s18, 0
      %p122 = por %p120, %p121
      %p123 = scmp.ne.s32.totalorder %s115, %s117
      %p124 = scmp.eq.s32.totalorder %s23, 1
      %p125 = por %p123, %p124
      %p126 = scmp.ne.s32.totalorder %s117, %s118
      %p127 = scmp.eq.s32.totalorder %s23, 0
      %p128 = por %p126, %p127
      %p129 = scmp.ne.s32.totalorder %s117, %s118
      %p130 = scmp.eq.s32.totalorder %s24, 1
      %p131 = por %p129, %p130
      %p133 = scmp.ne.s32.totalorder %s118, %s132
      %p134 = scmp.eq.s32.totalorder %s24, 0
      %p135 = por %p133, %p134
      %s136 = ssub.s32 %s18, %s25
      %p137 = scmp.eq.s32.totalorder %s136, 0
      %s139 = sadd.s32 %s138, 1
      %s140 = scalar_select %p137, %s138, %s139
      %p143 = pneg %p137
      %p144 = scmp.eq.s32.totalorder %s18, 1
      %p145 = por %p143, %p144
      %p146 = scmp.ne.s32.totalorder %s138, %s141
      %p147 = scmp.eq.s32.totalorder %s18, 0
      %p148 = por %p146, %p147
      %p149 = scmp.ne.s32.totalorder %s138, %s141
      %p150 = scmp.eq.s32.totalorder %s23, 1
      %p151 = por %p149, %p150
      %p152 = scmp.ne.s32.totalorder %s141, %s142
      %p153 = scmp.eq.s32.totalorder %s23, 0
      %p154 = por %p152, %p153
      %p155 = scmp.ne.s32.totalorder %s141, %s142
      %p156 = scmp.eq.s32.totalorder %s24, 1
      %p157 = por %p155, %p156
      %p159 = scmp.ne.s32.totalorder %s142, %s158
      %p160 = scmp.eq.s32.totalorder %s24, 0
      %p161 = por %p159, %p160
      %s163 = sadd.s32 %s162, 1
      %p166 = scmp.eq.s32.totalorder %s18, 1
      %p167 = scmp.ne.s32.totalorder %s162, %s164
      %p168 = scmp.eq.s32.totalorder %s18, 0
      %p169 = por %p167, %p168
      %p170 = scmp.ne.s32.totalorder %s162, %s164
      %p171 = scmp.eq.s32.totalorder %s23, 1
      %p172 = por %p170, %p171
      %p173 = scmp.ne.s32.totalorder %s164, %s165
      %p174 = scmp.eq.s32.totalorder %s23, 0
      %p175 = por %p173, %p174
      %p176 = scmp.ne.s32.totalorder %s164, %s165
      %p177 = scmp.eq.s32.totalorder %s24, 1
      %p178 = por %p176, %p177
      %p180 = scmp.ne.s32.totalorder %s165, %s179
      %p181 = scmp.eq.s32.totalorder %s24, 0
      %p182 = por %p180, %p181
      %s184 = sadd.s32 %s183, 1
      %p187 = scmp.eq.s32.totalorder %s18, 1
      %p188 = scmp.ne.s32.totalorder %s183, %s185
      %p189 = scmp.eq.s32.totalorder %s18, 0
      %p190 = por %p188, %p189
      %p191 = scmp.ne.s32.totalorder %s183, %s185
      %p192 = scmp.eq.s32.totalorder %s23, 1
      %p193 = por %p191, %p192
      %p194 = scmp.ne.s32.totalorder %s185, %s186
      %p195 = scmp.eq.s32.totalorder %s23, 0
      %p196 = por %p194, %p195
      %p197 = scmp.ne.s32.totalorder %s185, %s186
      %p198 = scmp.eq.s32.totalorder %s24, 1
      %p199 = por %p197, %p198
      %p201 = scmp.ne.s32.totalorder %s186, %s200
      %p202 = scmp.eq.s32.totalorder %s24, 0
      %p203 = por %p201, %p202
      %s204 = ssub.s32 %s18, %s25
      %p205 = scmp.eq.s32.totalorder %s204, 0
      %s207 = sadd.s32 %s206, 1
      %s208 = scalar_select %p205, %s206, %s207
      %p211 = pneg %p205
      %p212 = scmp.eq.s32.totalorder %s18, 1
      %p213 = por %p211, %p212
      %p214 = scmp.ne.s32.totalorder %s206, %s209
      %p215 = scmp.eq.s32.totalorder %s18, 0
      %p216 = por %p214, %p215
      %p217 = scmp.ne.s32.totalorder %s206, %s209
      %p218 = scmp.eq.s32.totalorder %s23, 1
      %p219 = por %p217, %p218
      %p220 = scmp.ne.s32.totalorder %s209, %s210
      %p221 = scmp.eq.s32.totalorder %s23, 0
      %p222 = por %p220, %p221
      %p223 = scmp.ne.s32.totalorder %s209, %s210
      %p224 = scmp.eq.s32.totalorder %s24, 1
      %p225 = por %p223, %p224
      %p227 = scmp.ne.s32.totalorder %s210, %s226
      %p228 = scmp.eq.s32.totalorder %s24, 0
      %p229 = por %p227, %p228
      %p230 = scmp.le.s32.totalorder 1, %s18
      %p231 = scmp.lt.s32.totalorder %s18, 3
      %p232 = pnand %p230, %p231
      %p233 = pneg %p232
      // Predicated region
      $region9: #{lpg_transformer_forward.20} parent=5 // pred_check
        _
      $region10: #{lpg_transformer_forward.20} parent=5 // pred_check_branch
        %235 = sbr.rel (%p232) target = $region12
      $region11: #{lpg_transformer_forward.20} parent=5 // pred_region
        %s236 = ssub.s32 %s18, 1
        // Predicated region
        $region13: #{lpg_transformer_forward.20} parent=11 // pred_check
          %p237 = pneg %p65
        $region14: #{lpg_transformer_forward.20} parent=11 // pred_check_branch
          %239 = sbr.rel (%p237) target = $region16
        $region15: #{lpg_transformer_forward.20} parent=11 // pred_region
          %s241 = ssub.s32 3072, 3072
          %242 = vsyncadd [#allocation3], %s241
          %s243 = sshll.u32 [#allocation2], 4
          %s244 = int_to_ptr.vmem [resolvable:$true] %s243
          %249 = dma.hbm_to_vmem [thread:$0]  %s1, 3072, %s244, [#allocation3], 192, 192, 12
        $region16: #{lpg_transformer_forward.20} parent=11 // pred_fallthru
          _
        // Predicated region
        $region17: #{lpg_transformer_forward.20} parent=11 // pred_check
          %p250 = pneg %p86
        $region18: #{lpg_transformer_forward.20} parent=11 // pred_check_branch
          %252 = sbr.rel (%p250) target = $region20
        $region19: #{lpg_transformer_forward.20} parent=11 // pred_region
          %s254 = ssub.s32 48, 48
          %255 = vsyncadd [#allocation5], %s254
          %s257 = sshll.u32 [#allocation4], 4
          %s258 = int_to_ptr.vmem [resolvable:$true] %s257
          %260 = dma.hbm_to_vmem [thread:$0]  %s2, 48, %s258, [#allocation5]
        $region20: #{lpg_transformer_forward.20} parent=11 // pred_fallthru
          _
        // Predicated region
        $region21: #{lpg_transformer_forward.20} parent=11 // pred_check
          %p261 = pneg %p107
        $region22: #{lpg_transformer_forward.20} parent=11 // pred_check_branch
          %263 = sbr.rel (%p261) target = $region24
        $region23: #{lpg_transformer_forward.20} parent=11 // pred_region
          %s265 = ssub.s32 1024, 1024
          %266 = vsyncadd [#allocation5], %s265
          %s267 = sshll.u32 [#allocation6], 4
          %s268 = int_to_ptr.vmem [resolvable:$true] %s267
          %273 = dma.hbm_to_vmem [thread:$0]  %s3, 1024, %s268, [#allocation5], 64, 64, 4
        $region24: #{lpg_transformer_forward.20} parent=11 // pred_fallthru
          _
        // Predicated region
        $region25: #{lpg_transformer_forward.20} parent=11 // pred_check
          %p274 = pneg %p128
        $region26: #{lpg_transformer_forward.20} parent=11 // pred_check_branch
          %276 = sbr.rel (%p274) target = $region28
        $region27: #{lpg_transformer_forward.20} parent=11 // pred_region
          %s278 = ssub.s32 16, 16
          %279 = vsyncadd [#allocation8], %s278
          %s281 = sshll.u32 [#allocation7], 4
          %s282 = int_to_ptr.vmem [resolvable:$true] %s281
          %284 = dma.hbm_to_vmem [thread:$0]  %s4, 16, %s282, [#allocation8]
        $region28: #{lpg_transformer_forward.20} parent=11 // pred_fallthru
          _
        // Predicated region
        $region29: #{lpg_transformer_forward.20} parent=11 // pred_check
          %p285 = pneg %p175
        $region30: #{lpg_transformer_forward.20} parent=11 // pred_check_branch
          %287 = sbr.rel (%p285) target = $region32
        $region31: #{lpg_transformer_forward.20} parent=11 // pred_region
          %s289 = ssub.s32 16, 16
          %290 = vsyncadd [#allocation8], %s289
          %s292 = sshll.u32 [#allocation9], 4
          %s293 = int_to_ptr.vmem [resolvable:$true] %s292
          %295 = dma.hbm_to_vmem [thread:$0]  %s6, 16, %s293, [#allocation8]
        $region32: #{lpg_transformer_forward.20} parent=11 // pred_fallthru
          _
        // Predicated region
        $region33: #{lpg_transformer_forward.20} parent=11 // pred_check
          %p296 = pneg %p196
        $region34: #{lpg_transformer_forward.20} parent=11 // pred_check_branch
          %298 = sbr.rel (%p296) target = $region36
        $region35: #{lpg_transformer_forward.20} parent=11 // pred_region
          %s300 = ssub.s32 16, 16
          %301 = vsyncadd [#allocation11], %s300
          %s303 = sshll.u32 [#allocation10], 4
          %s304 = int_to_ptr.vmem [resolvable:$true] %s303
          %306 = dma.hbm_to_vmem [thread:$0]  %s7, 16, %s304, [#allocation11]
        $region36: #{lpg_transformer_forward.20} parent=11 // pred_fallthru
          _
      $region12: #{lpg_transformer_forward.20} parent=5 // pred_fallthru
        _
      %p307 = scmp.lt.s32.totalorder %s18, 2
      // Predicated region
      $region37: #{lpg_transformer_forward.20} parent=5 // pred_check
        %p308 = pneg %p307
      $region38: #{lpg_transformer_forward.20} parent=5 // pred_check_branch
        %310 = sbr.rel (%p308) target = $region40
      $region39: #{lpg_transformer_forward.20} parent=5 // pred_region
        // Predicated region
        $region41: #{lpg_transformer_forward.20} parent=39 // pred_check
          %p311 = pneg %p38
        $region42: #{lpg_transformer_forward.20} parent=39 // pred_check_branch
          %313 = sbr.rel (%p311) target = $region44
        $region43: #{lpg_transformer_forward.20} parent=39 // pred_region
          %p314 = scmp.lt.s32.totalorder %s18, 1
          %s315 = scalar_select %p314, %s18, 1
          %s316 = smul.addr %s315, 4
          %s317 = scalar_lea.vmem %s0, %s316
        $region44: #{lpg_transformer_forward.20} parent=39 // pred_fallthru
          _
        // Predicated region
        $region45: #{lpg_transformer_forward.20} parent=39 // pred_check
          %p318 = pneg %p148
        $region46: #{lpg_transformer_forward.20} parent=39 // pred_check_branch
          %320 = sbr.rel (%p318) target = $region48
        $region47: #{lpg_transformer_forward.20} parent=39 // pred_region
          %p321 = scmp.lt.s32.totalorder %s18, 1
          %s322 = scalar_select %p321, %s18, 1
          %s323 = scalar_lea.vmem %s5, %s322
        $region48: #{lpg_transformer_forward.20} parent=39 // pred_fallthru
          _
      $region40: #{lpg_transformer_forward.20} parent=5 // pred_fallthru
        _
      %p324 = scmp.le.s32.totalorder 1, %s18
      %p325 = scmp.lt.s32.totalorder %s18, 3
      %p326 = pnand %p324, %p325
      %p327 = pneg %p326
      // Predicated region
      $region49: #{lpg_transformer_forward.20} parent=5 // pred_check
        _
      $region50: #{lpg_transformer_forward.20} parent=5 // pred_check_branch
        %329 = sbr.rel (%p326) target = $region52
      $region51: #{lpg_transformer_forward.20} parent=5 // pred_region
        %s330 = ssub.s32 %s18, 1
        // Predicated region
        $region53: #{lpg_transformer_forward.20} parent=51 // pred_check
          %p331 = pneg %p65
        $region54: #{lpg_transformer_forward.20} parent=51 // pred_check_branch
          %333 = sbr.rel (%p331) target = $region56
        $region55: #{lpg_transformer_forward.20} parent=51 // pred_region
          %334 = dma.done [#allocation3], 3072
        $region56: #{lpg_transformer_forward.20} parent=51 // pred_fallthru
          _
        // Predicated region
        $region57: #{lpg_transformer_forward.20} parent=51 // pred_check
          %p335 = pneg %p86
        $region58: #{lpg_transformer_forward.20} parent=51 // pred_check_branch
          %337 = sbr.rel (%p335) target = $region60
        $region59: #{lpg_transformer_forward.20} parent=51 // pred_region
          %338 = dma.done [#allocation5], 48
        $region60: #{lpg_transformer_forward.20} parent=51 // pred_fallthru
          _
        // Predicated region
        $region61: #{lpg_transformer_forward.20} parent=51 // pred_check
          %p339 = pneg %p107
        $region62: #{lpg_transformer_forward.20} parent=51 // pred_check_branch
          %341 = sbr.rel (%p339) target = $region64
        $region63: #{lpg_transformer_forward.20} parent=51 // pred_region
          %342 = dma.done [#allocation5], 1024
        $region64: #{lpg_transformer_forward.20} parent=51 // pred_fallthru
          _
        // Predicated region
        $region65: #{lpg_transformer_forward.20} parent=51 // pred_check
          %p343 = pneg %p128
        $region66: #{lpg_transformer_forward.20} parent=51 // pred_check_branch
          %345 = sbr.rel (%p343) target = $region68
        $region67: #{lpg_transformer_forward.20} parent=51 // pred_region
          %346 = dma.done [#allocation8], 16
        $region68: #{lpg_transformer_forward.20} parent=51 // pred_fallthru
          _
        // Predicated region
        $region69: #{lpg_transformer_forward.20} parent=51 // pred_check
          %p347 = pneg %p175
        $region70: #{lpg_transformer_forward.20} parent=51 // pred_check_branch
          %349 = sbr.rel (%p347) target = $region72
        $region71: #{lpg_transformer_forward.20} parent=51 // pred_region
          %350 = dma.done [#allocation8], 16
        $region72: #{lpg_transformer_forward.20} parent=51 // pred_fallthru
          _
        // Predicated region
        $region73: #{lpg_transformer_forward.20} parent=51 // pred_check
          %p351 = pneg %p196
        $region74: #{lpg_transformer_forward.20} parent=51 // pred_check_branch
          %353 = sbr.rel (%p351) target = $region76
        $region75: #{lpg_transformer_forward.20} parent=51 // pred_region
          %354 = dma.done [#allocation11], 16
        $region76: #{lpg_transformer_forward.20} parent=51 // pred_fallthru
          _
        %p355 = scmp.lt.s32.totalorder %s23, 1
        %s356 = scalar_select %p355, %s23, 1
        %s357 = smul.addr %s356, 4
        %s358 = scalar_lea.vmem %s0, %s357
        %p359 = pneg %p44
        %p360 = pneg %p41
        %p361 = pneg %p65
        %p362 = pneg %p62
        %p363 = pneg %p86
        %p364 = pneg %p83
        %p365 = pneg %p107
        %p366 = pneg %p104
        %p367 = pneg %p128
        %p368 = pneg %p125
        %p369 = scmp.lt.s32.totalorder %s23, 1
        %s370 = scalar_select %p369, %s23, 1
        %s371 = scalar_lea.vmem %s5, %s370
        %p372 = pneg %p154
        %p373 = pneg %p151
        %p374 = pneg %p175
        %p375 = pneg %p172
        %p376 = pneg %p196
        %p377 = pneg %p193
        %p378 = pneg %p222
        %p379 = pneg %p219
        %p380 = scmp.lt.s32.totalorder %s23, 1
        %s381 = scalar_select %p380, %s23, 1
        %s382 = smul.addr %s381, 4
        %s383 = scalar_lea.vmem %s8, %s382
        %p384 = scmp.lt.s32.totalorder %s23, 1
        %s385 = scalar_select %p384, %s23, 1
        %s386 = smul.addr %s385, 4
        %s387 = scalar_lea.vmem %s0, %s386
        %p388 = scmp.lt.s32.totalorder %s23, 1
        %s389 = scalar_select %p388, %s23, 1
        %s390 = scalar_lea.vmem %s5, %s389
        %p391 = scmp.lt.s32.totalorder %s23, 1
        %s392 = scalar_select %p391, %s23, 1
        %s393 = smul.addr %s392, 4
        %s394 = scalar_lea.vmem %s8, %s393
        %v396 = vld [vmem:[%s387] sm:$0xf]
        %v397 = vld [vmem:[#allocation2] sm:$0xff]
        %v398 = vld [vmem:[#allocation2 + $0x8] sm:$0xf]
        %v399 = vld [vmem:[#allocation2 + $0xc] sm:$0xff]
        %v400 = vld [vmem:[#allocation2 + $0x14] sm:$0xf]
        %v401 = vld [vmem:[#allocation2 + $0x18] sm:$0xff]
        %v402 = vld [vmem:[#allocation2 + $0x20] sm:$0xf]
        %v403 = vld [vmem:[#allocation2 + $0x24] sm:$0xff]
        %v404 = vld [vmem:[#allocation2 + $0x2c] sm:$0xf]
        %v405 = vld [vmem:[#allocation2 + $0x30] sm:$0xff]
        %v406 = vld [vmem:[#allocation2 + $0x38] sm:$0xf]
        %v407 = vld [vmem:[#allocation2 + $0x3c] sm:$0xff]
        %v408 = vld [vmem:[#allocation2 + $0x44] sm:$0xf]
        %v409 = vld [vmem:[#allocation2 + $0x48] sm:$0xff]
        %v410 = vld [vmem:[#allocation2 + $0x50] sm:$0xf]
        %v411 = vld [vmem:[#allocation2 + $0x54] sm:$0xff]
        %v412 = vld [vmem:[#allocation2 + $0x5c] sm:$0xf]
        %v413 = vld [vmem:[#allocation2 + $0x60] sm:$0xff]
        %v414 = vld [vmem:[#allocation2 + $0x68] sm:$0xf]
        %v415 = vld [vmem:[#allocation2 + $0x6c] sm:$0xff]
        %v416 = vld [vmem:[#allocation2 + $0x74] sm:$0xf]
        %v417 = vld [vmem:[#allocation2 + $0x78] sm:$0xff]
        %v418 = vld [vmem:[#allocation2 + $0x80] sm:$0xf]
        %v419 = vld [vmem:[#allocation2 + $0x84] sm:$0xff]
        %v420 = vld [vmem:[#allocation2 + $0x8c] sm:$0xf]
        %v421 = vld [vmem:[#allocation2 + $0x90] sm:$0xff]
        %v422 = vld [vmem:[#allocation2 + $0x98] sm:$0xf]
        %v423 = vld [vmem:[#allocation2 + $0x9c] sm:$0xff]
        %v424 = vld [vmem:[#allocation2 + $0xa4] sm:$0xf]
        %v425 = vld [vmem:[#allocation2 + $0xa8] sm:$0xff]
        %v426 = vld [vmem:[#allocation2 + $0xb0] sm:$0xf]
        %v427 = vld [vmem:[#allocation2 + $0xb4] sm:$0xff]
        %v428 = vld [vmem:[#allocation2 + $0xbc] sm:$0xf]
        %v429 = vld [vmem:[#allocation4] sm:$0x7]
        %v431 = vlaneseq
        %v432 = vshrl.u32 %v431, 7
        %v433 = vsub.s32 0, %v432
        %v434 = vrot.slane %v429, %v433
        %v435 = vlaneseq
        %v436 = vshrl.u32 %v435, 7
        %v437 = vsub.s32 1, %v436
        %v438 = vrot.slane %v429, %v437
        %v439 = vlaneseq
        %v440 = vshrl.u32 %v439, 7
        %v441 = vsub.s32 2, %v440
        %v442 = vrot.slane %v429, %v441
        %v478 = vunpack.c.l.b16 %v397
        %v479 = vunpack.c.h.b16 %v397
        %v480 = vunpack.c.l.b16 %v398
        %v481 = vunpack.c.l.b16 %v399
        %v482 = vunpack.c.h.b16 %v399
        %v483 = vunpack.c.l.b16 %v400
        %v484 = vunpack.c.l.b16 %v401
        %v485 = vunpack.c.h.b16 %v401
        %v486 = vunpack.c.l.b16 %v402
        %v487 = vunpack.c.l.b16 %v403
        %v488 = vunpack.c.h.b16 %v403
        %v489 = vunpack.c.l.b16 %v404
        %v490 = vunpack.c.l.b16 %v405
        %v491 = vunpack.c.h.b16 %v405
        %v492 = vunpack.c.l.b16 %v406
        %v493 = vunpack.c.l.b16 %v407
        %v494 = vunpack.c.h.b16 %v407
        %v495 = vunpack.c.l.b16 %v408
        %v496 = vunpack.c.l.b16 %v409
        %v497 = vunpack.c.h.b16 %v409
        %v498 = vunpack.c.l.b16 %v410
        %v499 = vunpack.c.l.b16 %v411
        %v500 = vunpack.c.h.b16 %v411
        %v501 = vunpack.c.l.b16 %v412
        %v502 = vunpack.c.l.b16 %v413
        %v503 = vunpack.c.h.b16 %v413
        %v504 = vunpack.c.l.b16 %v414
        %v505 = vunpack.c.l.b16 %v415
        %v506 = vunpack.c.h.b16 %v415
        %v507 = vunpack.c.l.b16 %v416
        %v508 = vunpack.c.l.b16 %v417
        %v509 = vunpack.c.h.b16 %v417
        %v510 = vunpack.c.l.b16 %v418
        %v511 = vunpack.c.l.b16 %v419
        %v512 = vunpack.c.h.b16 %v419
        %v513 = vunpack.c.l.b16 %v420
        %v514 = vunpack.c.l.b16 %v421
        %v515 = vunpack.c.h.b16 %v421
        %v516 = vunpack.c.l.b16 %v422
        %v517 = vunpack.c.l.b16 %v423
        %v518 = vunpack.c.h.b16 %v423
        %v519 = vunpack.c.l.b16 %v424
        %v520 = vunpack.c.l.b16 %v425
        %v521 = vunpack.c.h.b16 %v425
        %v522 = vunpack.c.l.b16 %v426
        %v523 = vunpack.c.l.b16 %v427
        %v524 = vunpack.c.h.b16 %v427
        %v525 = vunpack.c.l.b16 %v428
        %v526 = vpack.c.b16 %v481, %v478
        %v527 = vpack.c.b16 %v482, %v479
        %v528 = vpack.c.b16 %v483, %v480
        %v529 = vpack.c.b16 %v487, %v484
        %v530 = vpack.c.b16 %v488, %v485
        %v531 = vpack.c.b16 %v489, %v486
        %v532 = vpack.c.b16 %v493, %v490
        %v533 = vpack.c.b16 %v494, %v491
        %v534 = vpack.c.b16 %v495, %v492
        %v535 = vpack.c.b16 %v499, %v496
        %v536 = vpack.c.b16 %v500, %v497
        %v537 = vpack.c.b16 %v501, %v498
        %v538 = vpack.c.b16 %v505, %v502
        %v539 = vpack.c.b16 %v506, %v503
        %v540 = vpack.c.b16 %v507, %v504
        %v541 = vpack.c.b16 %v511, %v508
        %v542 = vpack.c.b16 %v512, %v509
        %v543 = vpack.c.b16 %v513, %v510
        %v544 = vpack.c.b16 %v517, %v514
        %v545 = vpack.c.b16 %v518, %v515
        %v546 = vpack.c.b16 %v519, %v516
        %v547 = vpack.c.b16 %v523, %v520
        %v548 = vpack.c.b16 %v524, %v521
        %v549 = vpack.c.b16 %v525, %v522
        %574 = vmatprep.subr.bf16.mxu0 %v548
        %575 = vmatpush1.bf16.msra.mxu0 %v547
        %576 = vmatprep.subr.bf16.mxu0 %v545
        %577 = vmatpush1.bf16.msra.mxu0 %v544
        %578 = vmatprep.subr.bf16.mxu0 %v542
        %579 = vmatpush1.bf16.msra.mxu0 %v541
        %580 = vmatprep.subr.bf16.mxu0 %v539
        %581 = vmatpush1.bf16.msra.mxu0 %v538
        %582 = vmatprep.subr.bf16.mxu0 %v536
        %583 = vmatpush1.bf16.msra.mxu0 %v535
        %584 = vmatprep.subr.bf16.mxu0 %v533
        %585 = vmatpush1.bf16.msra.mxu0 %v532
        %586 = vmatprep.subr.bf16.mxu0 %v530
        %587 = vmatpush1.bf16.msra.mxu0 %v529
        %588 = vmatprep.subr.bf16.mxu0 %v527
        %589 = vmatpush1.bf16.msra.mxu0 %v526
        %590 = vmatprep.subr.bf16.mxu0 0
        %591 = vmatpush2.bf16.msra.mxu0 0
        %592 = vmatprep.subr.bf16.mxu0 0
        %593 = vmatpush2.bf16.msra.mxu0 0
        %594 = vmatprep.subr.bf16.mxu0 0
        %595 = vmatpush2.bf16.msra.mxu0 0
        %596 = vmatprep.subr.bf16.mxu0 0
        %597 = vmatpush2.bf16.msra.mxu0 0
        %598 = vmatprep.subr.bf16.mxu0 0
        %599 = vmatpush2.bf16.msra.mxu0 0
        %600 = vmatprep.subr.bf16.mxu0 0
        %601 = vmatpush2.bf16.msra.mxu0 0
        %602 = vmatprep.subr.bf16.mxu0 0
        %603 = vmatpush2.bf16.msra.mxu0 0
        %604 = vmatprep.subr.bf16.mxu0 0
        %605 = vmatpush2.bf16.msra.mxu0 0
        %606 = vmatprep.mubr.bf16.mxu0 0
        %607 = vmatmul.mubr.bf16.gmra.mxu0 %v396
        %v608 = vpop.f32.mrf.mxu0
        %v609 = vadd.f32 %v434, %v608
        %v610 = vpop.f32.mrf.mxu0
        %v611 = vadd.f32 %v438, %v610
        %v612 = vpop.f32.mrf.mxu0
        %v613 = vpop.f32.mrf.mxu0
        %614 = vdwg.mxu0
        %615 = vmatprep.subr.bf16.mxu0 0
        %616 = vmatpush1.bf16.msra.mxu0 %v549
        %617 = vmatprep.subr.bf16.mxu0 0
        %618 = vmatpush1.bf16.msra.mxu0 %v546
        %619 = vmatprep.subr.bf16.mxu0 0
        %620 = vmatpush1.bf16.msra.mxu0 %v543
        %621 = vmatprep.subr.bf16.mxu0 0
        %622 = vmatpush1.bf16.msra.mxu0 %v540
        %623 = vmatprep.subr.bf16.mxu0 0
        %624 = vmatpush1.bf16.msra.mxu0 %v537
        %625 = vmatprep.subr.bf16.mxu0 0
        %626 = vmatpush1.bf16.msra.mxu0 %v534
        %627 = vmatprep.subr.bf16.mxu0 0
        %628 = vmatpush1.bf16.msra.mxu0 %v531
        %629 = vmatprep.subr.bf16.mxu0 0
        %630 = vmatpush1.bf16.msra.mxu0 %v528
        %631 = vmatprep.subr.bf16.mxu0 0
        %632 = vmatpush2.bf16.msra.mxu0 0
        %633 = vmatprep.subr.bf16.mxu0 0
        %634 = vmatpush2.bf16.msra.mxu0 0
        %635 = vmatprep.subr.bf16.mxu0 0
        %636 = vmatpush2.bf16.msra.mxu0 0
        %637 = vmatprep.subr.bf16.mxu0 0
        %638 = vmatpush2.bf16.msra.mxu0 0
        %639 = vmatprep.subr.bf16.mxu0 0
        %640 = vmatpush2.bf16.msra.mxu0 0
        %641 = vmatprep.subr.bf16.mxu0 0
        %642 = vmatpush2.bf16.msra.mxu0 0
        %643 = vmatprep.subr.bf16.mxu0 0
        %644 = vmatpush2.bf16.msra.mxu0 0
        %645 = vmatprep.subr.bf16.mxu0 0
        %646 = vmatpush2.bf16.msra.mxu0 0
        %647 = vmatprep.mubr.bf16.mxu0 0
        %648 = vmatmul.mubr.bf16.gmra.mxu0 %v396
        %v649 = vpop.f32.mrf.mxu0
        %v650 = vadd.f32 %v442, %v649
        %v651 = vpop.f32.mrf.mxu0
        %v652 = vpop.f32.mrf.mxu0
        %v653 = vpop.f32.mrf.mxu0
        %654 = vdwg.mxu0
        %v655 = vmul.f32 %v609, 0.35355338
        %v656 = vpack.c.bf16 %v655, %v655
        %v657 = vpack.c.bf16 %v611, %v611
        %v658 = vpack.c.bf16 %v650, %v650
        %v659 = vlaneseq
        %v660 = vshrl.u32 %v659, 7
        %v661 = vlaneseq
        %v662 = vand.u32 %v661, 127
        %vm663 = vcmp.gt.s32.totalorder %v662, %v660
        %v664 = vsel %vm663, -1e+30, 0.0
        %v665 = vld [vmem:[%s390] sm:$0x1]
        %v667 = vlaneseq
        %v668 = vshrl.u32 %v667, 7
        %v669 = vsub.s32 0, %v668
        %v670 = vrot.slane %v665, %v669
        %v672 = vadd.f32 %v664, %v670
        %vm673 = vcmask 64512
        %v675 = vsel %vm673, %v656, 0
        %v678 = vsel %vm673, %v657, 0
        %680 = vmatprep.subr.bf16.mxu0 0
        %681 = vmatpush1.bf16.xpose.msra.mxu0 0
        %682 = vmatprep.subr.bf16.mxu0 0
        %683 = vmatpush1.bf16.xpose.msra.mxu0 0
        %684 = vmatprep.subr.bf16.mxu0 0
        %685 = vmatpush1.bf16.xpose.msra.mxu0 0
        %686 = vmatprep.subr.bf16.mxu0 0
        %687 = vmatpush1.bf16.xpose.msra.mxu0 0
        %688 = vmatprep.subr.bf16.mxu0 0
        %689 = vmatpush1.bf16.xpose.msra.mxu0 0
        %690 = vmatprep.subr.bf16.mxu0 0
        %691 = vmatpush1.bf16.xpose.msra.mxu0 0
        %692 = vmatprep.subr.bf16.mxu0 0
        %693 = vmatpush1.bf16.xpose.msra.mxu0 0
        %694 = vmatprep.subr.bf16.mxu0 0
        %695 = vmatpush1.bf16.xpose.msra.mxu0 %v678
        %696 = vmatprep.subr.bf16.mxu0 0
        %697 = vmatpush2.bf16.xpose.msra.mxu0 0
        %698 = vmatprep.subr.bf16.mxu0 0
        %699 = vmatpush2.bf16.xpose.msra.mxu0 0
        %700 = vmatprep.subr.bf16.mxu0 0
        %701 = vmatpush2.bf16.xpose.msra.mxu0 0
        %702 = vmatprep.subr.bf16.mxu0 0
        %703 = vmatpush2.bf16.xpose.msra.mxu0 0
        %704 = vmatprep.subr.bf16.mxu0 0
        %705 = vmatpush2.bf16.xpose.msra.mxu0 0
        %706 = vmatprep.subr.bf16.mxu0 0
        %707 = vmatpush2.bf16.xpose.msra.mxu0 0
        %708 = vmatprep.subr.bf16.mxu0 0
        %709 = vmatpush2.bf16.xpose.msra.mxu0 0
        %710 = vmatprep.subr.bf16.mxu0 0
        %711 = vmatpush2.bf16.xpose.msra.mxu0 0
        %712 = vmatprep.mubr.bf16.mxu0 0
        %713 = vmatmul.mubr.bf16.gmra.mxu0 %v675
        %v714 = vpop.f32.mrf.mxu0
        %v715 = vadd.f32 %v672, %v714
        %v716 = vpop.f32.mrf.mxu0
        %v717 = vpop.f32.mrf.mxu0
        %v718 = vpop.f32.mrf.mxu0
        %719 = vdwg.mxu0
        %v720 = vsel %vm673, %v715, -inf
        %721 = vmax.xlane.f32.xlu0 %v720
        %v722 = vpop.xlane.xlu0 %721
        %v723 = vsub.f32 %v715, %v722
        %v724 = vmul.f32 %v723, 1.442695
        %v725 = vpow.pop %v724
        %v726 = vsel %vm673, %v725, 0.0
        %727 = vadd.xlane.f32.xlu0 %v726
        %v728 = vpop.xlane.xlu0 %727
        %v729 = vrcp.pop %v728
        %v730 = vmul.f32 %v725, %v729
        %v731 = vpack.c.bf16 %v730, %v730
        %v733 = vsel %vm673, %v731, 0
        %vm735 = vcmask 1043456
        %v737 = vsel %vm735, %v658, 0
        %739 = vmatprep.subr.bf16.mxu0 0
        %740 = vmatpush1.bf16.msra.mxu0 0
        %741 = vmatprep.subr.bf16.mxu0 0
        %742 = vmatpush1.bf16.msra.mxu0 0
        %743 = vmatprep.subr.bf16.mxu0 0
        %744 = vmatpush1.bf16.msra.mxu0 0
        %745 = vmatprep.subr.bf16.mxu0 0
        %746 = vmatpush1.bf16.msra.mxu0 0
        %747 = vmatprep.subr.bf16.mxu0 0
        %748 = vmatpush1.bf16.msra.mxu0 0
        %749 = vmatprep.subr.bf16.mxu0 0
        %750 = vmatpush1.bf16.msra.mxu0 0
        %751 = vmatprep.subr.bf16.mxu0 0
        %752 = vmatpush1.bf16.msra.mxu0 0
        %753 = vmatprep.subr.bf16.mxu0 0
        %754 = vmatpush1.bf16.msra.mxu0 %v737
        %755 = vmatprep.subr.bf16.mxu0 0
        %756 = vmatpush2.bf16.msra.mxu0 0
        %757 = vmatprep.subr.bf16.mxu0 0
        %758 = vmatpush2.bf16.msra.mxu0 0
        %759 = vmatprep.subr.bf16.mxu0 0
        %760 = vmatpush2.bf16.msra.mxu0 0
        %761 = vmatprep.subr.bf16.mxu0 0
        %762 = vmatpush2.bf16.msra.mxu0 0
        %763 = vmatprep.subr.bf16.mxu0 0
        %764 = vmatpush2.bf16.msra.mxu0 0
        %765 = vmatprep.subr.bf16.mxu0 0
        %766 = vmatpush2.bf16.msra.mxu0 0
        %767 = vmatprep.subr.bf16.mxu0 0
        %768 = vmatpush2.bf16.msra.mxu0 0
        %769 = vmatprep.subr.bf16.mxu0 0
        %770 = vmatpush2.bf16.msra.mxu0 0
        %771 = vmatprep.mubr.bf16.mxu0 0
        %772 = vmatmul.mubr.bf16.gmra.mxu0 %v733
        %v773 = vpop.f32.mrf.mxu0
        %v774 = vadd.f32 0.0, %v773
        %v775 = vpop.f32.mrf.mxu0
        %v776 = vpop.f32.mrf.mxu0
        %v777 = vpop.f32.mrf.mxu0
        %778 = vdwg.mxu0
        %v779 = vpack.c.bf16 %v774, %v774
        %v780 = vld [vmem:[#allocation6] sm:$0xf]
        %782 = vrot.lane.b32.xlu0 %v656, 120
        %v783 = vpop.permute.xlu0 %782
        %785 = vrot.lane.b32.xlu0 %v657, 120
        %v786 = vpop.permute.xlu0 %785
        %v788 = vsel %vm673, %v783, 0
        %v791 = vsel %vm673, %v786, 0
        %793 = vmatprep.subr.bf16.mxu0 0
        %794 = vmatpush1.bf16.xpose.msra.mxu0 0
        %795 = vmatprep.subr.bf16.mxu0 0
        %796 = vmatpush1.bf16.xpose.msra.mxu0 0
        %797 = vmatprep.subr.bf16.mxu0 0
        %798 = vmatpush1.bf16.xpose.msra.mxu0 0
        %799 = vmatprep.subr.bf16.mxu0 0
        %800 = vmatpush1.bf16.xpose.msra.mxu0 0
        %801 = vmatprep.subr.bf16.mxu0 0
        %802 = vmatpush1.bf16.xpose.msra.mxu0 0
        %803 = vmatprep.subr.bf16.mxu0 0
        %804 = vmatpush1.bf16.xpose.msra.mxu0 0
        %805 = vmatprep.subr.bf16.mxu0 0
        %806 = vmatpush1.bf16.xpose.msra.mxu0 0
        %807 = vmatprep.subr.bf16.mxu0 0
        %808 = vmatpush1.bf16.xpose.msra.mxu0 %v791
        %809 = vmatprep.subr.bf16.mxu0 0
        %810 = vmatpush2.bf16.xpose.msra.mxu0 0
        %811 = vmatprep.subr.bf16.mxu0 0
        %812 = vmatpush2.bf16.xpose.msra.mxu0 0
        %813 = vmatprep.subr.bf16.mxu0 0
        %814 = vmatpush2.bf16.xpose.msra.mxu0 0
        %815 = vmatprep.subr.bf16.mxu0 0
        %816 = vmatpush2.bf16.xpose.msra.mxu0 0
        %817 = vmatprep.subr.bf16.mxu0 0
        %818 = vmatpush2.bf16.xpose.msra.mxu0 0
        %819 = vmatprep.subr.bf16.mxu0 0
        %820 = vmatpush2.bf16.xpose.msra.mxu0 0
        %821 = vmatprep.subr.bf16.mxu0 0
        %822 = vmatpush2.bf16.xpose.msra.mxu0 0
        %823 = vmatprep.subr.bf16.mxu0 0
        %824 = vmatpush2.bf16.xpose.msra.mxu0 0
        %825 = vmatprep.mubr.bf16.mxu0 0
        %826 = vmatmul.mubr.bf16.gmra.mxu0 %v788
        %v827 = vpop.f32.mrf.mxu0
        %v828 = vadd.f32 %v672, %v827
        %v829 = vpop.f32.mrf.mxu0
        %v830 = vpop.f32.mrf.mxu0
        %v831 = vpop.f32.mrf.mxu0
        %832 = vdwg.mxu0
        %v833 = vsel %vm673, %v828, -inf
        %834 = vmax.xlane.f32.xlu0 %v833
        %v835 = vpop.xlane.xlu0 %834
        %v836 = vsub.f32 %v828, %v835
        %v837 = vmul.f32 %v836, 1.442695
        %v838 = vpow.pop %v837
        %v839 = vsel %vm673, %v838, 0.0
        %840 = vadd.xlane.f32.xlu0 %v839
        %v841 = vpop.xlane.xlu0 %840
        %v842 = vrcp.pop %v841
        %v843 = vmul.f32 %v838, %v842
        %v844 = vpack.c.bf16 %v843, %v843
        %846 = vrot.lane.b32.xlu0 %v658, 120
        %v847 = vpop.permute.xlu0 %846
        %v849 = vsel %vm673, %v844, 0
        %v852 = vsel %vm735, %v847, 0
        %854 = vmatprep.subr.bf16.mxu0 0
        %855 = vmatpush1.bf16.msra.mxu0 0
        %856 = vmatprep.subr.bf16.mxu0 0
        %857 = vmatpush1.bf16.msra.mxu0 0
        %858 = vmatprep.subr.bf16.mxu0 0
        %859 = vmatpush1.bf16.msra.mxu0 0
        %860 = vmatprep.subr.bf16.mxu0 0
        %861 = vmatpush1.bf16.msra.mxu0 0
        %862 = vmatprep.subr.bf16.mxu0 0
        %863 = vmatpush1.bf16.msra.mxu0 0
        %864 = vmatprep.subr.bf16.mxu0 0
        %865 = vmatpush1.bf16.msra.mxu0 0
        %866 = vmatprep.subr.bf16.mxu0 0
        %867 = vmatpush1.bf16.msra.mxu0 0
        %868 = vmatprep.subr.bf16.mxu0 0
        %869 = vmatpush1.bf16.msra.mxu0 %v852
        %870 = vmatprep.subr.bf16.mxu0 0
        %871 = vmatpush2.bf16.msra.mxu0 0
        %872 = vmatprep.subr.bf16.mxu0 0
        %873 = vmatpush2.bf16.msra.mxu0 0
        %874 = vmatprep.subr.bf16.mxu0 0
        %875 = vmatpush2.bf16.msra.mxu0 0
        %876 = vmatprep.subr.bf16.mxu0 0
        %877 = vmatpush2.bf16.msra.mxu0 0
        %878 = vmatprep.subr.bf16.mxu0 0
        %879 = vmatpush2.bf16.msra.mxu0 0
        %880 = vmatprep.subr.bf16.mxu0 0
        %881 = vmatpush2.bf16.msra.mxu0 0
        %882 = vmatprep.subr.bf16.mxu0 0
        %883 = vmatpush2.bf16.msra.mxu0 0
        %884 = vmatprep.subr.bf16.mxu0 0
        %885 = vmatpush2.bf16.msra.mxu0 0
        %886 = vmatprep.mubr.bf16.mxu0 0
        %887 = vmatmul.mubr.bf16.gmra.mxu0 %v849
        %v888 = vpop.f32.mrf.mxu0
        %v889 = vadd.f32 0.0, %v888
        %v890 = vpop.f32.mrf.mxu0
        %v891 = vpop.f32.mrf.mxu0
        %v892 = vpop.f32.mrf.mxu0
        %893 = vdwg.mxu0
        %v894 = vpack.c.bf16 %v889, %v889
        %v895 = vld [vmem:[#allocation6 + $0x4] sm:$0xf]
        %v897 = vsel %vm673, %v894, 0
        %v900 = vsel %vm735, %v895, 0
        %902 = vmatprep.subr.bf16.mxu0 0
        %903 = vmatpush1.bf16.msra.mxu0 0
        %904 = vmatprep.subr.bf16.mxu0 0
        %905 = vmatpush1.bf16.msra.mxu0 0
        %906 = vmatprep.subr.bf16.mxu0 0
        %907 = vmatpush1.bf16.msra.mxu0 0
        %908 = vmatprep.subr.bf16.mxu0 0
        %909 = vmatpush1.bf16.msra.mxu0 0
        %910 = vmatprep.subr.bf16.mxu0 0
        %911 = vmatpush1.bf16.msra.mxu0 0
        %912 = vmatprep.subr.bf16.mxu0 0
        %913 = vmatpush1.bf16.msra.mxu0 0
        %914 = vmatprep.subr.bf16.mxu0 0
        %915 = vmatpush1.bf16.msra.mxu0 0
        %916 = vmatprep.subr.bf16.mxu0 0
        %917 = vmatpush1.bf16.msra.mxu0 %v900
        %918 = vmatprep.subr.bf16.mxu0 0
        %919 = vmatpush2.bf16.msra.mxu0 0
        %920 = vmatprep.subr.bf16.mxu0 0
        %921 = vmatpush2.bf16.msra.mxu0 0
        %922 = vmatprep.subr.bf16.mxu0 0
        %923 = vmatpush2.bf16.msra.mxu0 0
        %924 = vmatprep.subr.bf16.mxu0 0
        %925 = vmatpush2.bf16.msra.mxu0 0
        %926 = vmatprep.subr.bf16.mxu0 0
        %927 = vmatpush2.bf16.msra.mxu0 0
        %928 = vmatprep.subr.bf16.mxu0 0
        %929 = vmatpush2.bf16.msra.mxu0 0
        %930 = vmatprep.subr.bf16.mxu0 0
        %931 = vmatpush2.bf16.msra.mxu0 0
        %932 = vmatprep.subr.bf16.mxu0 0
        %933 = vmatpush2.bf16.msra.mxu0 0
        %934 = vmatprep.mubr.bf16.mxu0 0
        %935 = vmatmul.mubr.bf16.gmra.mxu0 %v897
        %v936 = vpop.f32.mrf.mxu0
        %v937 = vadd.f32 0.0, %v936
        %v938 = vpop.f32.mrf.mxu0
        %v939 = vpop.f32.mrf.mxu0
        %v940 = vpop.f32.mrf.mxu0
        %941 = vdwg.mxu0
        %v943 = vsel %vm673, %v779, 0
        %v946 = vsel %vm735, %v780, 0
        %948 = vmatprep.subr.bf16.mxu0 0
        %949 = vmatpush1.bf16.msra.mxu0 0
        %950 = vmatprep.subr.bf16.mxu0 0
        %951 = vmatpush1.bf16.msra.mxu0 0
        %952 = vmatprep.subr.bf16.mxu0 0
        %953 = vmatpush1.bf16.msra.mxu0 0
        %954 = vmatprep.subr.bf16.mxu0 0
        %955 = vmatpush1.bf16.msra.mxu0 0
        %956 = vmatprep.subr.bf16.mxu0 0
        %957 = vmatpush1.bf16.msra.mxu0 0
        %958 = vmatprep.subr.bf16.mxu0 0
        %959 = vmatpush1.bf16.msra.mxu0 0
        %960 = vmatprep.subr.bf16.mxu0 0
        %961 = vmatpush1.bf16.msra.mxu0 0
        %962 = vmatprep.subr.bf16.mxu0 0
        %963 = vmatpush1.bf16.msra.mxu0 %v946
        %964 = vmatprep.subr.bf16.mxu0 0
        %965 = vmatpush2.bf16.msra.mxu0 0
        %966 = vmatprep.subr.bf16.mxu0 0
        %967 = vmatpush2.bf16.msra.mxu0 0
        %968 = vmatprep.subr.bf16.mxu0 0
        %969 = vmatpush2.bf16.msra.mxu0 0
        %970 = vmatprep.subr.bf16.mxu0 0
        %971 = vmatpush2.bf16.msra.mxu0 0
        %972 = vmatprep.subr.bf16.mxu0 0
        %973 = vmatpush2.bf16.msra.mxu0 0
        %974 = vmatprep.subr.bf16.mxu0 0
        %975 = vmatpush2.bf16.msra.mxu0 0
        %976 = vmatprep.subr.bf16.mxu0 0
        %977 = vmatpush2.bf16.msra.mxu0 0
        %978 = vmatprep.subr.bf16.mxu0 0
        %979 = vmatpush2.bf16.msra.mxu0 0
        %980 = vmatprep.mubr.bf16.mxu0 0
        %981 = vmatmul.mubr.bf16.gmra.mxu0 %v943
        %v982 = vpop.f32.mrf.mxu0
        %v983 = vadd.f32 %v937, %v982
        %v984 = vpop.f32.mrf.mxu0
        %v985 = vpop.f32.mrf.mxu0
        %v986 = vpop.f32.mrf.mxu0
        %987 = vdwg.mxu0
        %988 = vrot.lane.b32.xlu0 %v656, 112
        %v989 = vpop.permute.xlu0 %988
        %990 = vrot.lane.b32.xlu0 %v657, 112
        %v991 = vpop.permute.xlu0 %990
        %v993 = vsel %vm673, %v989, 0
        %v996 = vsel %vm673, %v991, 0
        %998 = vmatprep.subr.bf16.mxu0 0
        %999 = vmatpush1.bf16.xpose.msra.mxu0 0
        %1000 = vmatprep.subr.bf16.mxu0 0
        %1001 = vmatpush1.bf16.xpose.msra.mxu0 0
        %1002 = vmatprep.subr.bf16.mxu0 0
        %1003 = vmatpush1.bf16.xpose.msra.mxu0 0
        %1004 = vmatprep.subr.bf16.mxu0 0
        %1005 = vmatpush1.bf16.xpose.msra.mxu0 0
        %1006 = vmatprep.subr.bf16.mxu0 0
        %1007 = vmatpush1.bf16.xpose.msra.mxu0 0
        %1008 = vmatprep.subr.bf16.mxu0 0
        %1009 = vmatpush1.bf16.xpose.msra.mxu0 0
        %1010 = vmatprep.subr.bf16.mxu0 0
        %1011 = vmatpush1.bf16.xpose.msra.mxu0 0
        %1012 = vmatprep.subr.bf16.mxu0 0
        %1013 = vmatpush1.bf16.xpose.msra.mxu0 %v996
        %1014 = vmatprep.subr.bf16.mxu0 0
        %1015 = vmatpush2.bf16.xpose.msra.mxu0 0
        %1016 = vmatprep.subr.bf16.mxu0 0
        %1017 = vmatpush2.bf16.xpose.msra.mxu0 0
        %1018 = vmatprep.subr.bf16.mxu0 0
        %1019 = vmatpush2.bf16.xpose.msra.mxu0 0
        %1020 = vmatprep.subr.bf16.mxu0 0
        %1021 = vmatpush2.bf16.xpose.msra.mxu0 0
        %1022 = vmatprep.subr.bf16.mxu0 0
        %1023 = vmatpush2.bf16.xpose.msra.mxu0 0
        %1024 = vmatprep.subr.bf16.mxu0 0
        %1025 = vmatpush2.bf16.xpose.msra.mxu0 0
        %1026 = vmatprep.subr.bf16.mxu0 0
        %1027 = vmatpush2.bf16.xpose.msra.mxu0 0
        %1028 = vmatprep.subr.bf16.mxu0 0
        %1029 = vmatpush2.bf16.xpose.msra.mxu0 0
        %1030 = vmatprep.mubr.bf16.mxu0 0
        %1031 = vmatmul.mubr.bf16.gmra.mxu0 %v993
        %v1032 = vpop.f32.mrf.mxu0
        %v1033 = vadd.f32 %v672, %v1032
        %v1034 = vpop.f32.mrf.mxu0
        %v1035 = vpop.f32.mrf.mxu0
        %v1036 = vpop.f32.mrf.mxu0
        %1037 = vdwg.mxu0
        %v1038 = vsel %vm673, %v1033, -inf
        %1039 = vmax.xlane.f32.xlu0 %v1038
        %v1040 = vpop.xlane.xlu0 %1039
        %v1041 = vsub.f32 %v1033, %v1040
        %v1042 = vmul.f32 %v1041, 1.442695
        %v1043 = vpow.pop %v1042
        %v1044 = vsel %vm673, %v1043, 0.0
        %1045 = vadd.xlane.f32.xlu0 %v1044
        %v1046 = vpop.xlane.xlu0 %1045
        %v1047 = vrcp.pop %v1046
        %v1048 = vmul.f32 %v1043, %v1047
        %v1049 = vpack.c.bf16 %v1048, %v1048
        %1050 = vrot.lane.b32.xlu0 %v658, 112
        %v1051 = vpop.permute.xlu0 %1050
        %v1053 = vsel %vm673, %v1049, 0
        %v1056 = vsel %vm735, %v1051, 0
        %1058 = vmatprep.subr.bf16.mxu0 0
        %1059 = vmatpush1.bf16.msra.mxu0 0
        %1060 = vmatprep.subr.bf16.mxu0 0
        %1061 = vmatpush1.bf16.msra.mxu0 0
        %1062 = vmatprep.subr.bf16.mxu0 0
        %1063 = vmatpush1.bf16.msra.mxu0 0
        %1064 = vmatprep.subr.bf16.mxu0 0
        %1065 = vmatpush1.bf16.msra.mxu0 0
        %1066 = vmatprep.subr.bf16.mxu0 0
        %1067 = vmatpush1.bf16.msra.mxu0 0
        %1068 = vmatprep.subr.bf16.mxu0 0
        %1069 = vmatpush1.bf16.msra.mxu0 0
        %1070 = vmatprep.subr.bf16.mxu0 0
        %1071 = vmatpush1.bf16.msra.mxu0 0
        %1072 = vmatprep.subr.bf16.mxu0 0
        %1073 = vmatpush1.bf16.msra.mxu0 %v1056
        %1074 = vmatprep.subr.bf16.mxu0 0
        %1075 = vmatpush2.bf16.msra.mxu0 0
        %1076 = vmatprep.subr.bf16.mxu0 0
        %1077 = vmatpush2.bf16.msra.mxu0 0
        %1078 = vmatprep.subr.bf16.mxu0 0
        %1079 = vmatpush2.bf16.msra.mxu0 0
        %1080 = vmatprep.subr.bf16.mxu0 0
        %1081 = vmatpush2.bf16.msra.mxu0 0
        %1082 = vmatprep.subr.bf16.mxu0 0
        %1083 = vmatpush2.bf16.msra.mxu0 0
        %1084 = vmatprep.subr.bf16.mxu0 0
        %1085 = vmatpush2.bf16.msra.mxu0 0
        %1086 = vmatprep.subr.bf16.mxu0 0
        %1087 = vmatpush2.bf16.msra.mxu0 0
        %1088 = vmatprep.subr.bf16.mxu0 0
        %1089 = vmatpush2.bf16.msra.mxu0 0
        %1090 = vmatprep.mubr.bf16.mxu0 0
        %1091 = vmatmul.mubr.bf16.gmra.mxu0 %v1053
        %v1092 = vpop.f32.mrf.mxu0
        %v1093 = vadd.f32 0.0, %v1092
        %v1094 = vpop.f32.mrf.mxu0
        %v1095 = vpop.f32.mrf.mxu0
        %v1096 = vpop.f32.mrf.mxu0
        %1097 = vdwg.mxu0
        %v1098 = vpack.c.bf16 %v1093, %v1093
        %v1099 = vld [vmem:[#allocation6 + $0x8] sm:$0xf]
        %v1101 = vsel %vm673, %v1098, 0
        %v1104 = vsel %vm735, %v1099, 0
        %1106 = vmatprep.subr.bf16.mxu0 0
        %1107 = vmatpush1.bf16.msra.mxu0 0
        %1108 = vmatprep.subr.bf16.mxu0 0
        %1109 = vmatpush1.bf16.msra.mxu0 0
        %1110 = vmatprep.subr.bf16.mxu0 0
        %1111 = vmatpush1.bf16.msra.mxu0 0
        %1112 = vmatprep.subr.bf16.mxu0 0
        %1113 = vmatpush1.bf16.msra.mxu0 0
        %1114 = vmatprep.subr.bf16.mxu0 0
        %1115 = vmatpush1.bf16.msra.mxu0 0
        %1116 = vmatprep.subr.bf16.mxu0 0
        %1117 = vmatpush1.bf16.msra.mxu0 0
        %1118 = vmatprep.subr.bf16.mxu0 0
        %1119 = vmatpush1.bf16.msra.mxu0 0
        %1120 = vmatprep.subr.bf16.mxu0 0
        %1121 = vmatpush1.bf16.msra.mxu0 %v1104
        %1122 = vmatprep.subr.bf16.mxu0 0
        %1123 = vmatpush2.bf16.msra.mxu0 0
        %1124 = vmatprep.subr.bf16.mxu0 0
        %1125 = vmatpush2.bf16.msra.mxu0 0
        %1126 = vmatprep.subr.bf16.mxu0 0
        %1127 = vmatpush2.bf16.msra.mxu0 0
        %1128 = vmatprep.subr.bf16.mxu0 0
        %1129 = vmatpush2.bf16.msra.mxu0 0
        %1130 = vmatprep.subr.bf16.mxu0 0
        %1131 = vmatpush2.bf16.msra.mxu0 0
        %1132 = vmatprep.subr.bf16.mxu0 0
        %1133 = vmatpush2.bf16.msra.mxu0 0
        %1134 = vmatprep.subr.bf16.mxu0 0
        %1135 = vmatpush2.bf16.msra.mxu0 0
        %1136 = vmatprep.subr.bf16.mxu0 0
        %1137 = vmatpush2.bf16.msra.mxu0 0
        %1138 = vmatprep.mubr.bf16.mxu0 0
        %1139 = vmatmul.mubr.bf16.gmra.mxu0 %v1101
        %v1140 = vpop.f32.mrf.mxu0
        %v1141 = vadd.f32 0.0, %v1140
        %v1142 = vpop.f32.mrf.mxu0
        %v1143 = vpop.f32.mrf.mxu0
        %v1144 = vpop.f32.mrf.mxu0
        %1145 = vdwg.mxu0
        %v1146 = vadd.f32 %v983, %v1141
        %1147 = vrot.lane.b32.xlu0 %v656, 104
        %v1148 = vpop.permute.xlu0 %1147
        %1149 = vrot.lane.b32.xlu0 %v657, 104
        %v1150 = vpop.permute.xlu0 %1149
        %v1152 = vsel %vm673, %v1148, 0
        %v1155 = vsel %vm673, %v1150, 0
        %1157 = vmatprep.subr.bf16.mxu0 0
        %1158 = vmatpush1.bf16.xpose.msra.mxu0 0
        %1159 = vmatprep.subr.bf16.mxu0 0
        %1160 = vmatpush1.bf16.xpose.msra.mxu0 0
        %1161 = vmatprep.subr.bf16.mxu0 0
        %1162 = vmatpush1.bf16.xpose.msra.mxu0 0
        %1163 = vmatprep.subr.bf16.mxu0 0
        %1164 = vmatpush1.bf16.xpose.msra.mxu0 0
        %1165 = vmatprep.subr.bf16.mxu0 0
        %1166 = vmatpush1.bf16.xpose.msra.mxu0 0
        %1167 = vmatprep.subr.bf16.mxu0 0
        %1168 = vmatpush1.bf16.xpose.msra.mxu0 0
        %1169 = vmatprep.subr.bf16.mxu0 0
        %1170 = vmatpush1.bf16.xpose.msra.mxu0 0
        %1171 = vmatprep.subr.bf16.mxu0 0
        %1172 = vmatpush1.bf16.xpose.msra.mxu0 %v1155
        %1173 = vmatprep.subr.bf16.mxu0 0
        %1174 = vmatpush2.bf16.xpose.msra.mxu0 0
        %1175 = vmatprep.subr.bf16.mxu0 0
        %1176 = vmatpush2.bf16.xpose.msra.mxu0 0
        %1177 = vmatprep.subr.bf16.mxu0 0
        %1178 = vmatpush2.bf16.xpose.msra.mxu0 0
        %1179 = vmatprep.subr.bf16.mxu0 0
        %1180 = vmatpush2.bf16.xpose.msra.mxu0 0
        %1181 = vmatprep.subr.bf16.mxu0 0
        %1182 = vmatpush2.bf16.xpose.msra.mxu0 0
        %1183 = vmatprep.subr.bf16.mxu0 0
        %1184 = vmatpush2.bf16.xpose.msra.mxu0 0
        %1185 = vmatprep.subr.bf16.mxu0 0
        %1186 = vmatpush2.bf16.xpose.msra.mxu0 0
        %1187 = vmatprep.subr.bf16.mxu0 0
        %1188 = vmatpush2.bf16.xpose.msra.mxu0 0
        %1189 = vmatprep.mubr.bf16.mxu0 0
        %1190 = vmatmul.mubr.bf16.gmra.mxu0 %v1152
        %v1191 = vpop.f32.mrf.mxu0
        %v1192 = vadd.f32 %v672, %v1191
        %v1193 = vpop.f32.mrf.mxu0
        %v1194 = vpop.f32.mrf.mxu0
        %v1195 = vpop.f32.mrf.mxu0
        %1196 = vdwg.mxu0
        %v1197 = vsel %vm673, %v1192, -inf
        %1198 = vmax.xlane.f32.xlu0 %v1197
        %v1199 = vpop.xlane.xlu0 %1198
        %v1200 = vsub.f32 %v1192, %v1199
        %v1201 = vmul.f32 %v1200, 1.442695
        %v1202 = vpow.pop %v1201
        %v1203 = vsel %vm673, %v1202, 0.0
        %1204 = vadd.xlane.f32.xlu0 %v1203
        %v1205 = vpop.xlane.xlu0 %1204
        %v1206 = vrcp.pop %v1205
        %v1207 = vmul.f32 %v1202, %v1206
        %v1208 = vpack.c.bf16 %v1207, %v1207
        %1209 = vrot.lane.b32.xlu0 %v658, 104
        %v1210 = vpop.permute.xlu0 %1209
        %v1212 = vsel %vm673, %v1208, 0
        %v1215 = vsel %vm735, %v1210, 0
        %1217 = vmatprep.subr.bf16.mxu0 0
        %1218 = vmatpush1.bf16.msra.mxu0 0
        %1219 = vmatprep.subr.bf16.mxu0 0
        %1220 = vmatpush1.bf16.msra.mxu0 0
        %1221 = vmatprep.subr.bf16.mxu0 0
        %1222 = vmatpush1.bf16.msra.mxu0 0
        %1223 = vmatprep.subr.bf16.mxu0 0
        %1224 = vmatpush1.bf16.msra.mxu0 0
        %1225 = vmatprep.subr.bf16.mxu0 0
        %1226 = vmatpush1.bf16.msra.mxu0 0
        %1227 = vmatprep.subr.bf16.mxu0 0
        %1228 = vmatpush1.bf16.msra.mxu0 0
        %1229 = vmatprep.subr.bf16.mxu0 0
        %1230 = vmatpush1.bf16.msra.mxu0 0
        %1231 = vmatprep.subr.bf16.mxu0 0
        %1232 = vmatpush1.bf16.msra.mxu0 %v1215
        %1233 = vmatprep.subr.bf16.mxu0 0
        %1234 = vmatpush2.bf16.msra.mxu0 0
        %1235 = vmatprep.subr.bf16.mxu0 0
        %1236 = vmatpush2.bf16.msra.mxu0 0
        %1237 = vmatprep.subr.bf16.mxu0 0
        %1238 = vmatpush2.bf16.msra.mxu0 0
        %1239 = vmatprep.subr.bf16.mxu0 0
        %1240 = vmatpush2.bf16.msra.mxu0 0
        %1241 = vmatprep.subr.bf16.mxu0 0
        %1242 = vmatpush2.bf16.msra.mxu0 0
        %1243 = vmatprep.subr.bf16.mxu0 0
        %1244 = vmatpush2.bf16.msra.mxu0 0
        %1245 = vmatprep.subr.bf16.mxu0 0
        %1246 = vmatpush2.bf16.msra.mxu0 0
        %1247 = vmatprep.subr.bf16.mxu0 0
        %1248 = vmatpush2.bf16.msra.mxu0 0
        %1249 = vmatprep.mubr.bf16.mxu0 0
        %1250 = vmatmul.mubr.bf16.gmra.mxu0 %v1212
        %v1251 = vpop.f32.mrf.mxu0
        %v1252 = vadd.f32 0.0, %v1251
        %v1253 = vpop.f32.mrf.mxu0
        %v1254 = vpop.f32.mrf.mxu0
        %v1255 = vpop.f32.mrf.mxu0
        %1256 = vdwg.mxu0
        %v1257 = vpack.c.bf16 %v1252, %v1252
        %v1258 = vld [vmem:[#allocation6 + $0xc] sm:$0xf]
        %v1260 = vsel %vm673, %v1257, 0
        %v1263 = vsel %vm735, %v1258, 0
        %1265 = vmatprep.subr.bf16.mxu0 0
        %1266 = vmatpush1.bf16.msra.mxu0 0
        %1267 = vmatprep.subr.bf16.mxu0 0
        %1268 = vmatpush1.bf16.msra.mxu0 0
        %1269 = vmatprep.subr.bf16.mxu0 0
        %1270 = vmatpush1.bf16.msra.mxu0 0
        %1271 = vmatprep.subr.bf16.mxu0 0
        %1272 = vmatpush1.bf16.msra.mxu0 0
        %1273 = vmatprep.subr.bf16.mxu0 0
        %1274 = vmatpush1.bf16.msra.mxu0 0
        %1275 = vmatprep.subr.bf16.mxu0 0
        %1276 = vmatpush1.bf16.msra.mxu0 0
        %1277 = vmatprep.subr.bf16.mxu0 0
        %1278 = vmatpush1.bf16.msra.mxu0 0
        %1279 = vmatprep.subr.bf16.mxu0 0
        %1280 = vmatpush1.bf16.msra.mxu0 %v1263
        %1281 = vmatprep.subr.bf16.mxu0 0
        %1282 = vmatpush2.bf16.msra.mxu0 0
        %1283 = vmatprep.subr.bf16.mxu0 0
        %1284 = vmatpush2.bf16.msra.mxu0 0
        %1285 = vmatprep.subr.bf16.mxu0 0
        %1286 = vmatpush2.bf16.msra.mxu0 0
        %1287 = vmatprep.subr.bf16.mxu0 0
        %1288 = vmatpush2.bf16.msra.mxu0 0
        %1289 = vmatprep.subr.bf16.mxu0 0
        %1290 = vmatpush2.bf16.msra.mxu0 0
        %1291 = vmatprep.subr.bf16.mxu0 0
        %1292 = vmatpush2.bf16.msra.mxu0 0
        %1293 = vmatprep.subr.bf16.mxu0 0
        %1294 = vmatpush2.bf16.msra.mxu0 0
        %1295 = vmatprep.subr.bf16.mxu0 0
        %1296 = vmatpush2.bf16.msra.mxu0 0
        %1297 = vmatprep.mubr.bf16.mxu0 0
        %1298 = vmatmul.mubr.bf16.gmra.mxu0 %v1260
        %v1299 = vpop.f32.mrf.mxu0
        %v1300 = vadd.f32 0.0, %v1299
        %v1301 = vpop.f32.mrf.mxu0
        %v1302 = vpop.f32.mrf.mxu0
        %v1303 = vpop.f32.mrf.mxu0
        %1304 = vdwg.mxu0
        %v1305 = vadd.f32 %v1146, %v1300
        %v1306 = vunpack.c.l.bf16 %v396
        %v1307 = vadd.f32 %v1306, %v1305
        %v1308 = vld [vmem:[#allocation7] sm:$0x1]
        %v1310 = vlaneseq
        %v1311 = vshrl.u32 %v1310, 7
        %v1312 = vsub.s32 0, %v1311
        %v1313 = vrot.slane %v1308, %v1312
        %v1315 = vadd.f32 %v1307, %v1313
        %v1316 = vld [vmem:[#allocation9] sm:$0x1]
        %v1317 = vld [vmem:[#allocation10] sm:$0x1]
        %1318 = vadd.xlane.f32.xlu0 %v1315
        %v1319 = vpop.xlane.xlu0 %1318
        %v1320 = vmul.f32 %v1319, 0.03125
        %vm1321 = vcmp.lt.s32.totalorder %v662, 32
        %v1322 = vsub.f32 %v1315, %v1320
        %v1323 = vsel %vm1321, %v1322, 0.0
        %v1324 = vmul.f32 %v1323, %v1323
        %1325 = vadd.xlane.f32.xlu0 %v1324
        %v1326 = vpop.xlane.xlu0 %1325
        %v1327 = vmul.f32 %v1326, 0.03125
        %v1328 = vadd.f32 %v1327, 1e-05
        %v1329 = vrsqrt.pop %v1328
        %v1330 = vmul.f32 %v1323, %v1329
        %v1332 = vlaneseq
        %v1333 = vshrl.u32 %v1332, 7
        %v1334 = vsub.s32 0, %v1333
        %v1335 = vrot.slane %v1316, %v1334
        %v1337 = vmul.f32 %v1330, %v1335
        %v1339 = vlaneseq
        %v1340 = vshrl.u32 %v1339, 7
        %v1341 = vsub.s32 0, %v1340
        %v1342 = vrot.slane %v1317, %v1341
        %v1344 = vadd.f32 %v1337, %v1342
        %v1345 = vpack.c.bf16 %v1344, %v1344
        %1346 = vst [vmem:[%s394] sm:$0xf] %v1345
        %p1347 = scmp.lt.s32.totalorder %s23, 1
        %s1348 = scalar_select %p1347, %s23, 1
        %s1349 = smul.addr %s1348, 4
        %s1350 = scalar_lea.vmem %s8, %s1349
        // Predicated region
        $region77: #{lpg_transformer_forward.20} parent=51 // pred_check
          %p1351 = pneg %p219
        $region78: #{lpg_transformer_forward.20} parent=51 // pred_check_branch
          %1353 = sbr.rel (%p1351) target = $region80
        $region79: #{lpg_transformer_forward.20} parent=51 // pred_region
          _
        $region80: #{lpg_transformer_forward.20} parent=51 // pred_fallthru
          _
      $region52: #{lpg_transformer_forward.20} parent=5 // pred_fallthru
        _
      %p1354 = scmp.le.s32.totalorder 2, %s18
      // Predicated region
      $region81: #{lpg_transformer_forward.20} parent=5 // pred_check
        %p1355 = pneg %p1354
      $region82: #{lpg_transformer_forward.20} parent=5 // pred_check_branch
        %1357 = sbr.rel (%p1355) target = $region84
      $region83: #{lpg_transformer_forward.20} parent=5 // pred_region
        %s1358 = ssub.s32 %s18, 2
        // Predicated region
        $region85: #{lpg_transformer_forward.20} parent=83 // pred_check
          %p1359 = pneg %p225
        $region86: #{lpg_transformer_forward.20} parent=83 // pred_check_branch
          %1361 = sbr.rel (%p1359) target = $region88
        $region87: #{lpg_transformer_forward.20} parent=83 // pred_region
          %p1362 = scmp.lt.s32.totalorder %s24, 1
          %s1363 = scalar_select %p1362, %s24, 1
          %s1364 = smul.addr %s1363, 4
          %s1365 = scalar_lea.vmem %s8, %s1364
        $region88: #{lpg_transformer_forward.20} parent=83 // pred_fallthru
          _
      $region84: #{lpg_transformer_forward.20} parent=5 // pred_fallthru
        _
    $region6: #{lpg_transformer_forward.20} parent=1 // loop_footer
      %s22 = sadd.s32 1, %s18
    $region7: #{lpg_transformer_forward.20} parent=1 // loop_footer_branch
      %17 = sbr.rel target = $region3
    $region8: #{lpg_transformer_forward.20} parent=1 // loop_exit
      _
    %1366 = vsyncpa [#allocation3], 1
    %s1367 = scalar_lea.sflag [#allocation3], 1
    %1368 = vsyncpa %s1367, 1
    %1369 = vsyncpa [#allocation5], 1
    %1370 = vsyncpa [#allocation8], 1
    %1371 = vsyncpa [#allocation11], 1

// kernel: lpg_transformer_forward.19
$region0: #{lpg_transformer_forward.19}
  #allocation0 [shape = 'u32[]', space=smem, size = 0x4, offset = 0x4, fixed_abs, tag = 'smem constant byte address 0x4 - core index']
  #allocation1 [shape = 'u32[144,128]{1,0:T(1,128)}', space=vmem, size = 0x12000, scoped, tag = 'internal scratch']
  %s0 = inlined_call_operand.vmem [shape: bf16[8,128], index: 0, kind: input, shape index: {}]
  %s1 = inlined_call_operand.hbm [shape: f32[1,128], index: 1, kind: input, shape index: {}]
  %s2 = inlined_call_operand.hbm [shape: f32[1,128], index: 2, kind: input, shape index: {}]
  %s3 = inlined_call_operand.vmem [shape: bf16[8,128], index: 3, kind: output, shape index: {}]
  %s4 = sld [smem:[#allocation0]]
  $region30: #{lpg_transformer_forward.19} parent=0
    _
  %s6 = ssub.s32 1, %s4
  %s7 = scalar_select 0, %s6, %s4
  $region1: #{lpg_transformer_forward.19} parent=0
    #allocation2 [shape = 'u8[512]{0}', space=vmem, size = 0x400, scoped, tag = 'input window, operand 1, single buffered']
    #allocation3 [shape = 's32[1]{0}', space=sflag, size = 0x4, scoped, tag = 'scoped memory for lpg_transformer_forward.19']
    #allocation4 [shape = 'u8[512]{0}', space=vmem, size = 0x400, scoped, tag = 'input window, operand 2, single buffered']
    #allocation5 [shape = 's32[1]{0}', space=sflag, size = 0x4, scoped, tag = 'scoped memory for lpg_transformer_forward.19']
    %8 = vsyncpa [#allocation3], 0
    %9 = vsyncpa [#allocation5], 0
    // Predicated region
    $region2: #{lpg_transformer_forward.19} parent=1 // pred_check
      _
    $region3: #{lpg_transformer_forward.19} parent=1 // pred_check_branch
      %11 = sbr.rel (0) target = $region5
    $region4: #{lpg_transformer_forward.19} parent=1 // pred_region
      _
    $region5: #{lpg_transformer_forward.19} parent=1 // pred_fallthru
      _
    // Predicated region
    $region6: #{lpg_transformer_forward.19} parent=1 // pred_check
      _
    $region7: #{lpg_transformer_forward.19} parent=1 // pred_check_branch
      %13 = sbr.rel (0) target = $region9
    $region8: #{lpg_transformer_forward.19} parent=1 // pred_region
      %s15 = ssub.s32 16, 16
      %16 = vsyncadd [#allocation3], %s15
      %s18 = sshll.u32 [#allocation2], 4
      %s19 = int_to_ptr.vmem [resolvable:$true] %s18
      %21 = dma.hbm_to_vmem [thread:$0]  %s1, 16, %s19, [#allocation3]
    $region9: #{lpg_transformer_forward.19} parent=1 // pred_fallthru
      _
    // Predicated region
    $region10: #{lpg_transformer_forward.19} parent=1 // pred_check
      _
    $region11: #{lpg_transformer_forward.19} parent=1 // pred_check_branch
      %23 = sbr.rel (0) target = $region13
    $region12: #{lpg_transformer_forward.19} parent=1 // pred_region
      %s25 = ssub.s32 16, 16
      %26 = vsyncadd [#allocation5], %s25
      %s28 = sshll.u32 [#allocation4], 4
      %s29 = int_to_ptr.vmem [resolvable:$true] %s28
      %31 = dma.hbm_to_vmem [thread:$0]  %s2, 16, %s29, [#allocation5]
    $region13: #{lpg_transformer_forward.19} parent=1 // pred_fallthru
      _
    // Predicated region
    $region14: #{lpg_transformer_forward.19} parent=1 // pred_check
      _
    $region15: #{lpg_transformer_forward.19} parent=1 // pred_check_branch
      %33 = sbr.rel (0) target = $region17
    $region16: #{lpg_transformer_forward.19} parent=1 // pred_region
      %34 = dma.done [#allocation3], 16
    $region17: #{lpg_transformer_forward.19} parent=1 // pred_fallthru
      _
    // Predicated region
    $region18: #{lpg_transformer_forward.19} parent=1 // pred_check
      _
    $region19: #{lpg_transformer_forward.19} parent=1 // pred_check_branch
      %36 = sbr.rel (0) target = $region21
    $region20: #{lpg_transformer_forward.19} parent=1 // pred_region
      %37 = dma.done [#allocation5], 16
    $region21: #{lpg_transformer_forward.19} parent=1 // pred_fallthru
      _
    %v38 = vld [vmem:[%s0] sm:$0xf]
    %v39 = vunpack.c.l.bf16 %v38
    %v40 = vld [vmem:[#allocation2] sm:$0x1]
    %v41 = vld [vmem:[#allocation4] sm:$0x1]
    %42 = vadd.xlane.f32.xlu0 %v39
    %v43 = vpop.xlane.xlu0 %42
    %v44 = vmul.f32 %v43, 0.03125
    %v45 = vlaneseq
    %v46 = vand.u32 %v45, 127
    %vm47 = vcmp.lt.s32.totalorder %v46, 32
    %v48 = vsub.f32 %v39, %v44
    %v49 = vsel %vm47, %v48, 0.0
    %v50 = vmul.f32 %v49, %v49
    %51 = vadd.xlane.f32.xlu0 %v50
    %v52 = vpop.xlane.xlu0 %51
    %v53 = vmul.f32 %v52, 0.03125
    %v54 = vadd.f32 %v53, 1e-05
    %v55 = vrsqrt.pop %v54
    %v56 = vmul.f32 %v49, %v55
    %v58 = vlaneseq
    %v59 = vshrl.u32 %v58, 7
    %v60 = vsub.s32 0, %v59
    %v61 = vrot.slane %v40, %v60
    %v63 = vmul.f32 %v56, %v61
    %v65 = vlaneseq
    %v66 = vshrl.u32 %v65, 7
    %v67 = vsub.s32 0, %v66
    %v68 = vrot.slane %v41, %v67
    %v70 = vadd.f32 %v63, %v68
    %v71 = vpack.c.bf16 %v70, %v70
    %72 = vst [vmem:[%s3] sm:$0xf] %v71
    // Predicated region
    $region22: #{lpg_transformer_forward.19} parent=1 // pred_check
      _
    $region23: #{lpg_transformer_forward.19} parent=1 // pred_check_branch
      %74 = sbr.rel (0) target = $region25
    $region24: #{lpg_transformer_forward.19} parent=1 // pred_region
      _
    $region25: #{lpg_transformer_forward.19} parent=1 // pred_fallthru
      _
    // Predicated region
    $region26: #{lpg_transformer_forward.19} parent=1 // pred_check
      _
    $region27: #{lpg_transformer_forward.19} parent=1 // pred_check_branch
      %76 = sbr.rel (0) target = $region29
    $region28: #{lpg_transformer_forward.19} parent=1 // pred_region
      _
    $region29: #{lpg_transformer_forward.19} parent=1 // pred_fallthru
      _
    %77 = vsyncpa [#allocation3], 1
    %78 = vsyncpa [#allocation5], 1

// kernel: lpg_transformer_forward.27
$region0: #{lpg_transformer_forward.27}
  #allocation0 [shape = 'u32[]', space=smem, size = 0x4, offset = 0x4, fixed_abs, tag = 'smem constant byte address 0x4 - core index']
  #allocation1 [shape = 'u32[144,128]{1,0:T(1,128)}', space=vmem, size = 0x12000, scoped, tag = 'internal scratch']
  #allocation2 [shape = 'f32[16,128]{1,0:T(8,128)}', space=vmem, size = 0x2000, scoped, tag = 'scratch operand']
  %s0 = inlined_call_operand.vmem [shape: bf16[16,128], index: 0, kind: input, shape index: {}]
  %s1 = inlined_call_operand.hbm [shape: bf16[128,128], index: 1, kind: input, shape index: {}]
  %s2 = inlined_call_operand.hbm [shape: f32[1,128], index: 2, kind: input, shape index: {}]
  %s3 = inlined_call_operand.hbm [shape: f32[16,128], index: 3, kind: output, shape index: {}]
  %s4 = sld [smem:[#allocation0]]
  $region38: #{lpg_transformer_forward.27} parent=0
    _
  %s6 = ssub.s32 1, %s4
  %s7 = scalar_select 0, %s6, %s4
  $region1: #{lpg_transformer_forward.27} parent=0
    #allocation3 [shape = 'u8[32768]{0}', space=vmem, size = 0x8000, scoped, tag = 'input window, operand 1, single buffered']
    #allocation4 [shape = 's32[1]{0}', space=sflag, size = 0x4, scoped, tag = 'scoped memory for lpg_transformer_forward.27']
    #allocation5 [shape = 's32[1]{0}', space=sflag, size = 0x4, scoped, tag = 'scoped memory for lpg_transformer_forward.27']
    #allocation6 [shape = 'u8[512]{0}', space=vmem, size = 0x400, scoped, tag = 'input window, operand 2, single buffered']
    #allocation7 [shape = 's32[1]{0}', space=sflag, size = 0x4, scoped, tag = 'scoped memory for lpg_transformer_forward.27']
    #allocation8 [shape = 'u8[8192]{0}', space=vmem, size = 0x2000, scoped, tag = 'output window, operand 0, single buffered']
    %8 = vsyncpa [#allocation4], 0
    %9 = vsyncpa [#allocation7], 0
    %10 = vsyncpa [#allocation5], 0
    // Predicated region
    $region2: #{lpg_transformer_forward.27} parent=1 // pred_check
      _
    $region3: #{lpg_transformer_forward.27} parent=1 // pred_check_branch
      %12 = sbr.rel (0) target = $region5
    $region4: #{lpg_transformer_forward.27} parent=1 // pred_region
      _
    $region5: #{lpg_transformer_forward.27} parent=1 // pred_fallthru
      _
    // Predicated region
    $region6: #{lpg_transformer_forward.27} parent=1 // pred_check
      _
    $region7: #{lpg_transformer_forward.27} parent=1 // pred_check_branch
      %14 = sbr.rel (0) target = $region9
    $region8: #{lpg_transformer_forward.27} parent=1 // pred_region
      %s16 = ssub.s32 1024, 1024
      %17 = vsyncadd [#allocation4], %s16
      %s18 = sshll.u32 [#allocation3], 4
      %s19 = int_to_ptr.vmem [resolvable:$true] %s18
      %24 = dma.hbm_to_vmem [thread:$0]  %s1, 1024, %s19, [#allocation4], 64, 64, 4
    $region9: #{lpg_transformer_forward.27} parent=1 // pred_fallthru
      _
    // Predicated region
    $region10: #{lpg_transformer_forward.27} parent=1 // pred_check
      _
    $region11: #{lpg_transformer_forward.27} parent=1 // pred_check_branch
      %26 = sbr.rel (0) target = $region13
    $region12: #{lpg_transformer_forward.27} parent=1 // pred_region
      %s28 = ssub.s32 16, 16
      %29 = vsyncadd [#allocation7], %s28
      %s31 = sshll.u32 [#allocation6], 4
      %s32 = int_to_ptr.vmem [resolvable:$true] %s31
      %34 = dma.hbm_to_vmem [thread:$0]  %s2, 16, %s32, [#allocation7]
    $region13: #{lpg_transformer_forward.27} parent=1 // pred_fallthru
      _
    // Predicated region
    $region14: #{lpg_transformer_forward.27} parent=1 // pred_check
      _
    $region15: #{lpg_transformer_forward.27} parent=1 // pred_check_branch
      %36 = sbr.rel (0) target = $region17
    $region16: #{lpg_transformer_forward.27} parent=1 // pred_region
      %37 = dma.done [#allocation4], 1024
    $region17: #{lpg_transformer_forward.27} parent=1 // pred_fallthru
      _
    // Predicated region
    $region18: #{lpg_transformer_forward.27} parent=1 // pred_check
      _
    $region19: #{lpg_transformer_forward.27} parent=1 // pred_check_branch
      %39 = sbr.rel (0) target = $region21
    $region20: #{lpg_transformer_forward.27} parent=1 // pred_region
      %40 = dma.done [#allocation7], 16
    $region21: #{lpg_transformer_forward.27} parent=1 // pred_fallthru
      _
    %p42 = scmp.eq.s32.totalorder 0, 0
    // Predicated region
    $region22: #{lpg_transformer_forward.27} parent=1 // pred_check
      %p43 = pneg %p42
    $region23: #{lpg_transformer_forward.27} parent=1 // pred_check_branch
      %45 = sbr.rel (%p43) target = $region25
    $region24: #{lpg_transformer_forward.27} parent=1 // pred_region
      %46 = vst [vmem:[#allocation2] sm:$0xff] 0.0
      %47 = vst [vmem:[#allocation2 + $0x8] sm:$0xff] 0.0
    $region25: #{lpg_transformer_forward.27} parent=1 // pred_fallthru
      _
    %v48 = vld [vmem:[#allocation2] sm:$0xff]
    %v49 = vld [vmem:[#allocation2 + $0x8] sm:$0xff]
    %v50 = vld [vmem:[%s0] sm:$0xf]
    %v51 = vld [vmem:[%s0 + $0x4] sm:$0xf]
    %v52 = vld [vmem:[#allocation3] sm:$0xf]
    %v53 = vld [vmem:[#allocation3 + $0x4] sm:$0xf]
    %v54 = vld [vmem:[#allocation3 + $0x8] sm:$0xf]
    %v55 = vld [vmem:[#allocation3 + $0xc] sm:$0xf]
    %v56 = vld [vmem:[#allocation3 + $0x10] sm:$0xf]
    %v57 = vld [vmem:[#allocation3 + $0x14] sm:$0xf]
    %v58 = vld [vmem:[#allocation3 + $0x18] sm:$0xf]
    %v59 = vld [vmem:[#allocation3 + $0x1c] sm:$0xf]
    %v60 = vld [vmem:[#allocation3 + $0x20] sm:$0xf]
    %v61 = vld [vmem:[#allocation3 + $0x24] sm:$0xf]
    %v62 = vld [vmem:[#allocation3 + $0x28] sm:$0xf]
    %v63 = vld [vmem:[#allocation3 + $0x2c] sm:$0xf]
    %v64 = vld [vmem:[#allocation3 + $0x30] sm:$0xf]
    %v65 = vld [vmem:[#allocation3 + $0x34] sm:$0xf]
    %v66 = vld [vmem:[#allocation3 + $0x38] sm:$0xf]
    %v67 = vld [vmem:[#allocation3 + $0x3c] sm:$0xf]
    %v70 = vunpack.c.l.b16 %v50
    %v71 = vunpack.c.l.b16 %v51
    %v72 = vpack.c.b16 %v71, %v70
    %v90 = vunpack.c.l.b16 %v52
    %v91 = vunpack.c.l.b16 %v53
    %v92 = vunpack.c.l.b16 %v54
    %v93 = vunpack.c.l.b16 %v55
    %v94 = vunpack.c.l.b16 %v56
    %v95 = vunpack.c.l.b16 %v57
    %v96 = vunpack.c.l.b16 %v58
    %v97 = vunpack.c.l.b16 %v59
    %v98 = vunpack.c.l.b16 %v60
    %v99 = vunpack.c.l.b16 %v61
    %v100 = vunpack.c.l.b16 %v62
    %v101 = vunpack.c.l.b16 %v63
    %v102 = vunpack.c.l.b16 %v64
    %v103 = vunpack.c.l.b16 %v65
    %v104 = vunpack.c.l.b16 %v66
    %v105 = vunpack.c.l.b16 %v67
    %v106 = vpack.c.b16 %v91, %v90
    %v107 = vpack.c.b16 %v93, %v92
    %v108 = vpack.c.b16 %v95, %v94
    %v109 = vpack.c.b16 %v97, %v96
    %v110 = vpack.c.b16 %v99, %v98
    %v111 = vpack.c.b16 %v101, %v100
    %v112 = vpack.c.b16 %v103, %v102
    %v113 = vpack.c.b16 %v105, %v104
    %122 = vmatprep.subr.bf16.mxu0 0
    %123 = vmatpush1.bf16.msra.mxu0 %v113
    %124 = vmatprep.subr.bf16.mxu0 0
    %125 = vmatpush1.bf16.msra.mxu0 %v112
    %126 = vmatprep.subr.bf16.mxu0 0
    %127 = vmatpush1.bf16.msra.mxu0 %v111
    %128 = vmatprep.subr.bf16.mxu0 0
    %129 = vmatpush1.bf16.msra.mxu0 %v110
    %130 = vmatprep.subr.bf16.mxu0 0
    %131 = vmatpush1.bf16.msra.mxu0 %v109
    %132 = vmatprep.subr.bf16.mxu0 0
    %133 = vmatpush1.bf16.msra.mxu0 %v108
    %134 = vmatprep.subr.bf16.mxu0 0
    %135 = vmatpush1.bf16.msra.mxu0 %v107
    %136 = vmatprep.subr.bf16.mxu0 0
    %137 = vmatpush1.bf16.msra.mxu0 %v106
    %138 = vmatprep.subr.bf16.mxu0 0
    %139 = vmatpush2.bf16.msra.mxu0 0
    %140 = vmatprep.subr.bf16.mxu0 0
    %141 = vmatpush2.bf16.msra.mxu0 0
    %142 = vmatprep.subr.bf16.mxu0 0
    %143 = vmatpush2.bf16.msra.mxu0 0
    %144 = vmatprep.subr.bf16.mxu0 0
    %145 = vmatpush2.bf16.msra.mxu0 0
    %146 = vmatprep.subr.bf16.mxu0 0
    %147 = vmatpush2.bf16.msra.mxu0 0
    %148 = vmatprep.subr.bf16.mxu0 0
    %149 = vmatpush2.bf16.msra.mxu0 0
    %150 = vmatprep.subr.bf16.mxu0 0
    %151 = vmatpush2.bf16.msra.mxu0 0
    %152 = vmatprep.subr.bf16.mxu0 0
    %153 = vmatpush2.bf16.msra.mxu0 0
    %154 = vmatprep.mubr.bf16.mxu0 0
    %155 = vmatmul.mubr.bf16.gmra.mxu0 %v72
    %v156 = vpop.f32.mrf.mxu0
    %v157 = vadd.f32 0.0, %v156
    %v158 = vpop.f32.mrf.mxu0
    %v159 = vpop.f32.mrf.mxu0
    %v160 = vadd.f32 0.0, %v159
    %v161 = vpop.f32.mrf.mxu0
    %162 = vdwg.mxu0
    %v163 = vadd.f32 %v48, %v157
    %v164 = vadd.f32 %v49, %v160
    %165 = vst [vmem:[#allocation2] sm:$0xff] %v163
    %166 = vst [vmem:[#allocation2 + $0x8] sm:$0xff] %v164
    // Predicated region
    $region26: #{lpg_transformer_forward.27} parent=1 // pred_check
      %p167 = pneg %p42
    $region27: #{lpg_transformer_forward.27} parent=1 // pred_check_branch
      %169 = sbr.rel (%p167) target = $region29
    $region28: #{lpg_transformer_forward.27} parent=1 // pred_region
      %v170 = vld [vmem:[#allocation2] sm:$0xff]
      %v171 = vld [vmem:[#allocation2 + $0x8] sm:$0xff]
      %v172 = vld [vmem:[#allocation6] sm:$0x1]
      %v174 = vlaneseq
      %v175 = vshrl.u32 %v174, 7
      %v176 = vsub.s32 0, %v175
      %v177 = vrot.slane %v172, %v176
      %v179 = vadd.f32 %v170, %v177
      %v180 = vadd.f32 %v171, %v177
      %181 = vst [vmem:[#allocation8] sm:$0xff] %v179
      %182 = vst [vmem:[#allocation8 + $0x8] sm:$0xff] %v180
    $region29: #{lpg_transformer_forward.27} parent=1 // pred_fallthru
      _
    // Predicated region
    $region30: #{lpg_transformer_forward.27} parent=1 // pred_check
      _
    $region31: #{lpg_transformer_forward.27} parent=1 // pred_check_branch
      %184 = sbr.rel (0) target = $region33
    $region32: #{lpg_transformer_forward.27} parent=1 // pred_region
      %s186 = ssub.s32 256, 256
      %187 = vsyncadd [#allocation5], %s186
      %s188 = sshll.u32 [#allocation8], 4
      %s189 = int_to_ptr.vmem [resolvable:$true] %s188
      %194 = dma.vmem_to_hbm [thread:$0]  %s189, 256, %s3, [#allocation5], 128, 128, 8
    $region33: #{lpg_transformer_forward.27} parent=1 // pred_fallthru
      _
    // Predicated region
    $region34: #{lpg_transformer_forward.27} parent=1 // pred_check
      _
    $region35: #{lpg_transformer_forward.27} parent=1 // pred_check_branch
      %196 = sbr.rel (0) target = $region37
    $region36: #{lpg_transformer_forward.27} parent=1 // pred_region
      %197 = dma.done [#allocation5], 256
    $region37: #{lpg_transformer_forward.27} parent=1 // pred_fallthru
      _
    %198 = vsyncpa [#allocation4], 1
    %199 = vsyncpa [#allocation7], 1
    %200 = vsyncpa [#allocation5], 1

// kernel: lpg_transformer_forward.21
$region0: #{lpg_transformer_forward.21}
  #allocation0 [shape = 'u32[]', space=smem, size = 0x4, offset = 0x4, fixed_abs, tag = 'smem constant byte address 0x4 - core index']
  #allocation1 [shape = 'u32[144,128]{1,0:T(1,128)}', space=vmem, size = 0x12000, scoped, tag = 'internal scratch']
  %s0 = inlined_call_operand.vmem [shape: bf16[2,8,128], index: 0, kind: input, shape index: {}]
  %s1 = inlined_call_operand.vmem [shape: bf16[8,1,128], index: 1, kind: input, shape index: {}]
  %s2 = inlined_call_operand.hbm [shape: bf16[128,128], index: 2, kind: input, shape index: {}]
  %s3 = inlined_call_operand.hbm [shape: f32[1,128], index: 3, kind: input, shape index: {}]
  %s4 = inlined_call_operand.hbm [shape: bf16[128,128], index: 4, kind: input, shape index: {}]
  %s5 = inlined_call_operand.hbm [shape: f32[1,128], index: 5, kind: input, shape index: {}]
  %s6 = inlined_call_operand.hbm [shape: f32[1,128], index: 6, kind: input, shape index: {}]
  %s7 = inlined_call_operand.hbm [shape: f32[1,128], index: 7, kind: input, shape index: {}]
  %s8 = inlined_call_operand.vmem [shape: bf16[2,8,128], index: 8, kind: output, shape index: {}]
  %s9 = sld [smem:[#allocation0]]
  $region89: #{lpg_transformer_forward.21} parent=0
    _
  %s11 = ssub.s32 1, %s9
  %s12 = scalar_select 0, %s11, %s9
  $region1: #{lpg_transformer_forward.21} parent=0
    #allocation2 [shape = 'u8[32768]{0}', space=vmem, size = 0x8000, scoped, tag = 'input window, operand 2, single buffered']
    #allocation3 [shape = 's32[2]{0}', space=sflag, size = 0x8, scoped, tag = 'scoped memory for lpg_transformer_forward.21']
    #allocation4 [shape = 'u8[512]{0}', space=vmem, size = 0x400, scoped, tag = 'input window, operand 3, single buffered']
    #allocation5 [shape = 's32[1]{0}', space=sflag, size = 0x4, scoped, tag = 'scoped memory for lpg_transformer_forward.21']
    #allocation6 [shape = 'u8[32768]{0}', space=vmem, size = 0x8000, scoped, tag = 'input window, operand 4, single buffered']
    #allocation7 [shape = 'u8[512]{0}', space=vmem, size = 0x400, scoped, tag = 'input window, operand 5, single buffered']
    #allocation8 [shape = 's32[1]{0}', space=sflag, size = 0x4, scoped, tag = 'scoped memory for lpg_transformer_forward.21']
    #allocation9 [shape = 'u8[512]{0}', space=vmem, size = 0x400, scoped, tag = 'input window, operand 6, single buffered']
    #allocation10 [shape = 'u8[512]{0}', space=vmem, size = 0x400, scoped, tag = 'input window, operand 7, single buffered']
    #allocation11 [shape = 's32[1]{0}', space=sflag, size = 0x4, scoped, tag = 'scoped memory for lpg_transformer_forward.21']
    %13 = vsyncpa [#allocation3], 0
    %14 = vsyncpa [#allocation5], 0
    %15 = vsyncpa [#allocation8], 0
    %16 = vsyncpa [#allocation11], 0
    loop: start=0, step=1, limit=4
    $region2: #{lpg_transformer_forward.21} parent=1 // loop_pre_header
      _
    $region3: #{lpg_transformer_forward.21} parent=1 // loop_header
      %s18 = sphi 0, %s22
      %p19 = scmp.ge.s32.totalorder %s18, 4
      %s28 = sphi 0, %s30
      %s31 = sphi 0, %s28
      %s32 = sphi 0, %s31
      %s48 = sphi 0, %s32
      %s54 = sphi 0, %s56
      %s57 = sphi 0, %s54
      %s58 = sphi 0, %s57
      %s74 = sphi 0, %s58
      %s78 = sphi 0, %s78
      %s80 = sphi 0, %s78
      %s81 = sphi 0, %s80
      %s95 = sphi 0, %s81
      %s99 = sphi 0, %s99
      %s101 = sphi 0, %s99
      %s102 = sphi 0, %s101
      %s116 = sphi 0, %s102
      %s120 = sphi 0, %s120
      %s122 = sphi 0, %s120
      %s123 = sphi 0, %s122
      %s137 = sphi 0, %s123
      %s141 = sphi 0, %s141
      %s143 = sphi 0, %s141
      %s144 = sphi 0, %s143
      %s158 = sphi 0, %s144
      %s162 = sphi 0, %s162
      %s164 = sphi 0, %s162
      %s165 = sphi 0, %s164
      %s179 = sphi 0, %s165
      %s183 = sphi 0, %s183
      %s185 = sphi 0, %s183
      %s186 = sphi 0, %s185
      %s200 = sphi 0, %s186
      %s206 = sphi 0, %s208
      %s209 = sphi 0, %s206
      %s210 = sphi 0, %s209
      %s226 = sphi 0, %s210
    $region4: #{lpg_transformer_forward.21} parent=1 // loop_header_branch
      %21 = sbr.rel (%p19) target = $region8
    $region5: #{lpg_transformer_forward.21} parent=1 // loop_body
      %s23 = ssub.s32 %s18, 1
      %s24 = ssub.s32 %s18, 2
      %s25 = sadd.s32 %s18, 1
      %s26 = ssub.s32 %s18, %s25
      %p27 = scmp.eq.s32.totalorder %s26, 0
      %s29 = sadd.s32 %s28, 1
      %s30 = scalar_select %p27, %s28, %s29
      %p33 = pneg %p27
      %p34 = scmp.eq.s32.totalorder %s18, 1
      %p35 = por %p33, %p34
      %p36 = scmp.ne.s32.totalorder %s28, %s31
      %p37 = scmp.eq.s32.totalorder %s18, 0
      %p38 = por %p36, %p37
      %p39 = scmp.ne.s32.totalorder %s28, %s31
      %p40 = scmp.eq.s32.totalorder %s23, 1
      %p41 = por %p39, %p40
      %p42 = scmp.ne.s32.totalorder %s31, %s32
      %p43 = scmp.eq.s32.totalorder %s23, 0
      %p44 = por %p42, %p43
      %p45 = scmp.ne.s32.totalorder %s31, %s32
      %p46 = scmp.eq.s32.totalorder %s24, 1
      %p47 = por %p45, %p46
      %p49 = scmp.ne.s32.totalorder %s32, %s48
      %p50 = scmp.eq.s32.totalorder %s24, 0
      %p51 = por %p49, %p50
      %s52 = ssub.s32 %s18, %s25
      %p53 = scmp.eq.s32.totalorder %s52, 0
      %s55 = sadd.s32 %s54, 1
      %s56 = scalar_select %p53, %s54, %s55
      %p59 = pneg %p53
      %p60 = scmp.eq.s32.totalorder %s18, 1
      %p61 = por %p59, %p60
      %p62 = scmp.ne.s32.totalorder %s54, %s57
      %p63 = scmp.eq.s32.totalorder %s18, 0
      %p64 = por %p62, %p63
      %p65 = scmp.ne.s32.totalorder %s54, %s57
      %p66 = scmp.eq.s32.totalorder %s23, 1
      %p67 = por %p65, %p66
      %p68 = scmp.ne.s32.totalorder %s57, %s58
      %p69 = scmp.eq.s32.totalorder %s23, 0
      %p70 = por %p68, %p69
      %p71 = scmp.ne.s32.totalorder %s57, %s58
      %p72 = scmp.eq.s32.totalorder %s24, 1
      %p73 = por %p71, %p72
      %p75 = scmp.ne.s32.totalorder %s58, %s74
      %p76 = scmp.eq.s32.totalorder %s24, 0
      %p77 = por %p75, %p76
      %s79 = sadd.s32 %s78, 1
      %p82 = scmp.eq.s32.totalorder %s18, 1
      %p83 = scmp.ne.s32.totalorder %s78, %s80
      %p84 = scmp.eq.s32.totalorder %s18, 0
      %p85 = por %p83, %p84
      %p86 = scmp.ne.s32.totalorder %s78, %s80
      %p87 = scmp.eq.s32.totalorder %s23, 1
      %p88 = por %p86, %p87
      %p89 = scmp.ne.s32.totalorder %s80, %s81
      %p90 = scmp.eq.s32.totalorder %s23, 0
      %p91 = por %p89, %p90
      %p92 = scmp.ne.s32.totalorder %s80, %s81
      %p93 = scmp.eq.s32.totalorder %s24, 1
      %p94 = por %p92, %p93
      %p96 = scmp.ne.s32.totalorder %s81, %s95
      %p97 = scmp.eq.s32.totalorder %s24, 0
      %p98 = por %p96, %p97
      %s100 = sadd.s32 %s99, 1
      %p103 = scmp.eq.s32.totalorder %s18, 1
      %p104 = scmp.ne.s32.totalorder %s99, %s101
      %p105 = scmp.eq.s32.totalorder %s18, 0
      %p106 = por %p104, %p105
      %p107 = scmp.ne.s32.totalorder %s99, %s101
      %p108 = scmp.eq.s32.totalorder %s23, 1
      %p109 = por %p107, %p108
      %p110 = scmp.ne.s32.totalorder %s101, %s102
      %p111 = scmp.eq.s32.totalorder %s23, 0
      %p112 = por %p110, %p111
      %p113 = scmp.ne.s32.totalorder %s101, %s102
      %p114 = scmp.eq.s32.totalorder %s24, 1
      %p115 = por %p113, %p114
      %p117 = scmp.ne.s32.totalorder %s102, %s116
      %p118 = scmp.eq.s32.totalorder %s24, 0
      %p119 = por %p117, %p118
      %s121 = sadd.s32 %s120, 1
      %p124 = scmp.eq.s32.totalorder %s18, 1
      %p125 = scmp.ne.s32.totalorder %s120, %s122
      %p126 = scmp.eq.s32.totalorder %s18, 0
      %p127 = por %p125, %p126
      %p128 = scmp.ne.s32.totalorder %s120, %s122
      %p129 = scmp.eq.s32.totalorder %s23, 1
      %p130 = por %p128, %p129
      %p131 = scmp.ne.s32.totalorder %s122, %s123
      %p132 = scmp.eq.s32.totalorder %s23, 0
      %p133 = por %p131, %p132
      %p134 = scmp.ne.s32.totalorder %s122, %s123
      %p135 = scmp.eq.s32.totalorder %s24, 1
      %p136 = por %p134, %p135
      %p138 = scmp.ne.s32.totalorder %s123, %s137
      %p139 = scmp.eq.s32.totalorder %s24, 0
      %p140 = por %p138, %p139
      %s142 = sadd.s32 %s141, 1
      %p145 = scmp.eq.s32.totalorder %s18, 1
      %p146 = scmp.ne.s32.totalorder %s141, %s143
      %p147 = scmp.eq.s32.totalorder %s18, 0
      %p148 = por %p146, %p147
      %p149 = scmp.ne.s32.totalorder %s141, %s143
      %p150 = scmp.eq.s32.totalorder %s23, 1
      %p151 = por %p149, %p150
      %p152 = scmp.ne.s32.totalorder %s143, %s144
      %p153 = scmp.eq.s32.totalorder %s23, 0
      %p154 = por %p152, %p153
      %p155 = scmp.ne.s32.totalorder %s143, %s144
      %p156 = scmp.eq.s32.totalorder %s24, 1
      %p157 = por %p155, %p156
      %p159 = scmp.ne.s32.totalorder %s144, %s158
      %p160 = scmp.eq.s32.totalorder %s24, 0
      %p161 = por %p159, %p160
      %s163 = sadd.s32 %s162, 1
      %p166 = scmp.eq.s32.totalorder %s18, 1
      %p167 = scmp.ne.s32.totalorder %s162, %s164
      %p168 = scmp.eq.s32.totalorder %s18, 0
      %p169 = por %p167, %p168
      %p170 = scmp.ne.s32.totalorder %s162, %s164
      %p171 = scmp.eq.s32.totalorder %s23, 1
      %p172 = por %p170, %p171
      %p173 = scmp.ne.s32.totalorder %s164, %s165
      %p174 = scmp.eq.s32.totalorder %s23, 0
      %p175 = por %p173, %p174
      %p176 = scmp.ne.s32.totalorder %s164, %s165
      %p177 = scmp.eq.s32.totalorder %s24, 1
      %p178 = por %p176, %p177
      %p180 = scmp.ne.s32.totalorder %s165, %s179
      %p181 = scmp.eq.s32.totalorder %s24, 0
      %p182 = por %p180, %p181
      %s184 = sadd.s32 %s183, 1
      %p187 = scmp.eq.s32.totalorder %s18, 1
      %p188 = scmp.ne.s32.totalorder %s183, %s185
      %p189 = scmp.eq.s32.totalorder %s18, 0
      %p190 = por %p188, %p189
      %p191 = scmp.ne.s32.totalorder %s183, %s185
      %p192 = scmp.eq.s32.totalorder %s23, 1
      %p193 = por %p191, %p192
      %p194 = scmp.ne.s32.totalorder %s185, %s186
      %p195 = scmp.eq.s32.totalorder %s23, 0
      %p196 = por %p194, %p195
      %p197 = scmp.ne.s32.totalorder %s185, %s186
      %p198 = scmp.eq.s32.totalorder %s24, 1
      %p199 = por %p197, %p198
      %p201 = scmp.ne.s32.totalorder %s186, %s200
      %p202 = scmp.eq.s32.totalorder %s24, 0
      %p203 = por %p201, %p202
      %s204 = ssub.s32 %s18, %s25
      %p205 = scmp.eq.s32.totalorder %s204, 0
      %s207 = sadd.s32 %s206, 1
      %s208 = scalar_select %p205, %s206, %s207
      %p211 = pneg %p205
      %p212 = scmp.eq.s32.totalorder %s18, 1
      %p213 = por %p211, %p212
      %p214 = scmp.ne.s32.totalorder %s206, %s209
      %p215 = scmp.eq.s32.totalorder %s18, 0
      %p216 = por %p214, %p215
      %p217 = scmp.ne.s32.totalorder %s206, %s209
      %p218 = scmp.eq.s32.totalorder %s23, 1
      %p219 = por %p217, %p218
      %p220 = scmp.ne.s32.totalorder %s209, %s210
      %p221 = scmp.eq.s32.totalorder %s23, 0
      %p222 = por %p220, %p221
      %p223 = scmp.ne.s32.totalorder %s209, %s210
      %p224 = scmp.eq.s32.totalorder %s24, 1
      %p225 = por %p223, %p224
      %p227 = scmp.ne.s32.totalorder %s210, %s226
      %p228 = scmp.eq.s32.totalorder %s24, 0
      %p229 = por %p227, %p228
      %p230 = scmp.le.s32.totalorder 1, %s18
      %p231 = scmp.lt.s32.totalorder %s18, 3
      %p232 = pnand %p230, %p231
      %p233 = pneg %p232
      // Predicated region
      $region9: #{lpg_transformer_forward.21} parent=5 // pred_check
        _
      $region10: #{lpg_transformer_forward.21} parent=5 // pred_check_branch
        %235 = sbr.rel (%p232) target = $region12
      $region11: #{lpg_transformer_forward.21} parent=5 // pred_region
        %s236 = ssub.s32 %s18, 1
        // Predicated region
        $region13: #{lpg_transformer_forward.21} parent=11 // pred_check
          %p237 = pneg %p91
        $region14: #{lpg_transformer_forward.21} parent=11 // pred_check_branch
          %239 = sbr.rel (%p237) target = $region16
        $region15: #{lpg_transformer_forward.21} parent=11 // pred_region
          %s241 = ssub.s32 1024, 1024
          %242 = vsyncadd [#allocation3], %s241
          %s243 = sshll.u32 [#allocation2], 4
          %s244 = int_to_ptr.vmem [resolvable:$true] %s243
          %249 = dma.hbm_to_vmem [thread:$0]  %s2, 1024, %s244, [#allocation3], 64, 64, 4
        $region16: #{lpg_transformer_forward.21} parent=11 // pred_fallthru
          _
        // Predicated region
        $region17: #{lpg_transformer_forward.21} parent=11 // pred_check
          %p250 = pneg %p112
        $region18: #{lpg_transformer_forward.21} parent=11 // pred_check_branch
          %252 = sbr.rel (%p250) target = $region20
        $region19: #{lpg_transformer_forward.21} parent=11 // pred_region
          %s254 = ssub.s32 16, 16
          %255 = vsyncadd [#allocation5], %s254
          %s257 = sshll.u32 [#allocation4], 4
          %s258 = int_to_ptr.vmem [resolvable:$true] %s257
          %260 = dma.hbm_to_vmem [thread:$0]  %s3, 16, %s258, [#allocation5]
        $region20: #{lpg_transformer_forward.21} parent=11 // pred_fallthru
          _
        // Predicated region
        $region21: #{lpg_transformer_forward.21} parent=11 // pred_check
          %p261 = pneg %p133
        $region22: #{lpg_transformer_forward.21} parent=11 // pred_check_branch
          %263 = sbr.rel (%p261) target = $region24
        $region23: #{lpg_transformer_forward.21} parent=11 // pred_region
          %s265 = ssub.s32 1024, 1024
          %266 = vsyncadd [#allocation5], %s265
          %s267 = sshll.u32 [#allocation6], 4
          %s268 = int_to_ptr.vmem [resolvable:$true] %s267
          %273 = dma.hbm_to_vmem [thread:$0]  %s4, 1024, %s268, [#allocation5], 64, 64, 4
        $region24: #{lpg_transformer_forward.21} parent=11 // pred_fallthru
          _
        // Predicated region
        $region25: #{lpg_transformer_forward.21} parent=11 // pred_check
          %p274 = pneg %p154
        $region26: #{lpg_transformer_forward.21} parent=11 // pred_check_branch
          %276 = sbr.rel (%p274) target = $region28
        $region27: #{lpg_transformer_forward.21} parent=11 // pred_region
          %s278 = ssub.s32 16, 16
          %279 = vsyncadd [#allocation8], %s278
          %s281 = sshll.u32 [#allocation7], 4
          %s282 = int_to_ptr.vmem [resolvable:$true] %s281
          %284 = dma.hbm_to_vmem [thread:$0]  %s5, 16, %s282, [#allocation8]
        $region28: #{lpg_transformer_forward.21} parent=11 // pred_fallthru
          _
        // Predicated region
        $region29: #{lpg_transformer_forward.21} parent=11 // pred_check
          %p285 = pneg %p175
        $region30: #{lpg_transformer_forward.21} parent=11 // pred_check_branch
          %287 = sbr.rel (%p285) target = $region32
        $region31: #{lpg_transformer_forward.21} parent=11 // pred_region
          %s289 = ssub.s32 16, 16
          %290 = vsyncadd [#allocation8], %s289
          %s292 = sshll.u32 [#allocation9], 4
          %s293 = int_to_ptr.vmem [resolvable:$true] %s292
          %295 = dma.hbm_to_vmem [thread:$0]  %s6, 16, %s293, [#allocation8]
        $region32: #{lpg_transformer_forward.21} parent=11 // pred_fallthru
          _
        // Predicated region
        $region33: #{lpg_transformer_forward.21} parent=11 // pred_check
          %p296 = pneg %p196
        $region34: #{lpg_transformer_forward.21} parent=11 // pred_check_branch
          %298 = sbr.rel (%p296) target = $region36
        $region35: #{lpg_transformer_forward.21} parent=11 // pred_region
          %s300 = ssub.s32 16, 16
          %301 = vsyncadd [#allocation11], %s300
          %s303 = sshll.u32 [#allocation10], 4
          %s304 = int_to_ptr.vmem [resolvable:$true] %s303
          %306 = dma.hbm_to_vmem [thread:$0]  %s7, 16, %s304, [#allocation11]
        $region36: #{lpg_transformer_forward.21} parent=11 // pred_fallthru
          _
      $region12: #{lpg_transformer_forward.21} parent=5 // pred_fallthru
        _
      %p307 = scmp.lt.s32.totalorder %s18, 2
      // Predicated region
      $region37: #{lpg_transformer_forward.21} parent=5 // pred_check
        %p308 = pneg %p307
      $region38: #{lpg_transformer_forward.21} parent=5 // pred_check_branch
        %310 = sbr.rel (%p308) target = $region40
      $region39: #{lpg_transformer_forward.21} parent=5 // pred_region
        // Predicated region
        $region41: #{lpg_transformer_forward.21} parent=39 // pred_check
          %p311 = pneg %p38
        $region42: #{lpg_transformer_forward.21} parent=39 // pred_check_branch
          %313 = sbr.rel (%p311) target = $region44
        $region43: #{lpg_transformer_forward.21} parent=39 // pred_region
          %p314 = scmp.lt.s32.totalorder %s18, 1
          %s315 = scalar_select %p314, %s18, 1
          %s316 = smul.addr %s315, 4
          %s317 = scalar_lea.vmem %s0, %s316
        $region44: #{lpg_transformer_forward.21} parent=39 // pred_fallthru
          _
        // Predicated region
        $region45: #{lpg_transformer_forward.21} parent=39 // pred_check
          %p318 = pneg %p64
        $region46: #{lpg_transformer_forward.21} parent=39 // pred_check_branch
          %320 = sbr.rel (%p318) target = $region48
        $region47: #{lpg_transformer_forward.21} parent=39 // pred_region
          %p321 = scmp.lt.s32.totalorder %s18, 7
          %s322 = scalar_select %p321, %s18, 7
          %s323 = scalar_lea.vmem %s1, %s322
        $region48: #{lpg_transformer_forward.21} parent=39 // pred_fallthru
          _
      $region40: #{lpg_transformer_forward.21} parent=5 // pred_fallthru
        _
      %p324 = scmp.le.s32.totalorder 1, %s18
      %p325 = scmp.lt.s32.totalorder %s18, 3
      %p326 = pnand %p324, %p325
      %p327 = pneg %p326
      // Predicated region
      $region49: #{lpg_transformer_forward.21} parent=5 // pred_check
        _
      $region50: #{lpg_transformer_forward.21} parent=5 // pred_check_branch
        %329 = sbr.rel (%p326) target = $region52
      $region51: #{lpg_transformer_forward.21} parent=5 // pred_region
        %s330 = ssub.s32 %s18, 1
        // Predicated region
        $region53: #{lpg_transformer_forward.21} parent=51 // pred_check
          %p331 = pneg %p91
        $region54: #{lpg_transformer_forward.21} parent=51 // pred_check_branch
          %333 = sbr.rel (%p331) target = $region56
        $region55: #{lpg_transformer_forward.21} parent=51 // pred_region
          %334 = dma.done [#allocation3], 1024
        $region56: #{lpg_transformer_forward.21} parent=51 // pred_fallthru
          _
        // Predicated region
        $region57: #{lpg_transformer_forward.21} parent=51 // pred_check
          %p335 = pneg %p112
        $region58: #{lpg_transformer_forward.21} parent=51 // pred_check_branch
          %337 = sbr.rel (%p335) target = $region60
        $region59: #{lpg_transformer_forward.21} parent=51 // pred_region
          %338 = dma.done [#allocation5], 16
        $region60: #{lpg_transformer_forward.21} parent=51 // pred_fallthru
          _
        // Predicated region
        $region61: #{lpg_transformer_forward.21} parent=51 // pred_check
          %p339 = pneg %p133
        $region62: #{lpg_transformer_forward.21} parent=51 // pred_check_branch
          %341 = sbr.rel (%p339) target = $region64
        $region63: #{lpg_transformer_forward.21} parent=51 // pred_region
          %342 = dma.done [#allocation5], 1024
        $region64: #{lpg_transformer_forward.21} parent=51 // pred_fallthru
          _
        // Predicated region
        $region65: #{lpg_transformer_forward.21} parent=51 // pred_check
          %p343 = pneg %p154
        $region66: #{lpg_transformer_forward.21} parent=51 // pred_check_branch
          %345 = sbr.rel (%p343) target = $region68
        $region67: #{lpg_transformer_forward.21} parent=51 // pred_region
          %346 = dma.done [#allocation8], 16
        $region68: #{lpg_transformer_forward.21} parent=51 // pred_fallthru
          _
        // Predicated region
        $region69: #{lpg_transformer_forward.21} parent=51 // pred_check
          %p347 = pneg %p175
        $region70: #{lpg_transformer_forward.21} parent=51 // pred_check_branch
          %349 = sbr.rel (%p347) target = $region72
        $region71: #{lpg_transformer_forward.21} parent=51 // pred_region
          %350 = dma.done [#allocation8], 16
        $region72: #{lpg_transformer_forward.21} parent=51 // pred_fallthru
          _
        // Predicated region
        $region73: #{lpg_transformer_forward.21} parent=51 // pred_check
          %p351 = pneg %p196
        $region74: #{lpg_transformer_forward.21} parent=51 // pred_check_branch
          %353 = sbr.rel (%p351) target = $region76
        $region75: #{lpg_transformer_forward.21} parent=51 // pred_region
          %354 = dma.done [#allocation11], 16
        $region76: #{lpg_transformer_forward.21} parent=51 // pred_fallthru
          _
        %p355 = scmp.lt.s32.totalorder %s23, 1
        %s356 = scalar_select %p355, %s23, 1
        %s357 = smul.addr %s356, 4
        %s358 = scalar_lea.vmem %s0, %s357
        %p359 = pneg %p44
        %p360 = pneg %p41
        %p361 = scmp.lt.s32.totalorder %s23, 7
        %s362 = scalar_select %p361, %s23, 7
        %s363 = scalar_lea.vmem %s1, %s362
        %p364 = pneg %p70
        %p365 = pneg %p67
        %p366 = pneg %p91
        %p367 = pneg %p88
        %p368 = pneg %p112
        %p369 = pneg %p109
        %p370 = pneg %p133
        %p371 = pneg %p130
        %p372 = pneg %p154
        %p373 = pneg %p151
        %p374 = pneg %p175
        %p375 = pneg %p172
        %p376 = pneg %p196
        %p377 = pneg %p193
        %p378 = pneg %p222
        %p379 = pneg %p219
        %p380 = scmp.lt.s32.totalorder %s23, 1
        %s381 = scalar_select %p380, %s23, 1
        %s382 = smul.addr %s381, 4
        %s383 = scalar_lea.vmem %s8, %s382
        %p384 = scmp.lt.s32.totalorder %s23, 1
        %s385 = scalar_select %p384, %s23, 1
        %s386 = smul.addr %s385, 4
        %s387 = scalar_lea.vmem %s0, %s386
        %p388 = scmp.lt.s32.totalorder %s23, 7
        %s389 = scalar_select %p388, %s23, 7
        %s390 = scalar_lea.vmem %s1, %s389
        %p391 = scmp.lt.s32.totalorder %s23, 1
        %s392 = scalar_select %p391, %s23, 1
        %s393 = smul.addr %s392, 4
        %s394 = scalar_lea.vmem %s8, %s393
        %v396 = vld [vmem:[%s387] sm:$0xf]
        %v397 = vunpack.c.l.bf16 %v396
        %v398 = vld [vmem:[%s390] sm:$0x1]
        %v400 = vpack.i.b16 %v398, %v398
        %v402 = vlaneseq
        %v403 = vshrl.u32 %v402, 7
        %v404 = vsub.s32 0, %v403
        %v405 = vrot.slane %v400, %v404
        %v406 = vld [vmem:[#allocation2] sm:$0xf]
        %v407 = vld [vmem:[#allocation2 + $0x4] sm:$0xf]
        %v408 = vld [vmem:[#allocation2 + $0x8] sm:$0xf]
        %v409 = vld [vmem:[#allocation2 + $0xc] sm:$0xf]
        %v410 = vld [vmem:[#allocation2 + $0x10] sm:$0xf]
        %v411 = vld [vmem:[#allocation2 + $0x14] sm:$0xf]
        %v412 = vld [vmem:[#allocation2 + $0x18] sm:$0xf]
        %v413 = vld [vmem:[#allocation2 + $0x1c] sm:$0xf]
        %v414 = vld [vmem:[#allocation2 + $0x20] sm:$0xf]
        %v415 = vld [vmem:[#allocation2 + $0x24] sm:$0xf]
        %v416 = vld [vmem:[#allocation2 + $0x28] sm:$0xf]
        %v417 = vld [vmem:[#allocation2 + $0x2c] sm:$0xf]
        %v418 = vld [vmem:[#allocation2 + $0x30] sm:$0xf]
        %v419 = vld [vmem:[#allocation2 + $0x34] sm:$0xf]
        %v420 = vld [vmem:[#allocation2 + $0x38] sm:$0xf]
        %v421 = vld [vmem:[#allocation2 + $0x3c] sm:$0xf]
        %v422 = vld [vmem:[#allocation4] sm:$0x1]
        %v424 = vlaneseq
        %v425 = vshrl.u32 %v424, 7
        %v426 = vsub.s32 0, %v425
        %v427 = vrot.slane %v422, %v426
        %v445 = vunpack.c.l.b16 %v406
        %v446 = vunpack.c.l.b16 %v407
        %v447 = vunpack.c.l.b16 %v408
        %v448 = vunpack.c.l.b16 %v409
        %v449 = vunpack.c.l.b16 %v410
        %v450 = vunpack.c.l.b16 %v411
        %v451 = vunpack.c.l.b16 %v412
        %v452 = vunpack.c.l.b16 %v413
        %v453 = vunpack.c.l.b16 %v414
        %v454 = vunpack.c.l.b16 %v415
        %v455 = vunpack.c.l.b16 %v416
        %v456 = vunpack.c.l.b16 %v417
        %v457 = vunpack.c.l.b16 %v418
        %v458 = vunpack.c.l.b16 %v419
        %v459 = vunpack.c.l.b16 %v420
        %v460 = vunpack.c.l.b16 %v421
        %v461 = vpack.c.b16 %v446, %v445
        %v462 = vpack.c.b16 %v448, %v447
        %v463 = vpack.c.b16 %v450, %v449
        %v464 = vpack.c.b16 %v452, %v451
        %v465 = vpack.c.b16 %v454, %v453
        %v466 = vpack.c.b16 %v456, %v455
        %v467 = vpack.c.b16 %v458, %v457
        %v468 = vpack.c.b16 %v460, %v459
        %477 = vmatprep.subr.bf16.mxu0 0
        %478 = vmatpush1.bf16.msra.mxu0 %v468
        %479 = vmatprep.subr.bf16.mxu0 0
        %480 = vmatpush1.bf16.msra.mxu0 %v467
        %481 = vmatprep.subr.bf16.mxu0 0
        %482 = vmatpush1.bf16.msra.mxu0 %v466
        %483 = vmatprep.subr.bf16.mxu0 0
        %484 = vmatpush1.bf16.msra.mxu0 %v465
        %485 = vmatprep.subr.bf16.mxu0 0
        %486 = vmatpush1.bf16.msra.mxu0 %v464
        %487 = vmatprep.subr.bf16.mxu0 0
        %488 = vmatpush1.bf16.msra.mxu0 %v463
        %489 = vmatprep.subr.bf16.mxu0 0
        %490 = vmatpush1.bf16.msra.mxu0 %v462
        %491 = vmatprep.subr.bf16.mxu0 0
        %492 = vmatpush1.bf16.msra.mxu0 %v461
        %493 = vmatprep.subr.bf16.mxu0 0
        %494 = vmatpush2.bf16.msra.mxu0 0
        %495 = vmatprep.subr.bf16.mxu0 0
        %496 = vmatpush2.bf16.msra.mxu0 0
        %497 = vmatprep.subr.bf16.mxu0 0
        %498 = vmatpush2.bf16.msra.mxu0 0
        %499 = vmatprep.subr.bf16.mxu0 0
        %500 = vmatpush2.bf16.msra.mxu0 0
        %501 = vmatprep.subr.bf16.mxu0 0
        %502 = vmatpush2.bf16.msra.mxu0 0
        %503 = vmatprep.subr.bf16.mxu0 0
        %504 = vmatpush2.bf16.msra.mxu0 0
        %505 = vmatprep.subr.bf16.mxu0 0
        %506 = vmatpush2.bf16.msra.mxu0 0
        %507 = vmatprep.subr.bf16.mxu0 0
        %508 = vmatpush2.bf16.msra.mxu0 0
        %509 = vmatprep.mubr.bf16.mxu0 0
        %510 = vmatmul.mubr.bf16.gmra.mxu0 %v405
        %v511 = vpop.f32.mrf.mxu0
        %v512 = vadd.f32 %v427, %v511
        %v513 = vpop.f32.mrf.mxu0
        %v514 = vpop.f32.mrf.mxu0
        %v515 = vpop.f32.mrf.mxu0
        %516 = vdwg.mxu0
        %v517 = vpack.c.bf16 %v512, %v512
        %v518 = vld [vmem:[#allocation6] sm:$0xf]
        %v519 = vld [vmem:[#allocation6 + $0x4] sm:$0xf]
        %v520 = vld [vmem:[#allocation6 + $0x8] sm:$0xf]
        %v521 = vld [vmem:[#allocation6 + $0xc] sm:$0xf]
        %v522 = vld [vmem:[#allocation6 + $0x10] sm:$0xf]
        %v523 = vld [vmem:[#allocation6 + $0x14] sm:$0xf]
        %v524 = vld [vmem:[#allocation6 + $0x18] sm:$0xf]
        %v525 = vld [vmem:[#allocation6 + $0x1c] sm:$0xf]
        %v526 = vld [vmem:[#allocation6 + $0x20] sm:$0xf]
        %v527 = vld [vmem:[#allocation6 + $0x24] sm:$0xf]
        %v528 = vld [vmem:[#allocation6 + $0x28] sm:$0xf]
        %v529 = vld [vmem:[#allocation6 + $0x2c] sm:$0xf]
        %v530 = vld [vmem:[#allocation6 + $0x30] sm:$0xf]
        %v531 = vld [vmem:[#allocation6 + $0x34] sm:$0xf]
        %v532 = vld [vmem:[#allocation6 + $0x38] sm:$0xf]
        %v533 = vld [vmem:[#allocation6 + $0x3c] sm:$0xf]
        %v534 = vld [vmem:[#allocation7] sm:$0x1]
        %v536 = vlaneseq
        %v537 = vshrl.u32 %v536, 7
        %v538 = vsub.s32 0, %v537
        %v539 = vrot.slane %v534, %v538
        %v557 = vunpack.c.l.b16 %v518
        %v558 = vunpack.c.l.b16 %v519
        %v559 = vunpack.c.l.b16 %v520
        %v560 = vunpack.c.l.b16 %v521
        %v561 = vunpack.c.l.b16 %v522
        %v562 = vunpack.c.l.b16 %v523
        %v563 = vunpack.c.l.b16 %v524
        %v564 = vunpack.c.l.b16 %v525
        %v565 = vunpack.c.l.b16 %v526
        %v566 = vunpack.c.l.b16 %v527
        %v567 = vunpack.c.l.b16 %v528
        %v568 = vunpack.c.l.b16 %v529
        %v569 = vunpack.c.l.b16 %v530
        %v570 = vunpack.c.l.b16 %v531
        %v571 = vunpack.c.l.b16 %v532
        %v572 = vunpack.c.l.b16 %v533
        %v573 = vpack.c.b16 %v558, %v557
        %v574 = vpack.c.b16 %v560, %v559
        %v575 = vpack.c.b16 %v562, %v561
        %v576 = vpack.c.b16 %v564, %v563
        %v577 = vpack.c.b16 %v566, %v565
        %v578 = vpack.c.b16 %v568, %v567
        %v579 = vpack.c.b16 %v570, %v569
        %v580 = vpack.c.b16 %v572, %v571
        %589 = vmatprep.subr.bf16.mxu0 0
        %590 = vmatpush1.bf16.msra.mxu0 %v580
        %591 = vmatprep.subr.bf16.mxu0 0
        %592 = vmatpush1.bf16.msra.mxu0 %v579
        %593 = vmatprep.subr.bf16.mxu0 0
        %594 = vmatpush1.bf16.msra.mxu0 %v578
        %595 = vmatprep.subr.bf16.mxu0 0
        %596 = vmatpush1.bf16.msra.mxu0 %v577
        %597 = vmatprep.subr.bf16.mxu0 0
        %598 = vmatpush1.bf16.msra.mxu0 %v576
        %599 = vmatprep.subr.bf16.mxu0 0
        %600 = vmatpush1.bf16.msra.mxu0 %v575
        %601 = vmatprep.subr.bf16.mxu0 0
        %602 = vmatpush1.bf16.msra.mxu0 %v574
        %603 = vmatprep.subr.bf16.mxu0 0
        %604 = vmatpush1.bf16.msra.mxu0 %v573
        %605 = vmatprep.subr.bf16.mxu0 0
        %606 = vmatpush2.bf16.msra.mxu0 0
        %607 = vmatprep.subr.bf16.mxu0 0
        %608 = vmatpush2.bf16.msra.mxu0 0
        %609 = vmatprep.subr.bf16.mxu0 0
        %610 = vmatpush2.bf16.msra.mxu0 0
        %611 = vmatprep.subr.bf16.mxu0 0
        %612 = vmatpush2.bf16.msra.mxu0 0
        %613 = vmatprep.subr.bf16.mxu0 0
        %614 = vmatpush2.bf16.msra.mxu0 0
        %615 = vmatprep.subr.bf16.mxu0 0
        %616 = vmatpush2.bf16.msra.mxu0 0
        %617 = vmatprep.subr.bf16.mxu0 0
        %618 = vmatpush2.bf16.msra.mxu0 0
        %619 = vmatprep.subr.bf16.mxu0 0
        %620 = vmatpush2.bf16.msra.mxu0 0
        %621 = vmatprep.mubr.bf16.mxu0 0
        %622 = vmatmul.mubr.bf16.gmra.mxu0 %v517
        %v623 = vpop.f32.mrf.mxu0
        %v624 = vadd.f32 %v539, %v623
        %v625 = vpop.f32.mrf.mxu0
        %v626 = vpop.f32.mrf.mxu0
        %v627 = vpop.f32.mrf.mxu0
        %628 = vdwg.mxu0
        %v629 = vlaneseq
        %v630 = vshrl.u32 %v629, 7
        %v631 = vsub.s32 0, %v630
        %v632 = vrot.slane %v624, %v631
        %v633 = vadd.f32 %v397, %v632
        %v634 = vld [vmem:[#allocation9] sm:$0x1]
        %v635 = vld [vmem:[#allocation10] sm:$0x1]
        %636 = vadd.xlane.f32.xlu0 %v633
        %v637 = vpop.xlane.xlu0 %636
        %v638 = vmul.f32 %v637, 0.03125
        %v639 = vlaneseq
        %v640 = vand.u32 %v639, 127
        %vm641 = vcmp.lt.s32.totalorder %v640, 32
        %v642 = vsub.f32 %v633, %v638
        %v643 = vsel %vm641, %v642, 0.0
        %v644 = vmul.f32 %v643, %v643
        %645 = vadd.xlane.f32.xlu0 %v644
        %v646 = vpop.xlane.xlu0 %645
        %v647 = vmul.f32 %v646, 0.03125
        %v648 = vadd.f32 %v647, 1e-05
        %v649 = vrsqrt.pop %v648
        %v650 = vmul.f32 %v643, %v649
        %v652 = vlaneseq
        %v653 = vshrl.u32 %v652, 7
        %v654 = vsub.s32 0, %v653
        %v655 = vrot.slane %v634, %v654
        %v657 = vmul.f32 %v650, %v655
        %v659 = vlaneseq
        %v660 = vshrl.u32 %v659, 7
        %v661 = vsub.s32 0, %v660
        %v662 = vrot.slane %v635, %v661
        %v664 = vadd.f32 %v657, %v662
        %v665 = vpack.c.bf16 %v664, %v664
        %666 = vst [vmem:[%s394] sm:$0xf] %v665
        %p667 = scmp.lt.s32.totalorder %s23, 1
        %s668 = scalar_select %p667, %s23, 1
        %s669 = smul.addr %s668, 4
        %s670 = scalar_lea.vmem %s8, %s669
        // Predicated region
        $region77: #{lpg_transformer_forward.21} parent=51 // pred_check
          %p671 = pneg %p219
        $region78: #{lpg_transformer_forward.21} parent=51 // pred_check_branch
          %673 = sbr.rel (%p671) target = $region80
        $region79: #{lpg_transformer_forward.21} parent=51 // pred_region
          _
        $region80: #{lpg_transformer_forward.21} parent=51 // pred_fallthru
          _
      $region52: #{lpg_transformer_forward.21} parent=5 // pred_fallthru
        _
      %p674 = scmp.le.s32.totalorder 2, %s18
      // Predicated region
      $region81: #{lpg_transformer_forward.21} parent=5 // pred_check
        %p675 = pneg %p674
      $region82: #{lpg_transformer_forward.21} parent=5 // pred_check_branch
        %677 = sbr.rel (%p675) target = $region84
      $region83: #{lpg_transformer_forward.21} parent=5 // pred_region
        %s678 = ssub.s32 %s18, 2
        // Predicated region
        $region85: #{lpg_transformer_forward.21} parent=83 // pred_check
          %p679 = pneg %p225
        $region86: #{lpg_transformer_forward.21} parent=83 // pred_check_branch
          %681 = sbr.rel (%p679) target = $region88
        $region87: #{lpg_transformer_forward.21} parent=83 // pred_region
          %p682 = scmp.lt.s32.totalorder %s24, 1
          %s683 = scalar_select %p682, %s24, 1
          %s684 = smul.addr %s683, 4
          %s685 = scalar_lea.vmem %s8, %s684
        $region88: #{lpg_transformer_forward.21} parent=83 // pred_fallthru
          _
      $region84: #{lpg_transformer_forward.21} parent=5 // pred_fallthru
        _
    $region6: #{lpg_transformer_forward.21} parent=1 // loop_footer
      %s22 = sadd.s32 1, %s18
    $region7: #{lpg_transformer_forward.21} parent=1 // loop_footer_branch
      %17 = sbr.rel target = $region3
    $region8: #{lpg_transformer_forward.21} parent=1 // loop_exit
      _
    %686 = vsyncpa [#allocation3], 1
    %s687 = scalar_lea.sflag [#allocation3], 1
    %688 = vsyncpa %s687, 1
    %689 = vsyncpa [#allocation5], 1
    %690 = vsyncpa [#allocation8], 1
    %691 = vsyncpa [#allocation11], 1

// kernel: lpg_transformer_forward.26
$region0: #{lpg_transformer_forward.26}
  #allocation0 [shape = 'u32[]', space=smem, size = 0x4, offset = 0x4, fixed_abs, tag = 'smem constant byte address 0x4 - core index']
  #allocation1 [shape = 'u32[144,128]{1,0:T(1,128)}', space=vmem, size = 0x12000, scoped, tag = 'internal scratch']
  %s0 = inlined_call_operand.vmem [shape: bf16[16,128], index: 0, kind: input, shape index: {}]
  %s1 = inlined_call_operand.hbm [shape: f32[1,128], index: 1, kind: input, shape index: {}]
  %s2 = inlined_call_operand.hbm [shape: f32[1,128], index: 2, kind: input, shape index: {}]
  %s3 = inlined_call_operand.vmem [shape: bf16[16,128], index: 3, kind: output, shape index: {}]
  %s4 = sld [smem:[#allocation0]]
  $region30: #{lpg_transformer_forward.26} parent=0
    _
  %s6 = ssub.s32 1, %s4
  %s7 = scalar_select 0, %s6, %s4
  $region1: #{lpg_transformer_forward.26} parent=0
    #allocation2 [shape = 'u8[512]{0}', space=vmem, size = 0x400, scoped, tag = 'input window, operand 1, single buffered']
    #allocation3 [shape = 's32[1]{0}', space=sflag, size = 0x4, scoped, tag = 'scoped memory for lpg_transformer_forward.26']
    #allocation4 [shape = 'u8[512]{0}', space=vmem, size = 0x400, scoped, tag = 'input window, operand 2, single buffered']
    #allocation5 [shape = 's32[1]{0}', space=sflag, size = 0x4, scoped, tag = 'scoped memory for lpg_transformer_forward.26']
    %8 = vsyncpa [#allocation3], 0
    %9 = vsyncpa [#allocation5], 0
    // Predicated region
    $region2: #{lpg_transformer_forward.26} parent=1 // pred_check
      _
    $region3: #{lpg_transformer_forward.26} parent=1 // pred_check_branch
      %11 = sbr.rel (0) target = $region5
    $region4: #{lpg_transformer_forward.26} parent=1 // pred_region
      _
    $region5: #{lpg_transformer_forward.26} parent=1 // pred_fallthru
      _
    // Predicated region
    $region6: #{lpg_transformer_forward.26} parent=1 // pred_check
      _
    $region7: #{lpg_transformer_forward.26} parent=1 // pred_check_branch
      %13 = sbr.rel (0) target = $region9
    $region8: #{lpg_transformer_forward.26} parent=1 // pred_region
      %s15 = ssub.s32 16, 16
      %16 = vsyncadd [#allocation3], %s15
      %s18 = sshll.u32 [#allocation2], 4
      %s19 = int_to_ptr.vmem [resolvable:$true] %s18
      %21 = dma.hbm_to_vmem [thread:$0]  %s1, 16, %s19, [#allocation3]
    $region9: #{lpg_transformer_forward.26} parent=1 // pred_fallthru
      _
    // Predicated region
    $region10: #{lpg_transformer_forward.26} parent=1 // pred_check
      _
    $region11: #{lpg_transformer_forward.26} parent=1 // pred_check_branch
      %23 = sbr.rel (0) target = $region13
    $region12: #{lpg_transformer_forward.26} parent=1 // pred_region
      %s25 = ssub.s32 16, 16
      %26 = vsyncadd [#allocation5], %s25
      %s28 = sshll.u32 [#allocation4], 4
      %s29 = int_to_ptr.vmem [resolvable:$true] %s28
      %31 = dma.hbm_to_vmem [thread:$0]  %s2, 16, %s29, [#allocation5]
    $region13: #{lpg_transformer_forward.26} parent=1 // pred_fallthru
      _
    // Predicated region
    $region14: #{lpg_transformer_forward.26} parent=1 // pred_check
      _
    $region15: #{lpg_transformer_forward.26} parent=1 // pred_check_branch
      %33 = sbr.rel (0) target = $region17
    $region16: #{lpg_transformer_forward.26} parent=1 // pred_region
      %34 = dma.done [#allocation3], 16
    $region17: #{lpg_transformer_forward.26} parent=1 // pred_fallthru
      _
    // Predicated region
    $region18: #{lpg_transformer_forward.26} parent=1 // pred_check
      _
    $region19: #{lpg_transformer_forward.26} parent=1 // pred_check_branch
      %36 = sbr.rel (0) target = $region21
    $region20: #{lpg_transformer_forward.26} parent=1 // pred_region
      %37 = dma.done [#allocation5], 16
    $region21: #{lpg_transformer_forward.26} parent=1 // pred_fallthru
      _
    %v38 = vld [vmem:[%s0] sm:$0xf]
    %v39 = vld [vmem:[%s0 + $0x4] sm:$0xf]
    %v40 = vunpack.c.l.bf16 %v38
    %v41 = vunpack.c.l.bf16 %v39
    %v42 = vld [vmem:[#allocation2] sm:$0x1]
    %v43 = vld [vmem:[#allocation4] sm:$0x1]
    %44 = vadd.xlane.f32.xlu0 %v40
    %v45 = vpop.xlane.xlu0 %44
    %46 = vadd.xlane.f32.xlu0 %v41
    %v47 = vpop.xlane.xlu0 %46
    %v48 = vmul.f32 %v45, 0.03125
    %v49 = vmul.f32 %v47, 0.03125
    %v50 = vlaneseq
    %v51 = vand.u32 %v50, 127
    %vm52 = vcmp.lt.s32.totalorder %v51, 32
    %v53 = vsub.f32 %v40, %v48
    %v54 = vsub.f32 %v41, %v49
    %v55 = vsel %vm52, %v53, 0.0
    %v56 = vsel %vm52, %v54, 0.0
    %v57 = vmul.f32 %v55, %v55
    %v58 = vmul.f32 %v56, %v56
    %59 = vadd.xlane.f32.xlu0 %v57
    %v60 = vpop.xlane.xlu0 %59
    %61 = vadd.xlane.f32.xlu0 %v58
    %v62 = vpop.xlane.xlu0 %61
    %v63 = vmul.f32 %v60, 0.03125
    %v64 = vmul.f32 %v62, 0.03125
    %v65 = vadd.f32 %v63, 1e-05
    %v66 = vadd.f32 %v64, 1e-05
    %v67 = vrsqrt.pop %v65
    %v68 = vrsqrt.pop %v66
    %v69 = vmul.f32 %v55, %v67
    %v70 = vmul.f32 %v56, %v68
    %v72 = vlaneseq
    %v73 = vshrl.u32 %v72, 7
    %v74 = vsub.s32 0, %v73
    %v75 = vrot.slane %v42, %v74
    %v77 = vmul.f32 %v69, %v75
    %v78 = vmul.f32 %v70, %v75
    %v80 = vlaneseq
    %v81 = vshrl.u32 %v80, 7
    %v82 = vsub.s32 0, %v81
    %v83 = vrot.slane %v43, %v82
    %v85 = vadd.f32 %v77, %v83
    %v86 = vadd.f32 %v78, %v83
    %v87 = vpack.c.bf16 %v86, %v85
    %v89 = vunpack.c.l.b16 %v87
    %v90 = vunpack.c.h.b16 %v87
    %v91 = vpack.c.b16 %v89, %v89
    %v92 = vpack.c.b16 %v90, %v90
    %95 = vst [vmem:[%s3] sm:$0xf] %v91
    %96 = vst [vmem:[%s3 + $0x4] sm:$0xf] %v92
    // Predicated region
    $region22: #{lpg_transformer_forward.26} parent=1 // pred_check
      _
    $region23: #{lpg_transformer_forward.26} parent=1 // pred_check_branch
      %98 = sbr.rel (0) target = $region25
    $region24: #{lpg_transformer_forward.26} parent=1 // pred_region
      _
    $region25: #{lpg_transformer_forward.26} parent=1 // pred_fallthru
      _
    // Predicated region
    $region26: #{lpg_transformer_forward.26} parent=1 // pred_check
      _
    $region27: #{lpg_transformer_forward.26} parent=1 // pred_check_branch
      %100 = sbr.rel (0) target = $region29
    $region28: #{lpg_transformer_forward.26} parent=1 // pred_region
      _
    $region29: #{lpg_transformer_forward.26} parent=1 // pred_fallthru
      _
    %101 = vsyncpa [#allocation3], 1
    %102 = vsyncpa [#allocation5], 1

// kernel: lpg_transformer_forward.22
$region0: #{lpg_transformer_forward.22}
  #allocation0 [shape = 'u32[]', space=smem, size = 0x4, offset = 0x4, fixed_abs, tag = 'smem constant byte address 0x4 - core index']
  #allocation1 [shape = 'u32[144,128]{1,0:T(1,128)}', space=vmem, size = 0x12000, scoped, tag = 'internal scratch']
  %s0 = inlined_call_operand.vmem [shape: bf16[16,128], index: 0, kind: input, shape index: {}]
  %s1 = inlined_call_operand.hbm [shape: bf16[128,128], index: 1, kind: input, shape index: {}]
  %s2 = inlined_call_operand.hbm [shape: f32[1,128], index: 2, kind: input, shape index: {}]
  %s3 = inlined_call_operand.hbm [shape: bf16[128,128], index: 3, kind: input, shape index: {}]
  %s4 = inlined_call_operand.hbm [shape: f32[1,128], index: 4, kind: input, shape index: {}]
  %s5 = inlined_call_operand.hbm [shape: f32[1,128], index: 5, kind: input, shape index: {}]
  %s6 = inlined_call_operand.hbm [shape: f32[1,128], index: 6, kind: input, shape index: {}]
  %s7 = inlined_call_operand.vmem [shape: bf16[16,128], index: 7, kind: output, shape index: {}]
  %s8 = sld [smem:[#allocation0]]
  $region62: #{lpg_transformer_forward.22} parent=0
    _
  %s10 = ssub.s32 1, %s8
  %s11 = scalar_select 0, %s10, %s8
  $region1: #{lpg_transformer_forward.22} parent=0
    #allocation2 [shape = 'u8[32768]{0}', space=vmem, size = 0x8000, scoped, tag = 'input window, operand 1, single buffered']
    #allocation3 [shape = 's32[1]{0}', space=sflag, size = 0x4, scoped, tag = 'scoped memory for lpg_transformer_forward.22']
    #allocation4 [shape = 'u8[512]{0}', space=vmem, size = 0x400, scoped, tag = 'input window, operand 2, single buffered']
    #allocation5 [shape = 's32[1]{0}', space=sflag, size = 0x4, scoped, tag = 'scoped memory for lpg_transformer_forward.22']
    #allocation6 [shape = 'u8[32768]{0}', space=vmem, size = 0x8000, scoped, tag = 'input window, operand 3, single buffered']
    #allocation7 [shape = 'u8[512]{0}', space=vmem, size = 0x400, scoped, tag = 'input window, operand 4, single buffered']
    #allocation8 [shape = 's32[1]{0}', space=sflag, size = 0x4, scoped, tag = 'scoped memory for lpg_transformer_forward.22']
    #allocation9 [shape = 'u8[512]{0}', space=vmem, size = 0x400, scoped, tag = 'input window, operand 5, single buffered']
    #allocation10 [shape = 'u8[512]{0}', space=vmem, size = 0x400, scoped, tag = 'input window, operand 6, single buffered']
    #allocation11 [shape = 's32[1]{0}', space=sflag, size = 0x4, scoped, tag = 'scoped memory for lpg_transformer_forward.22']
    %12 = vsyncpa [#allocation3], 0
    %13 = vsyncpa [#allocation5], 0
    %14 = vsyncpa [#allocation8], 0
    %15 = vsyncpa [#allocation11], 0
    // Predicated region
    $region2: #{lpg_transformer_forward.22} parent=1 // pred_check
      _
    $region3: #{lpg_transformer_forward.22} parent=1 // pred_check_branch
      %17 = sbr.rel (0) target = $region5
    $region4: #{lpg_transformer_forward.22} parent=1 // pred_region
      _
    $region5: #{lpg_transformer_forward.22} parent=1 // pred_fallthru
      _
    // Predicated region
    $region6: #{lpg_transformer_forward.22} parent=1 // pred_check
      _
    $region7: #{lpg_transformer_forward.22} parent=1 // pred_check_branch
      %19 = sbr.rel (0) target = $region9
    $region8: #{lpg_transformer_forward.22} parent=1 // pred_region
      %s21 = ssub.s32 1024, 1024
      %22 = vsyncadd [#allocation3], %s21
      %s23 = sshll.u32 [#allocation2], 4
      %s24 = int_to_ptr.vmem [resolvable:$true] %s23
      %29 = dma.hbm_to_vmem [thread:$0]  %s1, 1024, %s24, [#allocation3], 64, 64, 4
    $region9: #{lpg_transformer_forward.22} parent=1 // pred_fallthru
      _
    // Predicated region
    $region10: #{lpg_transformer_forward.22} parent=1 // pred_check
      _
    $region11: #{lpg_transformer_forward.22} parent=1 // pred_check_branch
      %31 = sbr.rel (0) target = $region13
    $region12: #{lpg_transformer_forward.22} parent=1 // pred_region
      %s33 = ssub.s32 16, 16
      %34 = vsyncadd [#allocation5], %s33
      %s36 = sshll.u32 [#allocation4], 4
      %s37 = int_to_ptr.vmem [resolvable:$true] %s36
      %39 = dma.hbm_to_vmem [thread:$0]  %s2, 16, %s37, [#allocation5]
    $region13: #{lpg_transformer_forward.22} parent=1 // pred_fallthru
      _
    // Predicated region
    $region14: #{lpg_transformer_forward.22} parent=1 // pred_check
      _
    $region15: #{lpg_transformer_forward.22} parent=1 // pred_check_branch
      %41 = sbr.rel (0) target = $region17
    $region16: #{lpg_transformer_forward.22} parent=1 // pred_region
      %s43 = ssub.s32 1024, 1024
      %44 = vsyncadd [#allocation5], %s43
      %s45 = sshll.u32 [#allocation6], 4
      %s46 = int_to_ptr.vmem [resolvable:$true] %s45
      %51 = dma.hbm_to_vmem [thread:$0]  %s3, 1024, %s46, [#allocation5], 64, 64, 4
    $region17: #{lpg_transformer_forward.22} parent=1 // pred_fallthru
      _
    // Predicated region
    $region18: #{lpg_transformer_forward.22} parent=1 // pred_check
      _
    $region19: #{lpg_transformer_forward.22} parent=1 // pred_check_branch
      %53 = sbr.rel (0) target = $region21
    $region20: #{lpg_transformer_forward.22} parent=1 // pred_region
      %s55 = ssub.s32 16, 16
      %56 = vsyncadd [#allocation8], %s55
      %s58 = sshll.u32 [#allocation7], 4
      %s59 = int_to_ptr.vmem [resolvable:$true] %s58
      %61 = dma.hbm_to_vmem [thread:$0]  %s4, 16, %s59, [#allocation8]
    $region21: #{lpg_transformer_forward.22} parent=1 // pred_fallthru
      _
    // Predicated region
    $region22: #{lpg_transformer_forward.22} parent=1 // pred_check
      _
    $region23: #{lpg_transformer_forward.22} parent=1 // pred_check_branch
      %63 = sbr.rel (0) target = $region25
    $region24: #{lpg_transformer_forward.22} parent=1 // pred_region
      %s65 = ssub.s32 16, 16
      %66 = vsyncadd [#allocation8], %s65
      %s68 = sshll.u32 [#allocation9], 4
      %s69 = int_to_ptr.vmem [resolvable:$true] %s68
      %71 = dma.hbm_to_vmem [thread:$0]  %s5, 16, %s69, [#allocation8]
    $region25: #{lpg_transformer_forward.22} parent=1 // pred_fallthru
      _
    // Predicated region
    $region26: #{lpg_transformer_forward.22} parent=1 // pred_check
      _
    $region27: #{lpg_transformer_forward.22} parent=1 // pred_check_branch
      %73 = sbr.rel (0) target = $region29
    $region28: #{lpg_transformer_forward.22} parent=1 // pred_region
      %s75 = ssub.s32 16, 16
      %76 = vsyncadd [#allocation11], %s75
      %s78 = sshll.u32 [#allocation10], 4
      %s79 = int_to_ptr.vmem [resolvable:$true] %s78
      %81 = dma.hbm_to_vmem [thread:$0]  %s6, 16, %s79, [#allocation11]
    $region29: #{lpg_transformer_forward.22} parent=1 // pred_fallthru
      _
    // Predicated region
    $region30: #{lpg_transformer_forward.22} parent=1 // pred_check
      _
    $region31: #{lpg_transformer_forward.22} parent=1 // pred_check_branch
      %83 = sbr.rel (0) target = $region33
    $region32: #{lpg_transformer_forward.22} parent=1 // pred_region
      %84 = dma.done [#allocation3], 1024
    $region33: #{lpg_transformer_forward.22} parent=1 // pred_fallthru
      _
    // Predicated region
    $region34: #{lpg_transformer_forward.22} parent=1 // pred_check
      _
    $region35: #{lpg_transformer_forward.22} parent=1 // pred_check_branch
      %86 = sbr.rel (0) target = $region37
    $region36: #{lpg_transformer_forward.22} parent=1 // pred_region
      %87 = dma.done [#allocation5], 16
    $region37: #{lpg_transformer_forward.22} parent=1 // pred_fallthru
      _
    // Predicated region
    $region38: #{lpg_transformer_forward.22} parent=1 // pred_check
      _
    $region39: #{lpg_transformer_forward.22} parent=1 // pred_check_branch
      %89 = sbr.rel (0) target = $region41
    $region40: #{lpg_transformer_forward.22} parent=1 // pred_region
      %90 = dma.done [#allocation5], 1024
    $region41: #{lpg_transformer_forward.22} parent=1 // pred_fallthru
      _
    // Predicated region
    $region42: #{lpg_transformer_forward.22} parent=1 // pred_check
      _
    $region43: #{lpg_transformer_forward.22} parent=1 // pred_check_branch
      %92 = sbr.rel (0) target = $region45
    $region44: #{lpg_transformer_forward.22} parent=1 // pred_region
      %93 = dma.done [#allocation8], 16
    $region45: #{lpg_transformer_forward.22} parent=1 // pred_fallthru
      _
    // Predicated region
    $region46: #{lpg_transformer_forward.22} parent=1 // pred_check
      _
    $region47: #{lpg_transformer_forward.22} parent=1 // pred_check_branch
      %95 = sbr.rel (0) target = $region49
    $region48: #{lpg_transformer_forward.22} parent=1 // pred_region
      %96 = dma.done [#allocation8], 16
    $region49: #{lpg_transformer_forward.22} parent=1 // pred_fallthru
      _
    // Predicated region
    $region50: #{lpg_transformer_forward.22} parent=1 // pred_check
      _
    $region51: #{lpg_transformer_forward.22} parent=1 // pred_check_branch
      %98 = sbr.rel (0) target = $region53
    $region52: #{lpg_transformer_forward.22} parent=1 // pred_region
      %99 = dma.done [#allocation11], 16
    $region53: #{lpg_transformer_forward.22} parent=1 // pred_fallthru
      _
    %v101 = vld [vmem:[%s0] sm:$0xf]
    %v102 = vld [vmem:[%s0 + $0x4] sm:$0xf]
    %v103 = vld [vmem:[#allocation2] sm:$0xf]
    %v104 = vld [vmem:[#allocation2 + $0x4] sm:$0xf]
    %v105 = vld [vmem:[#allocation2 + $0x8] sm:$0xf]
    %v106 = vld [vmem:[#allocation2 + $0xc] sm:$0xf]
    %v107 = vld [vmem:[#allocation2 + $0x10] sm:$0xf]
    %v108 = vld [vmem:[#allocation2 + $0x14] sm:$0xf]
    %v109 = vld [vmem:[#allocation2 + $0x18] sm:$0xf]
    %v110 = vld [vmem:[#allocation2 + $0x1c] sm:$0xf]
    %v111 = vld [vmem:[#allocation2 + $0x20] sm:$0xf]
    %v112 = vld [vmem:[#allocation2 + $0x24] sm:$0xf]
    %v113 = vld [vmem:[#allocation2 + $0x28] sm:$0xf]
    %v114 = vld [vmem:[#allocation2 + $0x2c] sm:$0xf]
    %v115 = vld [vmem:[#allocation2 + $0x30] sm:$0xf]
    %v116 = vld [vmem:[#allocation2 + $0x34] sm:$0xf]
    %v117 = vld [vmem:[#allocation2 + $0x38] sm:$0xf]
    %v118 = vld [vmem:[#allocation2 + $0x3c] sm:$0xf]
    %v119 = vld [vmem:[#allocation4] sm:$0x1]
    %v121 = vlaneseq
    %v122 = vshrl.u32 %v121, 7
    %v123 = vsub.s32 0, %v122
    %v124 = vrot.slane %v119, %v123
    %v128 = vunpack.c.l.b16 %v101
    %v129 = vunpack.c.l.b16 %v102
    %v130 = vpack.c.b16 %v129, %v128
    %v148 = vunpack.c.l.b16 %v103
    %v149 = vunpack.c.l.b16 %v104
    %v150 = vunpack.c.l.b16 %v105
    %v151 = vunpack.c.l.b16 %v106
    %v152 = vunpack.c.l.b16 %v107
    %v153 = vunpack.c.l.b16 %v108
    %v154 = vunpack.c.l.b16 %v109
    %v155 = vunpack.c.l.b16 %v110
    %v156 = vunpack.c.l.b16 %v111
    %v157 = vunpack.c.l.b16 %v112
    %v158 = vunpack.c.l.b16 %v113
    %v159 = vunpack.c.l.b16 %v114
    %v160 = vunpack.c.l.b16 %v115
    %v161 = vunpack.c.l.b16 %v116
    %v162 = vunpack.c.l.b16 %v117
    %v163 = vunpack.c.l.b16 %v118
    %v164 = vpack.c.b16 %v149, %v148
    %v165 = vpack.c.b16 %v151, %v150
    %v166 = vpack.c.b16 %v153, %v152
    %v167 = vpack.c.b16 %v155, %v154
    %v168 = vpack.c.b16 %v157, %v156
    %v169 = vpack.c.b16 %v159, %v158
    %v170 = vpack.c.b16 %v161, %v160
    %v171 = vpack.c.b16 %v163, %v162
    %180 = vmatprep.subr.bf16.mxu0 0
    %181 = vmatpush1.bf16.msra.mxu0 %v171
    %182 = vmatprep.subr.bf16.mxu0 0
    %183 = vmatpush1.bf16.msra.mxu0 %v170
    %184 = vmatprep.subr.bf16.mxu0 0
    %185 = vmatpush1.bf16.msra.mxu0 %v169
    %186 = vmatprep.subr.bf16.mxu0 0
    %187 = vmatpush1.bf16.msra.mxu0 %v168
    %188 = vmatprep.subr.bf16.mxu0 0
    %189 = vmatpush1.bf16.msra.mxu0 %v167
    %190 = vmatprep.subr.bf16.mxu0 0
    %191 = vmatpush1.bf16.msra.mxu0 %v166
    %192 = vmatprep.subr.bf16.mxu0 0
    %193 = vmatpush1.bf16.msra.mxu0 %v165
    %194 = vmatprep.subr.bf16.mxu0 0
    %195 = vmatpush1.bf16.msra.mxu0 %v164
    %196 = vmatprep.subr.bf16.mxu0 0
    %197 = vmatpush2.bf16.msra.mxu0 0
    %198 = vmatprep.subr.bf16.mxu0 0
    %199 = vmatpush2.bf16.msra.mxu0 0
    %200 = vmatprep.subr.bf16.mxu0 0
    %201 = vmatpush2.bf16.msra.mxu0 0
    %202 = vmatprep.subr.bf16.mxu0 0
    %203 = vmatpush2.bf16.msra.mxu0 0
    %204 = vmatprep.subr.bf16.mxu0 0
    %205 = vmatpush2.bf16.msra.mxu0 0
    %206 = vmatprep.subr.bf16.mxu0 0
    %207 = vmatpush2.bf16.msra.mxu0 0
    %208 = vmatprep.subr.bf16.mxu0 0
    %209 = vmatpush2.bf16.msra.mxu0 0
    %210 = vmatprep.subr.bf16.mxu0 0
    %211 = vmatpush2.bf16.msra.mxu0 0
    %212 = vmatprep.mubr.bf16.mxu0 0
    %213 = vmatmul.mubr.bf16.gmra.mxu0 %v130
    %v214 = vpop.f32.mrf.mxu0
    %v215 = vadd.f32 %v124, %v214
    %v216 = vpop.f32.mrf.mxu0
    %v217 = vpop.f32.mrf.mxu0
    %v218 = vadd.f32 %v124, %v217
    %v219 = vpop.f32.mrf.mxu0
    %220 = vdwg.mxu0
    %v221 = vmul.f32 %v215, 0.5
    %v222 = vmul.f32 %v218, 0.5
    %v223 = vmul.f32 %v215, 0.70710677
    %v224 = vmul.f32 %v218, 0.70710677
    %v225 = vand.u32 2147483647, %v223
    %v226 = vand.u32 2147483647, %v224
    %v227 = vmul.f32 %v225, 0.3275911
    %v228 = vmul.f32 %v226, 0.3275911
    %v229 = vadd.f32 %v227, 1.0
    %v230 = vadd.f32 %v228, 1.0
    %v231 = vrcp.pop %v229
    %v232 = vmul.f32 1.0, %v231
    %v233 = vrcp.pop %v230
    %v234 = vmul.f32 1.0, %v233
    %v235 = vmul.f32 %v232, 1.0614054
    %v236 = vmul.f32 %v234, 1.0614054
    %v237 = vadd.f32 %v235, -1.4531521
    %v238 = vadd.f32 %v236, -1.4531521
    %v239 = vmul.f32 %v237, %v232
    %v240 = vmul.f32 %v238, %v234
    %v241 = vadd.f32 %v239, 1.4214138
    %v242 = vadd.f32 %v240, 1.4214138
    %v243 = vmul.f32 %v241, %v232
    %v244 = vmul.f32 %v242, %v234
    %v245 = vadd.f32 %v243, -0.28449672
    %v246 = vadd.f32 %v244, -0.28449672
    %v247 = vmul.f32 %v245, %v232
    %v248 = vmul.f32 %v246, %v234
    %v249 = vadd.f32 %v247, 0.2548296
    %v250 = vadd.f32 %v248, 0.2548296
    %v251 = vmul.f32 %v249, %v232
    %v252 = vmul.f32 %v250, %v234
    %v253 = vsub.f32 0.0, %v225
    %v254 = vsub.f32 0.0, %v226
    %v255 = vmul.f32 %v253, %v225
    %v256 = vmul.f32 %v254, %v226
    %v257 = vmul.f32 %v255, 1.442695
    %v258 = vpow.pop %v257
    %v259 = vmul.f32 %v256, 1.442695
    %v260 = vpow.pop %v259
    %v261 = vmul.f32 %v251, %v258
    %v262 = vmul.f32 %v252, %v260
    %v263 = vsub.f32 1.0, %v261
    %v264 = vsub.f32 1.0, %v262
    %vm265 = vcmp.lt.f32.partialorder %v223, 0.0
    %vm266 = vcmp.lt.f32.partialorder %v224, 0.0
    %v267 = vsub.f32 0.0, %v263
    %v268 = vsub.f32 0.0, %v264
    %v269 = vsel %vm265, %v267, %v263
    %v270 = vsel %vm266, %v268, %v264
    %v271 = vadd.f32 %v269, 1.0
    %v272 = vadd.f32 %v270, 1.0
    %v273 = vmul.f32 %v221, %v271
    %v274 = vmul.f32 %v222, %v272
    %v275 = vpack.c.bf16 %v274, %v273
    %v276 = vld [vmem:[#allocation6] sm:$0xf]
    %v277 = vld [vmem:[#allocation6 + $0x4] sm:$0xf]
    %v278 = vld [vmem:[#allocation6 + $0x8] sm:$0xf]
    %v279 = vld [vmem:[#allocation6 + $0xc] sm:$0xf]
    %v280 = vld [vmem:[#allocation6 + $0x10] sm:$0xf]
    %v281 = vld [vmem:[#allocation6 + $0x14] sm:$0xf]
    %v282 = vld [vmem:[#allocation6 + $0x18] sm:$0xf]
    %v283 = vld [vmem:[#allocation6 + $0x1c] sm:$0xf]
    %v284 = vld [vmem:[#allocation6 + $0x20] sm:$0xf]
    %v285 = vld [vmem:[#allocation6 + $0x24] sm:$0xf]
    %v286 = vld [vmem:[#allocation6 + $0x28] sm:$0xf]
    %v287 = vld [vmem:[#allocation6 + $0x2c] sm:$0xf]
    %v288 = vld [vmem:[#allocation6 + $0x30] sm:$0xf]
    %v289 = vld [vmem:[#allocation6 + $0x34] sm:$0xf]
    %v290 = vld [vmem:[#allocation6 + $0x38] sm:$0xf]
    %v291 = vld [vmem:[#allocation6 + $0x3c] sm:$0xf]
    %v292 = vld [vmem:[#allocation7] sm:$0x1]
    %v294 = vlaneseq
    %v295 = vshrl.u32 %v294, 7
    %v296 = vsub.s32 0, %v295
    %v297 = vrot.slane %v292, %v296
    %v315 = vunpack.c.l.b16 %v276
    %v316 = vunpack.c.l.b16 %v277
    %v317 = vunpack.c.l.b16 %v278
    %v318 = vunpack.c.l.b16 %v279
    %v319 = vunpack.c.l.b16 %v280
    %v320 = vunpack.c.l.b16 %v281
    %v321 = vunpack.c.l.b16 %v282
    %v322 = vunpack.c.l.b16 %v283
    %v323 = vunpack.c.l.b16 %v284
    %v324 = vunpack.c.l.b16 %v285
    %v325 = vunpack.c.l.b16 %v286
    %v326 = vunpack.c.l.b16 %v287
    %v327 = vunpack.c.l.b16 %v288
    %v328 = vunpack.c.l.b16 %v289
    %v329 = vunpack.c.l.b16 %v290
    %v330 = vunpack.c.l.b16 %v291
    %v331 = vpack.c.b16 %v316, %v315
    %v332 = vpack.c.b16 %v318, %v317
    %v333 = vpack.c.b16 %v320, %v319
    %v334 = vpack.c.b16 %v322, %v321
    %v335 = vpack.c.b16 %v324, %v323
    %v336 = vpack.c.b16 %v326, %v325
    %v337 = vpack.c.b16 %v328, %v327
    %v338 = vpack.c.b16 %v330, %v329
    %347 = vmatprep.subr.bf16.mxu0 0
    %348 = vmatpush1.bf16.msra.mxu0 %v338
    %349 = vmatprep.subr.bf16.mxu0 0
    %350 = vmatpush1.bf16.msra.mxu0 %v337
    %351 = vmatprep.subr.bf16.mxu0 0
    %352 = vmatpush1.bf16.msra.mxu0 %v336
    %353 = vmatprep.subr.bf16.mxu0 0
    %354 = vmatpush1.bf16.msra.mxu0 %v335
    %355 = vmatprep.subr.bf16.mxu0 0
    %356 = vmatpush1.bf16.msra.mxu0 %v334
    %357 = vmatprep.subr.bf16.mxu0 0
    %358 = vmatpush1.bf16.msra.mxu0 %v333
    %359 = vmatprep.subr.bf16.mxu0 0
    %360 = vmatpush1.bf16.msra.mxu0 %v332
    %361 = vmatprep.subr.bf16.mxu0 0
    %362 = vmatpush1.bf16.msra.mxu0 %v331
    %363 = vmatprep.subr.bf16.mxu0 0
    %364 = vmatpush2.bf16.msra.mxu0 0
    %365 = vmatprep.subr.bf16.mxu0 0
    %366 = vmatpush2.bf16.msra.mxu0 0
    %367 = vmatprep.subr.bf16.mxu0 0
    %368 = vmatpush2.bf16.msra.mxu0 0
    %369 = vmatprep.subr.bf16.mxu0 0
    %370 = vmatpush2.bf16.msra.mxu0 0
    %371 = vmatprep.subr.bf16.mxu0 0
    %372 = vmatpush2.bf16.msra.mxu0 0
    %373 = vmatprep.subr.bf16.mxu0 0
    %374 = vmatpush2.bf16.msra.mxu0 0
    %375 = vmatprep.subr.bf16.mxu0 0
    %376 = vmatpush2.bf16.msra.mxu0 0
    %377 = vmatprep.subr.bf16.mxu0 0
    %378 = vmatpush2.bf16.msra.mxu0 0
    %379 = vmatprep.mubr.bf16.mxu0 0
    %380 = vmatmul.mubr.bf16.gmra.mxu0 %v275
    %v381 = vpop.f32.mrf.mxu0
    %v382 = vadd.f32 %v297, %v381
    %v383 = vpop.f32.mrf.mxu0
    %v384 = vpop.f32.mrf.mxu0
    %v385 = vadd.f32 %v297, %v384
    %v386 = vpop.f32.mrf.mxu0
    %387 = vdwg.mxu0
    %v388 = vunpack.c.l.bf16 %v101
    %v389 = vunpack.c.l.bf16 %v102
    %v390 = vadd.f32 %v382, %v388
    %v391 = vadd.f32 %v385, %v389
    %v392 = vld [vmem:[#allocation9] sm:$0x1]
    %v393 = vld [vmem:[#allocation10] sm:$0x1]
    %394 = vadd.xlane.f32.xlu0 %v390
    %v395 = vpop.xlane.xlu0 %394
    %396 = vadd.xlane.f32.xlu0 %v391
    %v397 = vpop.xlane.xlu0 %396
    %v398 = vmul.f32 %v395, 0.03125
    %v399 = vmul.f32 %v397, 0.03125
    %v400 = vlaneseq
    %v401 = vand.u32 %v400, 127
    %vm402 = vcmp.lt.s32.totalorder %v401, 32
    %v403 = vsub.f32 %v390, %v398
    %v404 = vsub.f32 %v391, %v399
    %v405 = vsel %vm402, %v403, 0.0
    %v406 = vsel %vm402, %v404, 0.0
    %v407 = vmul.f32 %v405, %v405
    %v408 = vmul.f32 %v406, %v406
    %409 = vadd.xlane.f32.xlu0 %v407
    %v410 = vpop.xlane.xlu0 %409
    %411 = vadd.xlane.f32.xlu0 %v408
    %v412 = vpop.xlane.xlu0 %411
    %v413 = vmul.f32 %v410, 0.03125
    %v414 = vmul.f32 %v412, 0.03125
    %v415 = vadd.f32 %v413, 1e-05
    %v416 = vadd.f32 %v414, 1e-05
    %v417 = vrsqrt.pop %v415
    %v418 = vrsqrt.pop %v416
    %v419 = vmul.f32 %v405, %v417
    %v420 = vmul.f32 %v406, %v418
    %v422 = vlaneseq
    %v423 = vshrl.u32 %v422, 7
    %v424 = vsub.s32 0, %v423
    %v425 = vrot.slane %v392, %v424
    %v427 = vmul.f32 %v419, %v425
    %v428 = vmul.f32 %v420, %v425
    %v430 = vlaneseq
    %v431 = vshrl.u32 %v430, 7
    %v432 = vsub.s32 0, %v431
    %v433 = vrot.slane %v393, %v432
    %v435 = vadd.f32 %v427, %v433
    %v436 = vadd.f32 %v428, %v433
    %v437 = vpack.c.bf16 %v436, %v435
    %v439 = vunpack.c.l.b16 %v437
    %v440 = vunpack.c.h.b16 %v437
    %v441 = vpack.c.b16 %v439, %v439
    %v442 = vpack.c.b16 %v440, %v440
    %445 = vst [vmem:[%s7] sm:$0xf] %v441
    %446 = vst [vmem:[%s7 + $0x4] sm:$0xf] %v442
    // Predicated region
    $region54: #{lpg_transformer_forward.22} parent=1 // pred_check
      _
    $region55: #{lpg_transformer_forward.22} parent=1 // pred_check_branch
      %448 = sbr.rel (0) target = $region57
    $region56: #{lpg_transformer_forward.22} parent=1 // pred_region
      _
    $region57: #{lpg_transformer_forward.22} parent=1 // pred_fallthru
      _
    // Predicated region
    $region58: #{lpg_transformer_forward.22} parent=1 // pred_check
      _
    $region59: #{lpg_transformer_forward.22} parent=1 // pred_check_branch
      %450 = sbr.rel (0) target = $region61
    $region60: #{lpg_transformer_forward.22} parent=1 // pred_region
      _
    $region61: #{lpg_transformer_forward.22} parent=1 // pred_fallthru
      _
    %451 = vsyncpa [#allocation3], 1
    %452 = vsyncpa [#allocation5], 1
    %453 = vsyncpa [#allocation8], 1
    %454 = vsyncpa [#allocation11], 1

</llo_original>
